<compile_context>
chip_gen: v5e
topology: v5e:2x2
jax: 0.10.0
libtpu: 0.0.40
codegen_flags: <defaults>
</compile_context>

<pallas_src>
import functools

import jax
import jax.numpy as jnp
from jax.experimental import pallas as pl
from jax.experimental.pallas import tpu as pltpu


def _cdiv(a, b):
    return -(-a // b)


def _pick_ray_tile(n_rays, s, target_rows=1024):
    """Pick rays-per-tile tn (multiple of 8) with ~target_rows MLP rows per
    grid step; prefer grid >= 4 (v7x two-TC sharding), then >= 2."""
    cap = max(8, min(max(target_rows // max(s, 1), 8), n_rays))
    cap = max(8, (cap // 8) * 8)
    for min_grid in (4, 2, 1):
        tn = cap
        while tn > 8 and _cdiv(n_rays, tn) < min_grid:
            tn = max(8, (tn // 2 // 8) * 8)
        if _cdiv(n_rays, tn) >= min_grid:
            return tn
    return 8


def _vmem_estimate(tn, s, in_feat, hidden, c_pad, param_bytes):
    """Rough per-step VMEM footprint (double-buffered IO + weights + live
    activations) used to shrink the tile and set vmem_limit_bytes."""
    tm = tn * s
    pack_w = 6 + s
    io = 2 * 4 * tn * pack_w + 2 * 2 * tm * c_pad + 2 * 4 * tm * tn
    act = 2 * tm * (in_feat + sum(hidden)) + 3 * 4 * tm * max(hidden + (c_pad,))
    return int(2 * param_bytes + io + act)


# ---------------------------------------------------------------------------
# Fused kernel: stratified sampling + encoder stand-in + skip-MLP + head + softmax
# ---------------------------------------------------------------------------
def _fused_render_mlp_kernel(nparts_per_layer, num_samples, backbone_dim,
                             negative_slope, pack_ref, e_ref, wenc_ref,
                             benc_ref, *refs):
    out_ref = refs[-1]
    params = refs[:-1]
    tm, tn = e_ref.shape
    S = num_samples

    # ---- fused stratified sampling: ray-major (tm, 3) sample points -------
    # pack layout per ray: [P0(3) = o + d*near, Pd(3) = d*(far-near), teff(S)]
    e_mat = e_ref[...]                                      # (tm, tn) 0/1 f32
    per_row = jnp.dot(e_mat, pack_ref[...],
                      preferred_element_type=jnp.float32)   # row-replicated rays
    p0 = per_row[:, 0:3]
    pd = per_row[:, 3:6]
    tex = per_row[:, 6:6 + S]                               # (tm, S) jitter positions
    row_s = jax.lax.broadcasted_iota(jnp.int32, (tm, S), 0) % S
    col_s = jax.lax.broadcasted_iota(jnp.int32, (tm, S), 1)
    u = jnp.sum(jnp.where(row_s == col_s, tex, 0.0),
                axis=-1, keepdims=True)                     # per-row t in [0,1]
    pts = p0 + u * pd                                       # row = ray*S + sample

    # ---- fused encoder stand-in: [sin(pts @ W + b) | pts] -----------------
    # wenc is augmented with identity columns -> no lane concat needed.
    feat = jnp.dot(pts.astype(jnp.bfloat16), wenc_ref[...],
                   preferred_element_type=jnp.float32) + benc_ref[...]
    lane = jax.lax.broadcasted_iota(jnp.int32, feat.shape, 1)
    x0 = jnp.where(lane < backbone_dim, jnp.sin(feat), feat)

    # ---- skip-connection LeakyReLU MLP (split-weight matmuls, no concats) -
    pieces = [x0.astype(jnp.bfloat16)]      # newest piece first, merged x0 last
    idx = 0
    for np_l in nparts_per_layer:
        acc = None
        for k in range(np_l):
            w = params[idx][...]
            idx += 1
            c = jnp.dot(pieces[k], w, preferred_element_type=jnp.float32)
            acc = c if acc is None else acc + c
        h = acc + params[idx][...]
        idx += 1
        h = jnp.where(h >= 0.0, h, negative_slope * h)      # LeakyReLU
        pieces.insert(0, h.astype(jnp.bfloat16))

    # ---- class head + softmax (padded classes have a -1e30 bias -> prob 0) -
    logits = jnp.dot(pieces[0], params[idx][...],
                     preferred_element_type=jnp.float32) + params[idx + 1][...]
    m = jnp.max(logits, axis=-1, keepdims=True)
    ex = jnp.exp(logits - m)
    inv = pl.reciprocal(jnp.sum(ex, axis=-1, keepdims=True), approx=True)
    out_ref[...] = (ex * inv).astype(out_ref.dtype)


def fused_render_mlp_pallas(ray_pack, wenc, benc, backbone_dim, num_samples,
                            layer_parts, layer_biases, w_head, b_head,
                            num_classes):
    N = ray_pack.shape[0]
    S = num_samples
    c_pad = w_head.shape[1]
    in_feat = wenc.shape[1]                                  # backbone_dim + 3
    hidden = tuple(b.shape[1] for b in layer_biases)

    flat_params = []
    for parts, b in zip(layer_parts, layer_biases):
        flat_params += list(parts) + [b]
    flat_params += [w_head, b_head]
    param_bytes = sum(int(p.size) * p.dtype.itemsize
                      for p in flat_params + [wenc, benc])

    tn = _pick_ray_tile(N, S)
    # Shrink the ray tile if the fused working set would crowd VMEM
    # (matters for production hidden dims, especially v7x's 64 MiB / v5e's
    #  16 MiB scoped default).
    while tn > 8 and _vmem_estimate(tn, S, in_feat, hidden, c_pad,
                                    param_bytes) > 40 * 2**20:
        tn = max(8, (tn // 2 // 8) * 8)
    tm = tn * S
    grid = _cdiv(N, tn)
    n_pad = grid * tn
    if n_pad != N:
        ray_pack = jnp.pad(ray_pack, ((0, n_pad - N), (0, 0)))
    rows_pad = n_pad * S

    # 0/1 row-expansion matrix: E[row, r] = 1 iff row // S == r  (ray-major).
    e_mat = (jnp.arange(tm, dtype=jnp.int32)[:, None] // S
             == jnp.arange(tn, dtype=jnp.int32)[None, :]).astype(jnp.float32)

    pack_w = ray_pack.shape[1]
    in_specs = [pl.BlockSpec((tn, pack_w), lambda i: (i, 0)),
                pl.BlockSpec((tm, tn), lambda i: (0, 0)),
                pl.BlockSpec(wenc.shape, lambda i: (0, 0)),
                pl.BlockSpec(benc.shape, lambda i: (0, 0))]
    # TODO(synk): at production dims, pass pipeline_mode=pl.Buffered(1) on the
    # constant-index weight specs below to drop their second VMEM buffer.
    in_specs += [pl.BlockSpec(p.shape, lambda i: (0, 0)) for p in flat_params]

    nparts = tuple(len(parts) for parts in layer_parts)
    kernel = functools.partial(_fused_render_mlp_kernel, nparts, S,
                               backbone_dim, 0.01)

    # Advisory cost estimate for XLA scheduling around the custom call.
    macs_row = 3 * in_feat + hidden[-1] * c_pad
    kdim = in_feat
    for h in hidden:
        macs_row += kdim * h
        kdim += h
    flops = int(2 * rows_pad * (macs_row + tn * pack_w))
    transcendentals = int(rows_pad * (backbone_dim + c_pad))
    bytes_accessed = int(ray_pack.size * 4 + e_mat.size * 4 + param_bytes
                         + rows_pad * c_pad * 2)
    est = _vmem_estimate(tn, S, in_feat, hidden, c_pad, param_bytes)

    out = pl.pallas_call(
        kernel,
        out_shape=jax.ShapeDtypeStruct((rows_pad, c_pad), jnp.bfloat16),
        grid=(grid,),
        in_specs=in_specs,
        out_specs=pl.BlockSpec((tm, c_pad), lambda i: (i, 0)),
        compiler_params=pltpu.CompilerParams(
            dimension_semantics=("parallel",),
            vmem_limit_bytes=int(min(64 * 2**20, max(2 * est, 32 * 2**20)))),
        cost_estimate=pl.CostEstimate(flops=flops,
                                      transcendentals=transcendentals,
                                      bytes_accessed=bytes_accessed),
    )(ray_pack, e_mat, wenc, benc, *flat_params)

    # drop padded rows / padded classes, upcast once in the wrapper
    return out[:N * S, :num_classes].astype(jnp.float32)


# ---------------------------------------------------------------------------
# SIFRenderer (JAX / Pallas version)
# ---------------------------------------------------------------------------
class SIFRendererPallas:
    NUM_CLASSES_PAD = 128                     # lane-dense padded class width

    def __init__(self, num_samples, num_fine_samples=0, num_classes=19,
                 backbone_dim=29, hidden_dim=(256, 128, 128, 128, 128),
                 key=jax.random.PRNGKey(42)):
        self.num_samples = num_samples
        self.num_fine_samples = num_fine_samples
        self.num_classes = num_classes
        self.near_far = (0.0, 5.0)
        # scaled-down stand-in for [2048,1024,512,256,128]; kept 128-aligned
        # (use 256-multiples on v6e/v7x if the model allows).
        self.hidden_dim = list(hidden_dim)
        self.backbone_dim = backbone_dim
        self.feat_dim = backbone_dim + 3

        # One MERGED (backbone + xyz) input piece, then one piece per hidden
        # output (piece order newest-first matches the kernel's pieces list).
        # bf16 weights, f32 biases / accumulation.
        piece_dims = [self.feat_dim]
        layer_parts, layer_biases = [], []
        for h in self.hidden_dim:
            fan_in = float(sum(piece_dims))
            parts = []
            for d in piece_dims:
                key, kw = jax.random.split(key)
                parts.append((jax.random.normal(kw, (d, h), jnp.float32)
                              / jnp.sqrt(fan_in)).astype(jnp.bfloat16))
            key, kb = jax.random.split(key)
            layer_parts.append(tuple(parts))
            layer_biases.append(0.01 * jax.random.normal(kb, (1, h),
                                                         jnp.float32))
            piece_dims = [h] + piece_dims
        self.layer_parts = layer_parts
        self.layer_biases = layer_biases

        # Classification head, lane-padded to 128 classes.  Padded columns get
        # zero weights and a -1e30 bias so their softmax probability is 0.
        key, kw, kb = jax.random.split(key, 3)
        h_last = self.hidden_dim[-1]
        c_pad = self.NUM_CLASSES_PAD
        w_head = jax.random.normal(kw, (h_last, num_classes), jnp.float32) \
            / jnp.sqrt(float(h_last))
        b_head = 0.01 * jax.random.normal(kb, (1, num_classes), jnp.float32)
        self.w_head = (jnp.zeros((h_last, c_pad), jnp.float32)
                       .at[:, :num_classes].set(w_head).astype(jnp.bfloat16))
        self.b_head = (jnp.full((1, c_pad), -1e30, jnp.float32)
                       .at[:, :num_classes].set(b_head))

    def forward(self, cam2world, phi, uv, intrinsics, encoder_params, hw,
                rand_key, near_far=None):
        del phi  # unused by the reference forward
        B, R, _ = uv.shape
        H, W = hw

        # TODO(synk): geometry.get_ray_directions is external; deterministic
        # pinhole stand-in (plain-JAX glue, not a hot path).
        fx = intrinsics[:, 0, 0][:, None]
        fy = intrinsics[:, 1, 1][:, None]
        cx = intrinsics[:, 0, 2][:, None]
        cy = intrinsics[:, 1, 2][:, None]
        x = (uv[..., 0] - cx) / fx
        y = (uv[..., 1] - cy) / fy
        dirs_cam = jnp.stack([x, y, jnp.ones_like(x)], axis=-1)      # (B, R, 3)
        rot = cam2world[:, :3, :3]
        dirs_world = jnp.einsum('bdc,brc->brd', rot, dirs_cam)
        dirs_world = dirs_world / jnp.linalg.norm(dirs_world, axis=-1,
                                                  keepdims=True)
        pos = jnp.broadcast_to(cam2world[:, None, :3, 3], (B, R, 3))
        dirs = dirs_world.reshape(B * R, 3)
        orig = pos.reshape(B * R, 3)

        if near_far is None:
            near_far = self.near_far
        nf = jnp.asarray(near_far, jnp.float32)
        if nf.ndim == 1:
            near, far = nf[0], nf[1]
        else:
            near, far = nf[:, 0:1], nf[:, 1:2]
        p0 = orig + dirs * near                      # near point of each ray
        pd = dirs * (far - near)                     # span vector of each ray

        # Stratified jitter positions in [0,1] (tiny elementwise, wrapper side).
        S = self.num_samples
        t = jnp.linspace(0.0, 1.0, S, dtype=jnp.float32)
        t_mid = 0.5 * (t[1:] + t[:-1])
        t_lo = jnp.concatenate([t[:1], t_mid])
        t_hi = jnp.concatenate([t_mid, t[-1:]])
        u = jax.random.uniform(rand_key, (B * R, S), jnp.float32)
        teff = t_lo[None, :] + (t_hi - t_lo)[None, :] * u
        # NOTE: depth z = near + (far - near) * teff is never materialized
        # (dpt is only needed by the disabled num_fine_samples>0 path).

        ray_pack = jnp.concatenate([p0, pd, teff], axis=-1)   # (N, 6 + S)

        # TODO(synk): the image encoder is external; the deterministic
        # stand-in sin(pts @ W + b) is fused inside the kernel.  W is augmented
        # with identity columns so the kernel gets [features | xyz] from one dot.
        wenc = encoder_params["W"].astype(jnp.float32)         # (3, backbone)
        benc = encoder_params["b"].astype(jnp.float32)         # (1, backbone)
        waug = jnp.concatenate([wenc, jnp.eye(3, dtype=jnp.float32)],
                               axis=-1).astype(jnp.bfloat16)   # (3, backbone+3)
        baug = jnp.concatenate([benc, jnp.zeros((1, 3), jnp.float32)], axis=-1)

        prob = fused_render_mlp_pallas(
            ray_pack, waug, baug, self.backbone_dim, S,
            self.layer_parts, self.layer_biases, self.w_head, self.b_head,
            self.num_classes)

        # TODO(synk): num_fine_samples>0 path (sample_pdf + re-encode) skipped;
        # default num_fine_samples=0 matches the reference constructor.
        # TODO(synk): reference does prob.view(B, H, W, num_classes), ignoring
        # the per-ray sample axis; we keep the sample axis explicitly.
        return prob.reshape(B, H, W, S, self.num_classes)


# ---------------------------------------------------------------------------
if __name__ == "__main__":
    key = jax.random.PRNGKey(0)
    B, H, W = 2, 4, 4
    R = H * W
    num_samples = 8
    num_classes = 19
    backbone_dim = 29

    kcam, kphi, kenc_w, kenc_b, krand = jax.random.split(key, 5)

    # camera-to-world: identity rotation + small perturbation + translation
    cam2world = jnp.broadcast_to(jnp.eye(4, dtype=jnp.float32), (B, 4, 4))
    cam2world = cam2world + 0.01 * jax.random.normal(kcam, (B, 4, 4),
                                                     jnp.float32)
    cam2world = cam2world.at[:, :3, 3].set(
        jnp.array([[0.0, 0.0, -2.0], [0.1, -0.1, -2.5]], jnp.float32))

    # pinhole intrinsics for a 4x4 image
    intr = jnp.array([[10.0, 0.0, 2.0],
                      [0.0, 10.0, 2.0],
                      [0.0, 0.0, 1.0]], jnp.float32)
    intrinsics = jnp.broadcast_to(intr, (B, 3, 3))

    # uv pixel grid (B, R, 2)
    vs, us = jnp.meshgrid(jnp.arange(H, dtype=jnp.float32),
                          jnp.arange(W, dtype=jnp.float32), indexing="ij")
    uv = jnp.stack([us.reshape(-1), vs.reshape(-1)], axis=-1)        # (R, 2)
    uv = jnp.broadcast_to(uv[None], (B, R, 2))

    phi = jax.random.normal(kphi, (B, 8), jnp.float32)   # unused, as in torch

    encoder_params = {
        "W": 0.5 * jax.random.normal(kenc_w, (3, backbone_dim), jnp.float32),
        "b": 0.1 * jax.random.normal(kenc_b, (1, backbone_dim), jnp.float32),
    }

    renderer = SIFRendererPallas(num_samples=num_samples,
                                 num_fine_samples=0,
                                 num_classes=num_classes,
                                 backbone_dim=backbone_dim)

    prob = renderer.forward(cam2world, phi, uv, intrinsics, encoder_params,
                            hw=(H, W), rand_key=krand)
    prob = jax.block_until_ready(prob)

    assert prob.shape == (B, H, W, num_samples, num_classes), prob.shape
    assert bool(jnp.all(jnp.isfinite(prob)))
    # softmax rows sum to 1 (bf16 output storage -> slightly loose tolerance;
    # padded classes contribute exactly 0)
    assert bool(jnp.allclose(prob.sum(axis=-1), 1.0, atol=1e-2))
    print("KERNEL_OK")
</pallas_src>

<mosaic_0001>
module attributes {stable_mosaic.version = 11 : i64} {
  func.func @_fused_render_mlp_kernel(%arg0: i32, %arg1: memref<8x14xf32, #tpu.memory_space<vmem>>, %arg2: memref<64x8xf32, #tpu.memory_space<vmem>>, %arg3: memref<3x32xbf16, #tpu.memory_space<vmem>>, %arg4: memref<1x32xf32, #tpu.memory_space<vmem>>, %arg5: memref<32x256xbf16, #tpu.memory_space<vmem>>, %arg6: memref<1x256xf32, #tpu.memory_space<vmem>>, %arg7: memref<256x128xbf16, #tpu.memory_space<vmem>>, %arg8: memref<32x128xbf16, #tpu.memory_space<vmem>>, %arg9: memref<1x128xf32, #tpu.memory_space<vmem>>, %arg10: memref<128x128xbf16, #tpu.memory_space<vmem>>, %arg11: memref<256x128xbf16, #tpu.memory_space<vmem>>, %arg12: memref<32x128xbf16, #tpu.memory_space<vmem>>, %arg13: memref<1x128xf32, #tpu.memory_space<vmem>>, %arg14: memref<128x128xbf16, #tpu.memory_space<vmem>>, %arg15: memref<128x128xbf16, #tpu.memory_space<vmem>>, %arg16: memref<256x128xbf16, #tpu.memory_space<vmem>>, %arg17: memref<32x128xbf16, #tpu.memory_space<vmem>>, %arg18: memref<1x128xf32, #tpu.memory_space<vmem>>, %arg19: memref<128x128xbf16, #tpu.memory_space<vmem>>, %arg20: memref<128x128xbf16, #tpu.memory_space<vmem>>, %arg21: memref<128x128xbf16, #tpu.memory_space<vmem>>, %arg22: memref<256x128xbf16, #tpu.memory_space<vmem>>, %arg23: memref<32x128xbf16, #tpu.memory_space<vmem>>, %arg24: memref<1x128xf32, #tpu.memory_space<vmem>>, %arg25: memref<128x128xbf16, #tpu.memory_space<vmem>>, %arg26: memref<1x128xf32, #tpu.memory_space<vmem>>, %arg27: memref<64x128xbf16, #tpu.memory_space<vmem>>) attributes {dimension_semantics = [#tpu.dimension_semantics<parallel>], iteration_bounds = array<i64: 4>, scalar_prefetch = 0 : i64, scratch_operands = 0 : i64, tpu.core_type = #tpu.core_type<tc>, window_params = [{transform_indices = @transform_0, window_bounds = array<i64: 8, 14>}, {pipeline_mode = #tpu.pipeline_mode<synchronous>, transform_indices = @transform_1, window_bounds = array<i64: 64, 8>}, {pipeline_mode = #tpu.pipeline_mode<synchronous>, transform_indices = @transform_2, window_bounds = array<i64: 3, 32>}, {pipeline_mode = #tpu.pipeline_mode<synchronous>, transform_indices = @transform_3, window_bounds = array<i64: 1, 32>}, {pipeline_mode = #tpu.pipeline_mode<synchronous>, transform_indices = @transform_4, window_bounds = array<i64: 32, 256>}, {pipeline_mode = #tpu.pipeline_mode<synchronous>, transform_indices = @transform_5, window_bounds = array<i64: 1, 256>}, {pipeline_mode = #tpu.pipeline_mode<synchronous>, transform_indices = @transform_6, window_bounds = array<i64: 256, 128>}, {pipeline_mode = #tpu.pipeline_mode<synchronous>, transform_indices = @transform_7, window_bounds = array<i64: 32, 128>}, {pipeline_mode = #tpu.pipeline_mode<synchronous>, transform_indices = @transform_8, window_bounds = array<i64: 1, 128>}, {pipeline_mode = #tpu.pipeline_mode<synchronous>, transform_indices = @transform_9, window_bounds = array<i64: 128, 128>}, {pipeline_mode = #tpu.pipeline_mode<synchronous>, transform_indices = @transform_10, window_bounds = array<i64: 256, 128>}, {pipeline_mode = #tpu.pipeline_mode<synchronous>, transform_indices = @transform_11, window_bounds = array<i64: 32, 128>}, {pipeline_mode = #tpu.pipeline_mode<synchronous>, transform_indices = @transform_12, window_bounds = array<i64: 1, 128>}, {pipeline_mode = #tpu.pipeline_mode<synchronous>, transform_indices = @transform_13, window_bounds = array<i64: 128, 128>}, {pipeline_mode = #tpu.pipeline_mode<synchronous>, transform_indices = @transform_14, window_bounds = array<i64: 128, 128>}, {pipeline_mode = #tpu.pipeline_mode<synchronous>, transform_indices = @transform_15, window_bounds = array<i64: 256, 128>}, {pipeline_mode = #tpu.pipeline_mode<synchronous>, transform_indices = @transform_16, window_bounds = array<i64: 32, 128>}, {pipeline_mode = #tpu.pipeline_mode<synchronous>, transform_indices = @transform_17, window_bounds = array<i64: 1, 128>}, {pipeline_mode = #tpu.pipeline_mode<synchronous>, transform_indices = @transform_18, window_bounds = array<i64: 128, 128>}, {pipeline_mode = #tpu.pipeline_mode<synchronous>, transform_indices = @transform_19, window_bounds = array<i64: 128, 128>}, {pipeline_mode = #tpu.pipeline_mode<synchronous>, transform_indices = @transform_20, window_bounds = array<i64: 128, 128>}, {pipeline_mode = #tpu.pipeline_mode<synchronous>, transform_indices = @transform_21, window_bounds = array<i64: 256, 128>}, {pipeline_mode = #tpu.pipeline_mode<synchronous>, transform_indices = @transform_22, window_bounds = array<i64: 32, 128>}, {pipeline_mode = #tpu.pipeline_mode<synchronous>, transform_indices = @transform_23, window_bounds = array<i64: 1, 128>}, {pipeline_mode = #tpu.pipeline_mode<synchronous>, transform_indices = @transform_24, window_bounds = array<i64: 128, 128>}, {pipeline_mode = #tpu.pipeline_mode<synchronous>, transform_indices = @transform_25, window_bounds = array<i64: 1, 128>}, {transform_indices = @transform_26, window_bounds = array<i64: 64, 128>}]} {
    %c0 = arith.constant 0 : index
    %c0_0 = arith.constant 0 : index
    %0 = vector.load %arg2[%c0, %c0_0] : memref<64x8xf32, #tpu.memory_space<vmem>>, vector<64x8xf32>
    %c0_1 = arith.constant 0 : index
    %c0_2 = arith.constant 0 : index
    %1 = vector.load %arg1[%c0_1, %c0_2] : memref<8x14xf32, #tpu.memory_space<vmem>>, vector<8x14xf32>
    %cst = arith.constant dense<0.000000e+00> : vector<64x14xf32>
    %2 = tpu.matmul %0, %1, %cst {dimension_numbers = #tpu.dot_dimension_numbers<[1], [0], [0], [1], [0, 0, 1, 1], [], []>} : vector<64x8xf32>, vector<8x14xf32>, vector<64x14xf32> -> vector<64x14xf32>
    %3 = vector.extract_strided_slice %2 {offsets = [0, 0], sizes = [64, 3], strides = [1, 1]} : vector<64x14xf32> to vector<64x3xf32>
    %4 = vector.extract_strided_slice %2 {offsets = [0, 3], sizes = [64, 3], strides = [1, 1]} : vector<64x14xf32> to vector<64x3xf32>
    %5 = vector.extract_strided_slice %2 {offsets = [0, 6], sizes = [64, 8], strides = [1, 1]} : vector<64x14xf32> to vector<64x8xf32>
    %6 = tpu.iota {dimensions = array<i32: 0>} : vector<64x8xi32>
    %c8_i32 = arith.constant 8 : i32
    %c0_i32 = arith.constant 0 : i32
    %7 = arith.cmpi eq, %c8_i32, %c0_i32 : i32
    %c1_i32 = arith.constant 1 : i32
    %8 = arith.select %7, %c1_i32, %c8_i32 : i32
    %9 = vector.broadcast %8 : i32 to vector<64x8xi32>
    %10 = arith.remsi %6, %9 : vector<64x8xi32>
    %c0_i32_3 = arith.constant 0 : i32
    %11 = vector.broadcast %c0_i32_3 : i32 to vector<64x8xi32>
    %12 = arith.cmpi ne, %10, %11 : vector<64x8xi32>
    %c0_i32_4 = arith.constant 0 : i32
    %13 = vector.broadcast %c0_i32_4 : i32 to vector<64x8xi32>
    %14 = arith.cmpi slt, %10, %13 : vector<64x8xi32>
    %c0_i32_5 = arith.constant 0 : i32
    %15 = arith.cmpi slt, %8, %c0_i32_5 : i32
    %16 = vector.broadcast %15 : i1 to vector<64x8xi1>
    %17 = vector.broadcast %16 : vector<64x8xi1> to vector<64x8xi1>
    %18 = arith.xori %14, %17 : vector<64x8xi1>
    %19 = arith.andi %18, %12 : vector<64x8xi1>
    %20 = vector.broadcast %8 : i32 to vector<64x8xi32>
    %21 = arith.addi %10, %20 : vector<64x8xi32>
    %22 = arith.select %19, %21, %10 : vector<64x8xi1>, vector<64x8xi32>
    %23 = tpu.iota {dimensions = array<i32: 1>} : vector<64x8xi32>
    %24 = arith.cmpi eq, %22, %23 : vector<64x8xi32>
    %cst_6 = arith.constant 0.000000e+00 : f32
    %25 = vector.broadcast %cst_6 : f32 to vector<64x8xf32>
    %26 = arith.select %24, %5, %25 : vector<64x8xi1>, vector<64x8xf32>
    %cst_7 = arith.constant dense<0.000000e+00> : vector<64xf32>
    %27 = vector.multi_reduction <add>, %26, %cst_7 [1] : vector<64x8xf32> to vector<64xf32>
    %28 = vector.shape_cast %27 : vector<64xf32> to vector<64x1xf32>
    %29 = vector.broadcast %28 : vector<64x1xf32> to vector<64x3xf32>
    %30 = arith.mulf %29, %4 : vector<64x3xf32>
    %31 = arith.addf %3, %30 : vector<64x3xf32>
    %32 = arith.truncf %31 : vector<64x3xf32> to vector<64x3xbf16>
    %c0_8 = arith.constant 0 : index
    %c0_9 = arith.constant 0 : index
    %33 = vector.load %arg3[%c0_8, %c0_9] : memref<3x32xbf16, #tpu.memory_space<vmem>>, vector<3x32xbf16>
    %cst_10 = arith.constant dense<0.000000e+00> : vector<64x32xf32>
    %34 = tpu.matmul %32, %33, %cst_10 {dimension_numbers = #tpu.dot_dimension_numbers<[1], [0], [0], [1], [0, 0, 1, 1], [], []>} : vector<64x3xbf16>, vector<3x32xbf16>, vector<64x32xf32> -> vector<64x32xf32>
    %c0_11 = arith.constant 0 : index
    %c0_12 = arith.constant 0 : index
    %35 = vector.load %arg4[%c0_11, %c0_12] : memref<1x32xf32, #tpu.memory_space<vmem>>, vector<1x32xf32>
    %36 = vector.broadcast %35 : vector<1x32xf32> to vector<64x32xf32>
    %37 = arith.addf %34, %36 : vector<64x32xf32>
    %38 = tpu.iota {dimensions = array<i32: 1>} : vector<64x32xi32>
    %c29_i32 = arith.constant 29 : i32
    %39 = vector.broadcast %c29_i32 : i32 to vector<64x32xi32>
    %40 = arith.cmpi slt, %38, %39 : vector<64x32xi32>
    %41 = math.sin %37 : vector<64x32xf32>
    %42 = arith.select %40, %41, %37 : vector<64x32xi1>, vector<64x32xf32>
    %43 = arith.truncf %42 : vector<64x32xf32> to vector<64x32xbf16>
    %c0_13 = arith.constant 0 : index
    %c0_14 = arith.constant 0 : index
    %44 = vector.load %arg5[%c0_13, %c0_14] : memref<32x256xbf16, #tpu.memory_space<vmem>>, vector<32x256xbf16>
    %cst_15 = arith.constant dense<0.000000e+00> : vector<64x256xf32>
    %45 = tpu.matmul %43, %44, %cst_15 {dimension_numbers = #tpu.dot_dimension_numbers<[1], [0], [0], [1], [0, 0, 1, 1], [], []>} : vector<64x32xbf16>, vector<32x256xbf16>, vector<64x256xf32> -> vector<64x256xf32>
    %c0_16 = arith.constant 0 : index
    %c0_17 = arith.constant 0 : index
    %46 = vector.load %arg6[%c0_16, %c0_17] : memref<1x256xf32, #tpu.memory_space<vmem>>, vector<1x256xf32>
    %47 = vector.broadcast %46 : vector<1x256xf32> to vector<64x256xf32>
    %48 = arith.addf %45, %47 : vector<64x256xf32>
    %cst_18 = arith.constant 0.000000e+00 : f32
    %49 = vector.broadcast %cst_18 : f32 to vector<64x256xf32>
    %50 = arith.cmpf oge, %48, %49 : vector<64x256xf32>
    %cst_19 = arith.constant 0.00999999977 : f32
    %51 = vector.broadcast %cst_19 : f32 to vector<64x256xf32>
    %52 = arith.mulf %51, %48 : vector<64x256xf32>
    %53 = arith.select %50, %48, %52 : vector<64x256xi1>, vector<64x256xf32>
    %54 = arith.truncf %53 : vector<64x256xf32> to vector<64x256xbf16>
    %c0_20 = arith.constant 0 : index
    %c0_21 = arith.constant 0 : index
    %55 = vector.load %arg7[%c0_20, %c0_21] : memref<256x128xbf16, #tpu.memory_space<vmem>>, vector<256x128xbf16>
    %cst_22 = arith.constant dense<0.000000e+00> : vector<64x128xf32>
    %56 = tpu.matmul %54, %55, %cst_22 {dimension_numbers = #tpu.dot_dimension_numbers<[1], [0], [0], [1], [0, 0, 1, 1], [], []>} : vector<64x256xbf16>, vector<256x128xbf16>, vector<64x128xf32> -> vector<64x128xf32>
    %c0_23 = arith.constant 0 : index
    %c0_24 = arith.constant 0 : index
    %57 = vector.load %arg8[%c0_23, %c0_24] : memref<32x128xbf16, #tpu.memory_space<vmem>>, vector<32x128xbf16>
    %cst_25 = arith.constant dense<0.000000e+00> : vector<64x128xf32>
    %58 = tpu.matmul %43, %57, %cst_25 {dimension_numbers = #tpu.dot_dimension_numbers<[1], [0], [0], [1], [0, 0, 1, 1], [], []>} : vector<64x32xbf16>, vector<32x128xbf16>, vector<64x128xf32> -> vector<64x128xf32>
    %59 = arith.addf %56, %58 : vector<64x128xf32>
    %c0_26 = arith.constant 0 : index
    %c0_27 = arith.constant 0 : index
    %60 = vector.load %arg9[%c0_26, %c0_27] : memref<1x128xf32, #tpu.memory_space<vmem>>, vector<1x128xf32>
    %61 = vector.broadcast %60 : vector<1x128xf32> to vector<64x128xf32>
    %62 = arith.addf %59, %61 : vector<64x128xf32>
    %cst_28 = arith.constant 0.000000e+00 : f32
    %63 = vector.broadcast %cst_28 : f32 to vector<64x128xf32>
    %64 = arith.cmpf oge, %62, %63 : vector<64x128xf32>
    %cst_29 = arith.constant 0.00999999977 : f32
    %65 = vector.broadcast %cst_29 : f32 to vector<64x128xf32>
    %66 = arith.mulf %65, %62 : vector<64x128xf32>
    %67 = arith.select %64, %62, %66 : vector<64x128xi1>, vector<64x128xf32>
    %68 = arith.truncf %67 : vector<64x128xf32> to vector<64x128xbf16>
    %c0_30 = arith.constant 0 : index
    %c0_31 = arith.constant 0 : index
    %69 = vector.load %arg10[%c0_30, %c0_31] : memref<128x128xbf16, #tpu.memory_space<vmem>>, vector<128x128xbf16>
    %cst_32 = arith.constant dense<0.000000e+00> : vector<64x128xf32>
    %70 = tpu.matmul %68, %69, %cst_32 {dimension_numbers = #tpu.dot_dimension_numbers<[1], [0], [0], [1], [0, 0, 1, 1], [], []>} : vector<64x128xbf16>, vector<128x128xbf16>, vector<64x128xf32> -> vector<64x128xf32>
    %c0_33 = arith.constant 0 : index
    %c0_34 = arith.constant 0 : index
    %71 = vector.load %arg11[%c0_33, %c0_34] : memref<256x128xbf16, #tpu.memory_space<vmem>>, vector<256x128xbf16>
    %cst_35 = arith.constant dense<0.000000e+00> : vector<64x128xf32>
    %72 = tpu.matmul %54, %71, %cst_35 {dimension_numbers = #tpu.dot_dimension_numbers<[1], [0], [0], [1], [0, 0, 1, 1], [], []>} : vector<64x256xbf16>, vector<256x128xbf16>, vector<64x128xf32> -> vector<64x128xf32>
    %73 = arith.addf %70, %72 : vector<64x128xf32>
    %c0_36 = arith.constant 0 : index
    %c0_37 = arith.constant 0 : index
    %74 = vector.load %arg12[%c0_36, %c0_37] : memref<32x128xbf16, #tpu.memory_space<vmem>>, vector<32x128xbf16>
    %cst_38 = arith.constant dense<0.000000e+00> : vector<64x128xf32>
    %75 = tpu.matmul %43, %74, %cst_38 {dimension_numbers = #tpu.dot_dimension_numbers<[1], [0], [0], [1], [0, 0, 1, 1], [], []>} : vector<64x32xbf16>, vector<32x128xbf16>, vector<64x128xf32> -> vector<64x128xf32>
    %76 = arith.addf %73, %75 : vector<64x128xf32>
    %c0_39 = arith.constant 0 : index
    %c0_40 = arith.constant 0 : index
    %77 = vector.load %arg13[%c0_39, %c0_40] : memref<1x128xf32, #tpu.memory_space<vmem>>, vector<1x128xf32>
    %78 = vector.broadcast %77 : vector<1x128xf32> to vector<64x128xf32>
    %79 = arith.addf %76, %78 : vector<64x128xf32>
    %cst_41 = arith.constant 0.000000e+00 : f32
    %80 = vector.broadcast %cst_41 : f32 to vector<64x128xf32>
    %81 = arith.cmpf oge, %79, %80 : vector<64x128xf32>
    %cst_42 = arith.constant 0.00999999977 : f32
    %82 = vector.broadcast %cst_42 : f32 to vector<64x128xf32>
    %83 = arith.mulf %82, %79 : vector<64x128xf32>
    %84 = arith.select %81, %79, %83 : vector<64x128xi1>, vector<64x128xf32>
    %85 = arith.truncf %84 : vector<64x128xf32> to vector<64x128xbf16>
    %c0_43 = arith.constant 0 : index
    %c0_44 = arith.constant 0 : index
    %86 = vector.load %arg14[%c0_43, %c0_44] : memref<128x128xbf16, #tpu.memory_space<vmem>>, vector<128x128xbf16>
    %cst_45 = arith.constant dense<0.000000e+00> : vector<64x128xf32>
    %87 = tpu.matmul %85, %86, %cst_45 {dimension_numbers = #tpu.dot_dimension_numbers<[1], [0], [0], [1], [0, 0, 1, 1], [], []>} : vector<64x128xbf16>, vector<128x128xbf16>, vector<64x128xf32> -> vector<64x128xf32>
    %c0_46 = arith.constant 0 : index
    %c0_47 = arith.constant 0 : index
    %88 = vector.load %arg15[%c0_46, %c0_47] : memref<128x128xbf16, #tpu.memory_space<vmem>>, vector<128x128xbf16>
    %cst_48 = arith.constant dense<0.000000e+00> : vector<64x128xf32>
    %89 = tpu.matmul %68, %88, %cst_48 {dimension_numbers = #tpu.dot_dimension_numbers<[1], [0], [0], [1], [0, 0, 1, 1], [], []>} : vector<64x128xbf16>, vector<128x128xbf16>, vector<64x128xf32> -> vector<64x128xf32>
    %90 = arith.addf %87, %89 : vector<64x128xf32>
    %c0_49 = arith.constant 0 : index
    %c0_50 = arith.constant 0 : index
    %91 = vector.load %arg16[%c0_49, %c0_50] : memref<256x128xbf16, #tpu.memory_space<vmem>>, vector<256x128xbf16>
    %cst_51 = arith.constant dense<0.000000e+00> : vector<64x128xf32>
    %92 = tpu.matmul %54, %91, %cst_51 {dimension_numbers = #tpu.dot_dimension_numbers<[1], [0], [0], [1], [0, 0, 1, 1], [], []>} : vector<64x256xbf16>, vector<256x128xbf16>, vector<64x128xf32> -> vector<64x128xf32>
    %93 = arith.addf %90, %92 : vector<64x128xf32>
    %c0_52 = arith.constant 0 : index
    %c0_53 = arith.constant 0 : index
    %94 = vector.load %arg17[%c0_52, %c0_53] : memref<32x128xbf16, #tpu.memory_space<vmem>>, vector<32x128xbf16>
    %cst_54 = arith.constant dense<0.000000e+00> : vector<64x128xf32>
    %95 = tpu.matmul %43, %94, %cst_54 {dimension_numbers = #tpu.dot_dimension_numbers<[1], [0], [0], [1], [0, 0, 1, 1], [], []>} : vector<64x32xbf16>, vector<32x128xbf16>, vector<64x128xf32> -> vector<64x128xf32>
    %96 = arith.addf %93, %95 : vector<64x128xf32>
    %c0_55 = arith.constant 0 : index
    %c0_56 = arith.constant 0 : index
    %97 = vector.load %arg18[%c0_55, %c0_56] : memref<1x128xf32, #tpu.memory_space<vmem>>, vector<1x128xf32>
    %98 = vector.broadcast %97 : vector<1x128xf32> to vector<64x128xf32>
    %99 = arith.addf %96, %98 : vector<64x128xf32>
    %cst_57 = arith.constant 0.000000e+00 : f32
    %100 = vector.broadcast %cst_57 : f32 to vector<64x128xf32>
    %101 = arith.cmpf oge, %99, %100 : vector<64x128xf32>
    %cst_58 = arith.constant 0.00999999977 : f32
    %102 = vector.broadcast %cst_58 : f32 to vector<64x128xf32>
    %103 = arith.mulf %102, %99 : vector<64x128xf32>
    %104 = arith.select %101, %99, %103 : vector<64x128xi1>, vector<64x128xf32>
    %105 = arith.truncf %104 : vector<64x128xf32> to vector<64x128xbf16>
    %c0_59 = arith.constant 0 : index
    %c0_60 = arith.constant 0 : index
    %106 = vector.load %arg19[%c0_59, %c0_60] : memref<128x128xbf16, #tpu.memory_space<vmem>>, vector<128x128xbf16>
    %cst_61 = arith.constant dense<0.000000e+00> : vector<64x128xf32>
    %107 = tpu.matmul %105, %106, %cst_61 {dimension_numbers = #tpu.dot_dimension_numbers<[1], [0], [0], [1], [0, 0, 1, 1], [], []>} : vector<64x128xbf16>, vector<128x128xbf16>, vector<64x128xf32> -> vector<64x128xf32>
    %c0_62 = arith.constant 0 : index
    %c0_63 = arith.constant 0 : index
    %108 = vector.load %arg20[%c0_62, %c0_63] : memref<128x128xbf16, #tpu.memory_space<vmem>>, vector<128x128xbf16>
    %cst_64 = arith.constant dense<0.000000e+00> : vector<64x128xf32>
    %109 = tpu.matmul %85, %108, %cst_64 {dimension_numbers = #tpu.dot_dimension_numbers<[1], [0], [0], [1], [0, 0, 1, 1], [], []>} : vector<64x128xbf16>, vector<128x128xbf16>, vector<64x128xf32> -> vector<64x128xf32>
    %110 = arith.addf %107, %109 : vector<64x128xf32>
    %c0_65 = arith.constant 0 : index
    %c0_66 = arith.constant 0 : index
    %111 = vector.load %arg21[%c0_65, %c0_66] : memref<128x128xbf16, #tpu.memory_space<vmem>>, vector<128x128xbf16>
    %cst_67 = arith.constant dense<0.000000e+00> : vector<64x128xf32>
    %112 = tpu.matmul %68, %111, %cst_67 {dimension_numbers = #tpu.dot_dimension_numbers<[1], [0], [0], [1], [0, 0, 1, 1], [], []>} : vector<64x128xbf16>, vector<128x128xbf16>, vector<64x128xf32> -> vector<64x128xf32>
    %113 = arith.addf %110, %112 : vector<64x128xf32>
    %c0_68 = arith.constant 0 : index
    %c0_69 = arith.constant 0 : index
    %114 = vector.load %arg22[%c0_68, %c0_69] : memref<256x128xbf16, #tpu.memory_space<vmem>>, vector<256x128xbf16>
    %cst_70 = arith.constant dense<0.000000e+00> : vector<64x128xf32>
    %115 = tpu.matmul %54, %114, %cst_70 {dimension_numbers = #tpu.dot_dimension_numbers<[1], [0], [0], [1], [0, 0, 1, 1], [], []>} : vector<64x256xbf16>, vector<256x128xbf16>, vector<64x128xf32> -> vector<64x128xf32>
    %116 = arith.addf %113, %115 : vector<64x128xf32>
    %c0_71 = arith.constant 0 : index
    %c0_72 = arith.constant 0 : index
    %117 = vector.load %arg23[%c0_71, %c0_72] : memref<32x128xbf16, #tpu.memory_space<vmem>>, vector<32x128xbf16>
    %cst_73 = arith.constant dense<0.000000e+00> : vector<64x128xf32>
    %118 = tpu.matmul %43, %117, %cst_73 {dimension_numbers = #tpu.dot_dimension_numbers<[1], [0], [0], [1], [0, 0, 1, 1], [], []>} : vector<64x32xbf16>, vector<32x128xbf16>, vector<64x128xf32> -> vector<64x128xf32>
    %119 = arith.addf %116, %118 : vector<64x128xf32>
    %c0_74 = arith.constant 0 : index
    %c0_75 = arith.constant 0 : index
    %120 = vector.load %arg24[%c0_74, %c0_75] : memref<1x128xf32, #tpu.memory_space<vmem>>, vector<1x128xf32>
    %121 = vector.broadcast %120 : vector<1x128xf32> to vector<64x128xf32>
    %122 = arith.addf %119, %121 : vector<64x128xf32>
    %cst_76 = arith.constant 0.000000e+00 : f32
    %123 = vector.broadcast %cst_76 : f32 to vector<64x128xf32>
    %124 = arith.cmpf oge, %122, %123 : vector<64x128xf32>
    %cst_77 = arith.constant 0.00999999977 : f32
    %125 = vector.broadcast %cst_77 : f32 to vector<64x128xf32>
    %126 = arith.mulf %125, %122 : vector<64x128xf32>
    %127 = arith.select %124, %122, %126 : vector<64x128xi1>, vector<64x128xf32>
    %128 = arith.truncf %127 : vector<64x128xf32> to vector<64x128xbf16>
    %c0_78 = arith.constant 0 : index
    %c0_79 = arith.constant 0 : index
    %129 = vector.load %arg25[%c0_78, %c0_79] : memref<128x128xbf16, #tpu.memory_space<vmem>>, vector<128x128xbf16>
    %cst_80 = arith.constant dense<0.000000e+00> : vector<64x128xf32>
    %130 = tpu.matmul %128, %129, %cst_80 {dimension_numbers = #tpu.dot_dimension_numbers<[1], [0], [0], [1], [0, 0, 1, 1], [], []>} : vector<64x128xbf16>, vector<128x128xbf16>, vector<64x128xf32> -> vector<64x128xf32>
    %c0_81 = arith.constant 0 : index
    %c0_82 = arith.constant 0 : index
    %131 = vector.load %arg26[%c0_81, %c0_82] : memref<1x128xf32, #tpu.memory_space<vmem>>, vector<1x128xf32>
    %132 = vector.broadcast %131 : vector<1x128xf32> to vector<64x128xf32>
    %133 = arith.addf %130, %132 : vector<64x128xf32>
    %cst_83 = arith.constant dense<0xFF800000> : vector<64xf32>
    %134 = vector.multi_reduction <maximumf>, %133, %cst_83 [1] : vector<64x128xf32> to vector<64xf32>
    %135 = vector.shape_cast %134 : vector<64xf32> to vector<64x1xf32>
    %136 = vector.broadcast %135 : vector<64x1xf32> to vector<64x128xf32>
    %137 = arith.subf %133, %136 : vector<64x128xf32>
    %138 = math.exp %137 : vector<64x128xf32>
    %cst_84 = arith.constant dense<0.000000e+00> : vector<64xf32>
    %139 = vector.multi_reduction <add>, %138, %cst_84 [1] : vector<64x128xf32> to vector<64xf32>
    %140 = vector.shape_cast %139 : vector<64xf32> to vector<64x1xf32>
    %141 = tpu.reciprocal %140 {approx = true} : vector<64x1xf32> -> vector<64x1xf32>
    %142 = vector.broadcast %141 : vector<64x1xf32> to vector<64x128xf32>
    %143 = arith.mulf %138, %142 : vector<64x128xf32>
    %144 = arith.truncf %143 : vector<64x128xf32> to vector<64x128xbf16>
    %c0_85 = arith.constant 0 : index
    %c0_86 = arith.constant 0 : index
    %145 = vector.load %arg27[%c0_85, %c0_86] : memref<64x128xbf16, #tpu.memory_space<vmem>>, vector<64x128xbf16>
    tpu.vector_store %arg27[%c0_85, %c0_86], %144 {strides = array<i32>} : memref<64x128xbf16, #tpu.memory_space<vmem>>, vector<64x128xbf16>,
    return
  }
  func.func @transform_0(%arg0: i32) -> (i32, i32) {
    %c0_i32 = arith.constant 0 : i32
    %c0_i32_0 = arith.constant 0 : i32
    return %arg0, %c0_i32 : i32, i32
  }
  func.func @transform_1(%arg0: i32) -> (i32, i32) {
    %c0_i32 = arith.constant 0 : i32
    %c0_i32_0 = arith.constant 0 : i32
    %c0_i32_1 = arith.constant 0 : i32
    return %c0_i32, %c0_i32_0 : i32, i32
  }
  func.func @transform_2(%arg0: i32) -> (i32, i32) {
    %c0_i32 = arith.constant 0 : i32
    %c0_i32_0 = arith.constant 0 : i32
    %c0_i32_1 = arith.constant 0 : i32
    return %c0_i32, %c0_i32_0 : i32, i32
  }
  func.func @transform_3(%arg0: i32) -> (i32, i32) {
    %c0_i32 = arith.constant 0 : i32
    %c0_i32_0 = arith.constant 0 : i32
    %c0_i32_1 = arith.constant 0 : i32
    return %c0_i32, %c0_i32_0 : i32, i32
  }
  func.func @transform_4(%arg0: i32) -> (i32, i32) {
    %c0_i32 = arith.constant 0 : i32
    %c0_i32_0 = arith.constant 0 : i32
    %c0_i32_1 = arith.constant 0 : i32
    return %c0_i32, %c0_i32_0 : i32, i32
  }
  func.func @transform_5(%arg0: i32) -> (i32, i32) {
    %c0_i32 = arith.constant 0 : i32
    %c0_i32_0 = arith.constant 0 : i32
    %c0_i32_1 = arith.constant 0 : i32
    return %c0_i32, %c0_i32_0 : i32, i32
  }
  func.func @transform_6(%arg0: i32) -> (i32, i32) {
    %c0_i32 = arith.constant 0 : i32
    %c0_i32_0 = arith.constant 0 : i32
    %c0_i32_1 = arith.constant 0 : i32
    return %c0_i32, %c0_i32_0 : i32, i32
  }
  func.func @transform_7(%arg0: i32) -> (i32, i32) {
    %c0_i32 = arith.constant 0 : i32
    %c0_i32_0 = arith.constant 0 : i32
    %c0_i32_1 = arith.constant 0 : i32
    return %c0_i32, %c0_i32_0 : i32, i32
  }
  func.func @transform_8(%arg0: i32) -> (i32, i32) {
    %c0_i32 = arith.constant 0 : i32
    %c0_i32_0 = arith.constant 0 : i32
    %c0_i32_1 = arith.constant 0 : i32
    return %c0_i32, %c0_i32_0 : i32, i32
  }
  func.func @transform_9(%arg0: i32) -> (i32, i32) {
    %c0_i32 = arith.constant 0 : i32
    %c0_i32_0 = arith.constant 0 : i32
    %c0_i32_1 = arith.constant 0 : i32
    return %c0_i32, %c0_i32_0 : i32, i32
  }
  func.func @transform_10(%arg0: i32) -> (i32, i32) {
    %c0_i32 = arith.constant 0 : i32
    %c0_i32_0 = arith.constant 0 : i32
    %c0_i32_1 = arith.constant 0 : i32
    return %c0_i32, %c0_i32_0 : i32, i32
  }
  func.func @transform_11(%arg0: i32) -> (i32, i32) {
    %c0_i32 = arith.constant 0 : i32
    %c0_i32_0 = arith.constant 0 : i32
    %c0_i32_1 = arith.constant 0 : i32
    return %c0_i32, %c0_i32_0 : i32, i32
  }
  func.func @transform_12(%arg0: i32) -> (i32, i32) {
    %c0_i32 = arith.constant 0 : i32
    %c0_i32_0 = arith.constant 0 : i32
    %c0_i32_1 = arith.constant 0 : i32
    return %c0_i32, %c0_i32_0 : i32, i32
  }
  func.func @transform_13(%arg0: i32) -> (i32, i32) {
    %c0_i32 = arith.constant 0 : i32
    %c0_i32_0 = arith.constant 0 : i32
    %c0_i32_1 = arith.constant 0 : i32
    return %c0_i32, %c0_i32_0 : i32, i32
  }
  func.func @transform_14(%arg0: i32) -> (i32, i32) {
    %c0_i32 = arith.constant 0 : i32
    %c0_i32_0 = arith.constant 0 : i32
    %c0_i32_1 = arith.constant 0 : i32
    return %c0_i32, %c0_i32_0 : i32, i32
  }
  func.func @transform_15(%arg0: i32) -> (i32, i32) {
    %c0_i32 = arith.constant 0 : i32
    %c0_i32_0 = arith.constant 0 : i32
    %c0_i32_1 = arith.constant 0 : i32
    return %c0_i32, %c0_i32_0 : i32, i32
  }
  func.func @transform_16(%arg0: i32) -> (i32, i32) {
    %c0_i32 = arith.constant 0 : i32
    %c0_i32_0 = arith.constant 0 : i32
    %c0_i32_1 = arith.constant 0 : i32
    return %c0_i32, %c0_i32_0 : i32, i32
  }
  func.func @transform_17(%arg0: i32) -> (i32, i32) {
    %c0_i32 = arith.constant 0 : i32
    %c0_i32_0 = arith.constant 0 : i32
    %c0_i32_1 = arith.constant 0 : i32
    return %c0_i32, %c0_i32_0 : i32, i32
  }
  func.func @transform_18(%arg0: i32) -> (i32, i32) {
    %c0_i32 = arith.constant 0 : i32
    %c0_i32_0 = arith.constant 0 : i32
    %c0_i32_1 = arith.constant 0 : i32
    return %c0_i32, %c0_i32_0 : i32, i32
  }
  func.func @transform_19(%arg0: i32) -> (i32, i32) {
    %c0_i32 = arith.constant 0 : i32
    %c0_i32_0 = arith.constant 0 : i32
    %c0_i32_1 = arith.constant 0 : i32
    return %c0_i32, %c0_i32_0 : i32, i32
  }
  func.func @transform_20(%arg0: i32) -> (i32, i32) {
    %c0_i32 = arith.constant 0 : i32
    %c0_i32_0 = arith.constant 0 : i32
    %c0_i32_1 = arith.constant 0 : i32
    return %c0_i32, %c0_i32_0 : i32, i32
  }
  func.func @transform_21(%arg0: i32) -> (i32, i32) {
    %c0_i32 = arith.constant 0 : i32
    %c0_i32_0 = arith.constant 0 : i32
    %c0_i32_1 = arith.constant 0 : i32
    return %c0_i32, %c0_i32_0 : i32, i32
  }
  func.func @transform_22(%arg0: i32) -> (i32, i32) {
    %c0_i32 = arith.constant 0 : i32
    %c0_i32_0 = arith.constant 0 : i32
    %c0_i32_1 = arith.constant 0 : i32
    return %c0_i32, %c0_i32_0 : i32, i32
  }
  func.func @transform_23(%arg0: i32) -> (i32, i32) {
    %c0_i32 = arith.constant 0 : i32
    %c0_i32_0 = arith.constant 0 : i32
    %c0_i32_1 = arith.constant 0 : i32
    return %c0_i32, %c0_i32_0 : i32, i32
  }
  func.func @transform_24(%arg0: i32) -> (i32, i32) {
    %c0_i32 = arith.constant 0 : i32
    %c0_i32_0 = arith.constant 0 : i32
    %c0_i32_1 = arith.constant 0 : i32
    return %c0_i32, %c0_i32_0 : i32, i32
  }
  func.func @transform_25(%arg0: i32) -> (i32, i32) {
    %c0_i32 = arith.constant 0 : i32
    %c0_i32_0 = arith.constant 0 : i32
    %c0_i32_1 = arith.constant 0 : i32
    return %c0_i32, %c0_i32_0 : i32, i32
  }
  func.func @transform_26(%arg0: i32) -> (i32, i32) {
    %c0_i32 = arith.constant 0 : i32
    %c0_i32_0 = arith.constant 0 : i32
    return %arg0, %c0_i32 : i32, i32
  }
}

</mosaic_0001>

<llo_original>
// kernel: tpu_custom_call.1
$region0: #{tpu_custom_call.1}
  #allocation0 [shape = 'u32[]', space=smem, size = 0x4, offset = 0x4, fixed_abs, tag = 'smem constant byte address 0x4 - core index']
  #allocation1 [shape = 'u32[72,128]{1,0:T(1,128)}', space=vmem, size = 0x9000, scoped, tag = 'internal scratch']
  %s0 = inlined_call_operand.vmem [shape: f32[32,14], index: 0, kind: input, shape index: {}]
  %s1 = inlined_call_operand.vmem [shape: f32[64,8], index: 1, kind: input, shape index: {}]
  %s2 = inlined_call_operand.hbm [shape: bf16[3,32], index: 2, kind: input, shape index: {}]
  %s3 = inlined_call_operand.vmem [shape: f32[1,32], index: 3, kind: input, shape index: {}]
  %s4 = inlined_call_operand.hbm [shape: bf16[32,256], index: 4, kind: input, shape index: {}]
  %s5 = inlined_call_operand.hbm [shape: f32[1,256], index: 5, kind: input, shape index: {}]
  %s6 = inlined_call_operand.hbm [shape: bf16[256,128], index: 6, kind: input, shape index: {}]
  %s7 = inlined_call_operand.hbm [shape: bf16[32,128], index: 7, kind: input, shape index: {}]
  %s8 = inlined_call_operand.hbm [shape: f32[1,128], index: 8, kind: input, shape index: {}]
  %s9 = inlined_call_operand.hbm [shape: bf16[128,128], index: 9, kind: input, shape index: {}]
  %s10 = inlined_call_operand.vmem [shape: bf16[256,128], index: 10, kind: input, shape index: {}]
  %s11 = inlined_call_operand.hbm [shape: bf16[32,128], index: 11, kind: input, shape index: {}]
  %s12 = inlined_call_operand.vmem [shape: f32[1,128], index: 12, kind: input, shape index: {}]
  %s13 = inlined_call_operand.hbm [shape: bf16[128,128], index: 13, kind: input, shape index: {}]
  %s14 = inlined_call_operand.hbm [shape: bf16[128,128], index: 14, kind: input, shape index: {}]
  %s15 = inlined_call_operand.hbm [shape: bf16[256,128], index: 15, kind: input, shape index: {}]
  %s16 = inlined_call_operand.hbm [shape: bf16[32,128], index: 16, kind: input, shape index: {}]
  %s17 = inlined_call_operand.vmem [shape: f32[1,128], index: 17, kind: input, shape index: {}]
  %s18 = inlined_call_operand.hbm [shape: bf16[128,128], index: 18, kind: input, shape index: {}]
  %s19 = inlined_call_operand.hbm [shape: bf16[128,128], index: 19, kind: input, shape index: {}]
  %s20 = inlined_call_operand.hbm [shape: bf16[128,128], index: 20, kind: input, shape index: {}]
  %s21 = inlined_call_operand.hbm [shape: bf16[256,128], index: 21, kind: input, shape index: {}]
  %s22 = inlined_call_operand.hbm [shape: bf16[32,128], index: 22, kind: input, shape index: {}]
  %s23 = inlined_call_operand.vmem [shape: f32[1,128], index: 23, kind: input, shape index: {}]
  %s24 = inlined_call_operand.hbm [shape: bf16[128,128], index: 24, kind: input, shape index: {}]
  %s25 = inlined_call_operand.vmem [shape: f32[1,128], index: 25, kind: input, shape index: {}]
  %s26 = inlined_call_operand.hbm [shape: bf16[256,128], index: 26, kind: output, shape index: {}]
  %s27 = sld [smem:[#allocation0]]
  $region209: #{tpu_custom_call.1} parent=0
    _
  %s29 = ssub.s32 1, %s27
  %s30 = scalar_select 0, %s29, %s27
  $region1: #{tpu_custom_call.1} parent=0
    #allocation2 [shape = 'u8[1024]{0}', space=vmem, size = 0x400, scoped, tag = 'input window, operand 2, single buffered']
    #allocation3 [shape = 's32[2]{0}', space=sflag, size = 0x8, scoped, tag = 'scoped memory for tpu_custom_call.1']
    #allocation4 [shape = 's32[2]{0}', space=sflag, size = 0x8, scoped, tag = 'scoped memory for tpu_custom_call.1']
    #allocation5 [shape = 'u8[16384]{0}', space=vmem, size = 0x4000, scoped, tag = 'input window, operand 4, single buffered']
    #allocation6 [shape = 's32[1]{0}', space=sflag, size = 0x4, scoped, tag = 'scoped memory for tpu_custom_call.1']
    #allocation7 [shape = 'u8[1024]{0}', space=vmem, size = 0x400, scoped, tag = 'input window, operand 5, single buffered']
    #allocation8 [shape = 'u8[65536]{0}', space=vmem, size = 0x10000, scoped, tag = 'input window, operand 6, single buffered']
    #allocation9 [shape = 's32[1]{0}', space=sflag, size = 0x4, scoped, tag = 'scoped memory for tpu_custom_call.1']
    #allocation10 [shape = 'u8[8192]{0}', space=vmem, size = 0x2000, scoped, tag = 'input window, operand 7, single buffered']
    #allocation11 [shape = 'u8[512]{0}', space=vmem, size = 0x400, scoped, tag = 'input window, operand 8, single buffered']
    #allocation12 [shape = 's32[1]{0}', space=sflag, size = 0x4, scoped, tag = 'scoped memory for tpu_custom_call.1']
    #allocation13 [shape = 'u8[32768]{0}', space=vmem, size = 0x8000, scoped, tag = 'input window, operand 9, single buffered']
    #allocation14 [shape = 'u8[8192]{0}', space=vmem, size = 0x2000, scoped, tag = 'input window, operand 11, single buffered']
    #allocation15 [shape = 's32[1]{0}', space=sflag, size = 0x4, scoped, tag = 'scoped memory for tpu_custom_call.1']
    #allocation16 [shape = 'u8[32768]{0}', space=vmem, size = 0x8000, scoped, tag = 'input window, operand 13, single buffered']
    #allocation17 [shape = 'u8[32768]{0}', space=vmem, size = 0x8000, scoped, tag = 'input window, operand 14, single buffered']
    #allocation18 [shape = 's32[1]{0}', space=sflag, size = 0x4, scoped, tag = 'scoped memory for tpu_custom_call.1']
    #allocation19 [shape = 'u8[65536]{0}', space=vmem, size = 0x10000, scoped, tag = 'input window, operand 15, single buffered']
    #allocation20 [shape = 'u8[8192]{0}', space=vmem, size = 0x2000, scoped, tag = 'input window, operand 16, single buffered']
    #allocation21 [shape = 's32[1]{0}', space=sflag, size = 0x4, scoped, tag = 'scoped memory for tpu_custom_call.1']
    #allocation22 [shape = 'u8[32768]{0}', space=vmem, size = 0x8000, scoped, tag = 'input window, operand 18, single buffered']
    #allocation23 [shape = 'u8[32768]{0}', space=vmem, size = 0x8000, scoped, tag = 'input window, operand 19, single buffered']
    #allocation24 [shape = 's32[1]{0}', space=sflag, size = 0x4, scoped, tag = 'scoped memory for tpu_custom_call.1']
    #allocation25 [shape = 'u8[32768]{0}', space=vmem, size = 0x8000, scoped, tag = 'input window, operand 20, single buffered']
    #allocation26 [shape = 'u8[65536]{0}', space=vmem, size = 0x10000, scoped, tag = 'input window, operand 21, single buffered']
    #allocation27 [shape = 's32[1]{0}', space=sflag, size = 0x4, scoped, tag = 'scoped memory for tpu_custom_call.1']
    #allocation28 [shape = 'u8[8192]{0}', space=vmem, size = 0x2000, scoped, tag = 'input window, operand 22, single buffered']
    #allocation29 [shape = 'u8[32768]{0}', space=vmem, size = 0x8000, scoped, tag = 'input window, operand 24, single buffered']
    #allocation30 [shape = 's32[1]{0}', space=sflag, size = 0x4, scoped, tag = 'scoped memory for tpu_custom_call.1']
    #allocation31 [shape = 'u8[32768]{0}', space=vmem, size = 0x8000, scoped, tag = 'output window, operand 0']
    %31 = vsyncpa [#allocation3], 0
    %32 = vsyncpa [#allocation6], 0
    %33 = vsyncpa [#allocation9], 0
    %34 = vsyncpa [#allocation12], 0
    %35 = vsyncpa [#allocation15], 0
    %36 = vsyncpa [#allocation18], 0
    %37 = vsyncpa [#allocation21], 0
    %38 = vsyncpa [#allocation24], 0
    %39 = vsyncpa [#allocation27], 0
    %40 = vsyncpa [#allocation30], 0
    %41 = vsyncpa [#allocation4], 0
    %s42 = scalar_lea.sflag [#allocation4], 1
    %43 = vsyncpa %s42, 0
    loop: start=0, step=1, limit=6
    $region2: #{tpu_custom_call.1} parent=1 // loop_pre_header
      _
    $region3: #{tpu_custom_call.1} parent=1 // loop_header
      %s45 = sphi 0, %s49
      %p46 = scmp.ge.s32.totalorder %s45, 6
      %s55 = sphi 0, %s57
      %s58 = sphi 0, %s55
      %s59 = sphi 0, %s58
      %s75 = sphi 0, %s59
      %s79 = sphi 0, %s79
      %s81 = sphi 0, %s79
      %s82 = sphi 0, %s81
      %s96 = sphi 0, %s82
      %s100 = sphi 0, %s100
      %s102 = sphi 0, %s100
      %s103 = sphi 0, %s102
      %s117 = sphi 0, %s103
      %s121 = sphi 0, %s121
      %s123 = sphi 0, %s121
      %s124 = sphi 0, %s123
      %s138 = sphi 0, %s124
      %s142 = sphi 0, %s142
      %s144 = sphi 0, %s142
      %s145 = sphi 0, %s144
      %s159 = sphi 0, %s145
      %s163 = sphi 0, %s163
      %s165 = sphi 0, %s163
      %s166 = sphi 0, %s165
      %s180 = sphi 0, %s166
      %s184 = sphi 0, %s184
      %s186 = sphi 0, %s184
      %s187 = sphi 0, %s186
      %s201 = sphi 0, %s187
      %s205 = sphi 0, %s205
      %s207 = sphi 0, %s205
      %s208 = sphi 0, %s207
      %s222 = sphi 0, %s208
      %s226 = sphi 0, %s226
      %s228 = sphi 0, %s226
      %s229 = sphi 0, %s228
      %s243 = sphi 0, %s229
      %s247 = sphi 0, %s247
      %s249 = sphi 0, %s247
      %s250 = sphi 0, %s249
      %s264 = sphi 0, %s250
      %s268 = sphi 0, %s268
      %s270 = sphi 0, %s268
      %s271 = sphi 0, %s270
      %s285 = sphi 0, %s271
      %s289 = sphi 0, %s289
      %s291 = sphi 0, %s289
      %s292 = sphi 0, %s291
      %s306 = sphi 0, %s292
      %s310 = sphi 0, %s310
      %s312 = sphi 0, %s310
      %s313 = sphi 0, %s312
      %s327 = sphi 0, %s313
      %s331 = sphi 0, %s331
      %s333 = sphi 0, %s331
      %s334 = sphi 0, %s333
      %s348 = sphi 0, %s334
      %s352 = sphi 0, %s352
      %s354 = sphi 0, %s352
      %s355 = sphi 0, %s354
      %s369 = sphi 0, %s355
      %s373 = sphi 0, %s373
      %s375 = sphi 0, %s373
      %s376 = sphi 0, %s375
      %s390 = sphi 0, %s376
      %s394 = sphi 0, %s394
      %s396 = sphi 0, %s394
      %s397 = sphi 0, %s396
      %s411 = sphi 0, %s397
      %s415 = sphi 0, %s415
      %s417 = sphi 0, %s415
      %s418 = sphi 0, %s417
      %s432 = sphi 0, %s418
      %s436 = sphi 0, %s436
      %s438 = sphi 0, %s436
      %s439 = sphi 0, %s438
      %s453 = sphi 0, %s439
      %s457 = sphi 0, %s457
      %s459 = sphi 0, %s457
      %s460 = sphi 0, %s459
      %s474 = sphi 0, %s460
      %s478 = sphi 0, %s478
      %s480 = sphi 0, %s478
      %s481 = sphi 0, %s480
      %s495 = sphi 0, %s481
      %s499 = sphi 0, %s499
      %s501 = sphi 0, %s499
      %s502 = sphi 0, %s501
      %s516 = sphi 0, %s502
      %s520 = sphi 0, %s520
      %s522 = sphi 0, %s520
      %s523 = sphi 0, %s522
      %s537 = sphi 0, %s523
      %s541 = sphi 0, %s541
      %s543 = sphi 0, %s541
      %s544 = sphi 0, %s543
      %s558 = sphi 0, %s544
      %s562 = sphi 0, %s562
      %s564 = sphi 0, %s562
      %s565 = sphi 0, %s564
      %s579 = sphi 0, %s565
      %s583 = sphi 0, %s583
      %s585 = sphi 0, %s583
      %s586 = sphi 0, %s585
      %s600 = sphi 0, %s586
      %s606 = sphi 0, %s608
      %s609 = sphi 0, %s606
      %s610 = sphi 0, %s609
      %s626 = sphi 0, %s610
    $region4: #{tpu_custom_call.1} parent=1 // loop_header_branch
      %48 = sbr.rel (%p46) target = $region8
    $region5: #{tpu_custom_call.1} parent=1 // loop_body
      %s50 = ssub.s32 %s45, 1
      %s51 = ssub.s32 %s45, 2
      %s52 = sadd.s32 %s45, 1
      %s53 = ssub.s32 %s45, %s52
      %p54 = scmp.eq.s32.totalorder %s53, 0
      %s56 = sadd.s32 %s55, 1
      %s57 = scalar_select %p54, %s55, %s56
      %p60 = pneg %p54
      %p61 = scmp.eq.s32.totalorder %s45, 3
      %p62 = por %p60, %p61
      %p63 = scmp.ne.s32.totalorder %s55, %s58
      %p64 = scmp.eq.s32.totalorder %s45, 0
      %p65 = por %p63, %p64
      %p66 = scmp.ne.s32.totalorder %s55, %s58
      %p67 = scmp.eq.s32.totalorder %s50, 3
      %p68 = por %p66, %p67
      %p69 = scmp.ne.s32.totalorder %s58, %s59
      %p70 = scmp.eq.s32.totalorder %s50, 0
      %p71 = por %p69, %p70
      %p72 = scmp.ne.s32.totalorder %s58, %s59
      %p73 = scmp.eq.s32.totalorder %s51, 3
      %p74 = por %p72, %p73
      %p76 = scmp.ne.s32.totalorder %s59, %s75
      %p77 = scmp.eq.s32.totalorder %s51, 0
      %p78 = por %p76, %p77
      %s80 = sadd.s32 %s79, 1
      %p83 = scmp.eq.s32.totalorder %s45, 3
      %p84 = scmp.ne.s32.totalorder %s79, %s81
      %p85 = scmp.eq.s32.totalorder %s45, 0
      %p86 = por %p84, %p85
      %p87 = scmp.ne.s32.totalorder %s79, %s81
      %p88 = scmp.eq.s32.totalorder %s50, 3
      %p89 = por %p87, %p88
      %p90 = scmp.ne.s32.totalorder %s81, %s82
      %p91 = scmp.eq.s32.totalorder %s50, 0
      %p92 = por %p90, %p91
      %p93 = scmp.ne.s32.totalorder %s81, %s82
      %p94 = scmp.eq.s32.totalorder %s51, 3
      %p95 = por %p93, %p94
      %p97 = scmp.ne.s32.totalorder %s82, %s96
      %p98 = scmp.eq.s32.totalorder %s51, 0
      %p99 = por %p97, %p98
      %s101 = sadd.s32 %s100, 1
      %p104 = scmp.eq.s32.totalorder %s45, 3
      %p105 = scmp.ne.s32.totalorder %s100, %s102
      %p106 = scmp.eq.s32.totalorder %s45, 0
      %p107 = por %p105, %p106
      %p108 = scmp.ne.s32.totalorder %s100, %s102
      %p109 = scmp.eq.s32.totalorder %s50, 3
      %p110 = por %p108, %p109
      %p111 = scmp.ne.s32.totalorder %s102, %s103
      %p112 = scmp.eq.s32.totalorder %s50, 0
      %p113 = por %p111, %p112
      %p114 = scmp.ne.s32.totalorder %s102, %s103
      %p115 = scmp.eq.s32.totalorder %s51, 3
      %p116 = por %p114, %p115
      %p118 = scmp.ne.s32.totalorder %s103, %s117
      %p119 = scmp.eq.s32.totalorder %s51, 0
      %p120 = por %p118, %p119
      %s122 = sadd.s32 %s121, 1
      %p125 = scmp.eq.s32.totalorder %s45, 3
      %p126 = scmp.ne.s32.totalorder %s121, %s123
      %p127 = scmp.eq.s32.totalorder %s45, 0
      %p128 = por %p126, %p127
      %p129 = scmp.ne.s32.totalorder %s121, %s123
      %p130 = scmp.eq.s32.totalorder %s50, 3
      %p131 = por %p129, %p130
      %p132 = scmp.ne.s32.totalorder %s123, %s124
      %p133 = scmp.eq.s32.totalorder %s50, 0
      %p134 = por %p132, %p133
      %p135 = scmp.ne.s32.totalorder %s123, %s124
      %p136 = scmp.eq.s32.totalorder %s51, 3
      %p137 = por %p135, %p136
      %p139 = scmp.ne.s32.totalorder %s124, %s138
      %p140 = scmp.eq.s32.totalorder %s51, 0
      %p141 = por %p139, %p140
      %s143 = sadd.s32 %s142, 1
      %p146 = scmp.eq.s32.totalorder %s45, 3
      %p147 = scmp.ne.s32.totalorder %s142, %s144
      %p148 = scmp.eq.s32.totalorder %s45, 0
      %p149 = por %p147, %p148
      %p150 = scmp.ne.s32.totalorder %s142, %s144
      %p151 = scmp.eq.s32.totalorder %s50, 3
      %p152 = por %p150, %p151
      %p153 = scmp.ne.s32.totalorder %s144, %s145
      %p154 = scmp.eq.s32.totalorder %s50, 0
      %p155 = por %p153, %p154
      %p156 = scmp.ne.s32.totalorder %s144, %s145
      %p157 = scmp.eq.s32.totalorder %s51, 3
      %p158 = por %p156, %p157
      %p160 = scmp.ne.s32.totalorder %s145, %s159
      %p161 = scmp.eq.s32.totalorder %s51, 0
      %p162 = por %p160, %p161
      %s164 = sadd.s32 %s163, 1
      %p167 = scmp.eq.s32.totalorder %s45, 3
      %p168 = scmp.ne.s32.totalorder %s163, %s165
      %p169 = scmp.eq.s32.totalorder %s45, 0
      %p170 = por %p168, %p169
      %p171 = scmp.ne.s32.totalorder %s163, %s165
      %p172 = scmp.eq.s32.totalorder %s50, 3
      %p173 = por %p171, %p172
      %p174 = scmp.ne.s32.totalorder %s165, %s166
      %p175 = scmp.eq.s32.totalorder %s50, 0
      %p176 = por %p174, %p175
      %p177 = scmp.ne.s32.totalorder %s165, %s166
      %p178 = scmp.eq.s32.totalorder %s51, 3
      %p179 = por %p177, %p178
      %p181 = scmp.ne.s32.totalorder %s166, %s180
      %p182 = scmp.eq.s32.totalorder %s51, 0
      %p183 = por %p181, %p182
      %s185 = sadd.s32 %s184, 1
      %p188 = scmp.eq.s32.totalorder %s45, 3
      %p189 = scmp.ne.s32.totalorder %s184, %s186
      %p190 = scmp.eq.s32.totalorder %s45, 0
      %p191 = por %p189, %p190
      %p192 = scmp.ne.s32.totalorder %s184, %s186
      %p193 = scmp.eq.s32.totalorder %s50, 3
      %p194 = por %p192, %p193
      %p195 = scmp.ne.s32.totalorder %s186, %s187
      %p196 = scmp.eq.s32.totalorder %s50, 0
      %p197 = por %p195, %p196
      %p198 = scmp.ne.s32.totalorder %s186, %s187
      %p199 = scmp.eq.s32.totalorder %s51, 3
      %p200 = por %p198, %p199
      %p202 = scmp.ne.s32.totalorder %s187, %s201
      %p203 = scmp.eq.s32.totalorder %s51, 0
      %p204 = por %p202, %p203
      %s206 = sadd.s32 %s205, 1
      %p209 = scmp.eq.s32.totalorder %s45, 3
      %p210 = scmp.ne.s32.totalorder %s205, %s207
      %p211 = scmp.eq.s32.totalorder %s45, 0
      %p212 = por %p210, %p211
      %p213 = scmp.ne.s32.totalorder %s205, %s207
      %p214 = scmp.eq.s32.totalorder %s50, 3
      %p215 = por %p213, %p214
      %p216 = scmp.ne.s32.totalorder %s207, %s208
      %p217 = scmp.eq.s32.totalorder %s50, 0
      %p218 = por %p216, %p217
      %p219 = scmp.ne.s32.totalorder %s207, %s208
      %p220 = scmp.eq.s32.totalorder %s51, 3
      %p221 = por %p219, %p220
      %p223 = scmp.ne.s32.totalorder %s208, %s222
      %p224 = scmp.eq.s32.totalorder %s51, 0
      %p225 = por %p223, %p224
      %s227 = sadd.s32 %s226, 1
      %p230 = scmp.eq.s32.totalorder %s45, 3
      %p231 = scmp.ne.s32.totalorder %s226, %s228
      %p232 = scmp.eq.s32.totalorder %s45, 0
      %p233 = por %p231, %p232
      %p234 = scmp.ne.s32.totalorder %s226, %s228
      %p235 = scmp.eq.s32.totalorder %s50, 3
      %p236 = por %p234, %p235
      %p237 = scmp.ne.s32.totalorder %s228, %s229
      %p238 = scmp.eq.s32.totalorder %s50, 0
      %p239 = por %p237, %p238
      %p240 = scmp.ne.s32.totalorder %s228, %s229
      %p241 = scmp.eq.s32.totalorder %s51, 3
      %p242 = por %p240, %p241
      %p244 = scmp.ne.s32.totalorder %s229, %s243
      %p245 = scmp.eq.s32.totalorder %s51, 0
      %p246 = por %p244, %p245
      %s248 = sadd.s32 %s247, 1
      %p251 = scmp.eq.s32.totalorder %s45, 3
      %p252 = scmp.ne.s32.totalorder %s247, %s249
      %p253 = scmp.eq.s32.totalorder %s45, 0
      %p254 = por %p252, %p253
      %p255 = scmp.ne.s32.totalorder %s247, %s249
      %p256 = scmp.eq.s32.totalorder %s50, 3
      %p257 = por %p255, %p256
      %p258 = scmp.ne.s32.totalorder %s249, %s250
      %p259 = scmp.eq.s32.totalorder %s50, 0
      %p260 = por %p258, %p259
      %p261 = scmp.ne.s32.totalorder %s249, %s250
      %p262 = scmp.eq.s32.totalorder %s51, 3
      %p263 = por %p261, %p262
      %p265 = scmp.ne.s32.totalorder %s250, %s264
      %p266 = scmp.eq.s32.totalorder %s51, 0
      %p267 = por %p265, %p266
      %s269 = sadd.s32 %s268, 1
      %p272 = scmp.eq.s32.totalorder %s45, 3
      %p273 = scmp.ne.s32.totalorder %s268, %s270
      %p274 = scmp.eq.s32.totalorder %s45, 0
      %p275 = por %p273, %p274
      %p276 = scmp.ne.s32.totalorder %s268, %s270
      %p277 = scmp.eq.s32.totalorder %s50, 3
      %p278 = por %p276, %p277
      %p279 = scmp.ne.s32.totalorder %s270, %s271
      %p280 = scmp.eq.s32.totalorder %s50, 0
      %p281 = por %p279, %p280
      %p282 = scmp.ne.s32.totalorder %s270, %s271
      %p283 = scmp.eq.s32.totalorder %s51, 3
      %p284 = por %p282, %p283
      %p286 = scmp.ne.s32.totalorder %s271, %s285
      %p287 = scmp.eq.s32.totalorder %s51, 0
      %p288 = por %p286, %p287
      %s290 = sadd.s32 %s289, 1
      %p293 = scmp.eq.s32.totalorder %s45, 3
      %p294 = scmp.ne.s32.totalorder %s289, %s291
      %p295 = scmp.eq.s32.totalorder %s45, 0
      %p296 = por %p294, %p295
      %p297 = scmp.ne.s32.totalorder %s289, %s291
      %p298 = scmp.eq.s32.totalorder %s50, 3
      %p299 = por %p297, %p298
      %p300 = scmp.ne.s32.totalorder %s291, %s292
      %p301 = scmp.eq.s32.totalorder %s50, 0
      %p302 = por %p300, %p301
      %p303 = scmp.ne.s32.totalorder %s291, %s292
      %p304 = scmp.eq.s32.totalorder %s51, 3
      %p305 = por %p303, %p304
      %p307 = scmp.ne.s32.totalorder %s292, %s306
      %p308 = scmp.eq.s32.totalorder %s51, 0
      %p309 = por %p307, %p308
      %s311 = sadd.s32 %s310, 1
      %p314 = scmp.eq.s32.totalorder %s45, 3
      %p315 = scmp.ne.s32.totalorder %s310, %s312
      %p316 = scmp.eq.s32.totalorder %s45, 0
      %p317 = por %p315, %p316
      %p318 = scmp.ne.s32.totalorder %s310, %s312
      %p319 = scmp.eq.s32.totalorder %s50, 3
      %p320 = por %p318, %p319
      %p321 = scmp.ne.s32.totalorder %s312, %s313
      %p322 = scmp.eq.s32.totalorder %s50, 0
      %p323 = por %p321, %p322
      %p324 = scmp.ne.s32.totalorder %s312, %s313
      %p325 = scmp.eq.s32.totalorder %s51, 3
      %p326 = por %p324, %p325
      %p328 = scmp.ne.s32.totalorder %s313, %s327
      %p329 = scmp.eq.s32.totalorder %s51, 0
      %p330 = por %p328, %p329
      %s332 = sadd.s32 %s331, 1
      %p335 = scmp.eq.s32.totalorder %s45, 3
      %p336 = scmp.ne.s32.totalorder %s331, %s333
      %p337 = scmp.eq.s32.totalorder %s45, 0
      %p338 = por %p336, %p337
      %p339 = scmp.ne.s32.totalorder %s331, %s333
      %p340 = scmp.eq.s32.totalorder %s50, 3
      %p341 = por %p339, %p340
      %p342 = scmp.ne.s32.totalorder %s333, %s334
      %p343 = scmp.eq.s32.totalorder %s50, 0
      %p344 = por %p342, %p343
      %p345 = scmp.ne.s32.totalorder %s333, %s334
      %p346 = scmp.eq.s32.totalorder %s51, 3
      %p347 = por %p345, %p346
      %p349 = scmp.ne.s32.totalorder %s334, %s348
      %p350 = scmp.eq.s32.totalorder %s51, 0
      %p351 = por %p349, %p350
      %s353 = sadd.s32 %s352, 1
      %p356 = scmp.eq.s32.totalorder %s45, 3
      %p357 = scmp.ne.s32.totalorder %s352, %s354
      %p358 = scmp.eq.s32.totalorder %s45, 0
      %p359 = por %p357, %p358
      %p360 = scmp.ne.s32.totalorder %s352, %s354
      %p361 = scmp.eq.s32.totalorder %s50, 3
      %p362 = por %p360, %p361
      %p363 = scmp.ne.s32.totalorder %s354, %s355
      %p364 = scmp.eq.s32.totalorder %s50, 0
      %p365 = por %p363, %p364
      %p366 = scmp.ne.s32.totalorder %s354, %s355
      %p367 = scmp.eq.s32.totalorder %s51, 3
      %p368 = por %p366, %p367
      %p370 = scmp.ne.s32.totalorder %s355, %s369
      %p371 = scmp.eq.s32.totalorder %s51, 0
      %p372 = por %p370, %p371
      %s374 = sadd.s32 %s373, 1
      %p377 = scmp.eq.s32.totalorder %s45, 3
      %p378 = scmp.ne.s32.totalorder %s373, %s375
      %p379 = scmp.eq.s32.totalorder %s45, 0
      %p380 = por %p378, %p379
      %p381 = scmp.ne.s32.totalorder %s373, %s375
      %p382 = scmp.eq.s32.totalorder %s50, 3
      %p383 = por %p381, %p382
      %p384 = scmp.ne.s32.totalorder %s375, %s376
      %p385 = scmp.eq.s32.totalorder %s50, 0
      %p386 = por %p384, %p385
      %p387 = scmp.ne.s32.totalorder %s375, %s376
      %p388 = scmp.eq.s32.totalorder %s51, 3
      %p389 = por %p387, %p388
      %p391 = scmp.ne.s32.totalorder %s376, %s390
      %p392 = scmp.eq.s32.totalorder %s51, 0
      %p393 = por %p391, %p392
      %s395 = sadd.s32 %s394, 1
      %p398 = scmp.eq.s32.totalorder %s45, 3
      %p399 = scmp.ne.s32.totalorder %s394, %s396
      %p400 = scmp.eq.s32.totalorder %s45, 0
      %p401 = por %p399, %p400
      %p402 = scmp.ne.s32.totalorder %s394, %s396
      %p403 = scmp.eq.s32.totalorder %s50, 3
      %p404 = por %p402, %p403
      %p405 = scmp.ne.s32.totalorder %s396, %s397
      %p406 = scmp.eq.s32.totalorder %s50, 0
      %p407 = por %p405, %p406
      %p408 = scmp.ne.s32.totalorder %s396, %s397
      %p409 = scmp.eq.s32.totalorder %s51, 3
      %p410 = por %p408, %p409
      %p412 = scmp.ne.s32.totalorder %s397, %s411
      %p413 = scmp.eq.s32.totalorder %s51, 0
      %p414 = por %p412, %p413
      %s416 = sadd.s32 %s415, 1
      %p419 = scmp.eq.s32.totalorder %s45, 3
      %p420 = scmp.ne.s32.totalorder %s415, %s417
      %p421 = scmp.eq.s32.totalorder %s45, 0
      %p422 = por %p420, %p421
      %p423 = scmp.ne.s32.totalorder %s415, %s417
      %p424 = scmp.eq.s32.totalorder %s50, 3
      %p425 = por %p423, %p424
      %p426 = scmp.ne.s32.totalorder %s417, %s418
      %p427 = scmp.eq.s32.totalorder %s50, 0
      %p428 = por %p426, %p427
      %p429 = scmp.ne.s32.totalorder %s417, %s418
      %p430 = scmp.eq.s32.totalorder %s51, 3
      %p431 = por %p429, %p430
      %p433 = scmp.ne.s32.totalorder %s418, %s432
      %p434 = scmp.eq.s32.totalorder %s51, 0
      %p435 = por %p433, %p434
      %s437 = sadd.s32 %s436, 1
      %p440 = scmp.eq.s32.totalorder %s45, 3
      %p441 = scmp.ne.s32.totalorder %s436, %s438
      %p442 = scmp.eq.s32.totalorder %s45, 0
      %p443 = por %p441, %p442
      %p444 = scmp.ne.s32.totalorder %s436, %s438
      %p445 = scmp.eq.s32.totalorder %s50, 3
      %p446 = por %p444, %p445
      %p447 = scmp.ne.s32.totalorder %s438, %s439
      %p448 = scmp.eq.s32.totalorder %s50, 0
      %p449 = por %p447, %p448
      %p450 = scmp.ne.s32.totalorder %s438, %s439
      %p451 = scmp.eq.s32.totalorder %s51, 3
      %p452 = por %p450, %p451
      %p454 = scmp.ne.s32.totalorder %s439, %s453
      %p455 = scmp.eq.s32.totalorder %s51, 0
      %p456 = por %p454, %p455
      %s458 = sadd.s32 %s457, 1
      %p461 = scmp.eq.s32.totalorder %s45, 3
      %p462 = scmp.ne.s32.totalorder %s457, %s459
      %p463 = scmp.eq.s32.totalorder %s45, 0
      %p464 = por %p462, %p463
      %p465 = scmp.ne.s32.totalorder %s457, %s459
      %p466 = scmp.eq.s32.totalorder %s50, 3
      %p467 = por %p465, %p466
      %p468 = scmp.ne.s32.totalorder %s459, %s460
      %p469 = scmp.eq.s32.totalorder %s50, 0
      %p470 = por %p468, %p469
      %p471 = scmp.ne.s32.totalorder %s459, %s460
      %p472 = scmp.eq.s32.totalorder %s51, 3
      %p473 = por %p471, %p472
      %p475 = scmp.ne.s32.totalorder %s460, %s474
      %p476 = scmp.eq.s32.totalorder %s51, 0
      %p477 = por %p475, %p476
      %s479 = sadd.s32 %s478, 1
      %p482 = scmp.eq.s32.totalorder %s45, 3
      %p483 = scmp.ne.s32.totalorder %s478, %s480
      %p484 = scmp.eq.s32.totalorder %s45, 0
      %p485 = por %p483, %p484
      %p486 = scmp.ne.s32.totalorder %s478, %s480
      %p487 = scmp.eq.s32.totalorder %s50, 3
      %p488 = por %p486, %p487
      %p489 = scmp.ne.s32.totalorder %s480, %s481
      %p490 = scmp.eq.s32.totalorder %s50, 0
      %p491 = por %p489, %p490
      %p492 = scmp.ne.s32.totalorder %s480, %s481
      %p493 = scmp.eq.s32.totalorder %s51, 3
      %p494 = por %p492, %p493
      %p496 = scmp.ne.s32.totalorder %s481, %s495
      %p497 = scmp.eq.s32.totalorder %s51, 0
      %p498 = por %p496, %p497
      %s500 = sadd.s32 %s499, 1
      %p503 = scmp.eq.s32.totalorder %s45, 3
      %p504 = scmp.ne.s32.totalorder %s499, %s501
      %p505 = scmp.eq.s32.totalorder %s45, 0
      %p506 = por %p504, %p505
      %p507 = scmp.ne.s32.totalorder %s499, %s501
      %p508 = scmp.eq.s32.totalorder %s50, 3
      %p509 = por %p507, %p508
      %p510 = scmp.ne.s32.totalorder %s501, %s502
      %p511 = scmp.eq.s32.totalorder %s50, 0
      %p512 = por %p510, %p511
      %p513 = scmp.ne.s32.totalorder %s501, %s502
      %p514 = scmp.eq.s32.totalorder %s51, 3
      %p515 = por %p513, %p514
      %p517 = scmp.ne.s32.totalorder %s502, %s516
      %p518 = scmp.eq.s32.totalorder %s51, 0
      %p519 = por %p517, %p518
      %s521 = sadd.s32 %s520, 1
      %p524 = scmp.eq.s32.totalorder %s45, 3
      %p525 = scmp.ne.s32.totalorder %s520, %s522
      %p526 = scmp.eq.s32.totalorder %s45, 0
      %p527 = por %p525, %p526
      %p528 = scmp.ne.s32.totalorder %s520, %s522
      %p529 = scmp.eq.s32.totalorder %s50, 3
      %p530 = por %p528, %p529
      %p531 = scmp.ne.s32.totalorder %s522, %s523
      %p532 = scmp.eq.s32.totalorder %s50, 0
      %p533 = por %p531, %p532
      %p534 = scmp.ne.s32.totalorder %s522, %s523
      %p535 = scmp.eq.s32.totalorder %s51, 3
      %p536 = por %p534, %p535
      %p538 = scmp.ne.s32.totalorder %s523, %s537
      %p539 = scmp.eq.s32.totalorder %s51, 0
      %p540 = por %p538, %p539
      %s542 = sadd.s32 %s541, 1
      %p545 = scmp.eq.s32.totalorder %s45, 3
      %p546 = scmp.ne.s32.totalorder %s541, %s543
      %p547 = scmp.eq.s32.totalorder %s45, 0
      %p548 = por %p546, %p547
      %p549 = scmp.ne.s32.totalorder %s541, %s543
      %p550 = scmp.eq.s32.totalorder %s50, 3
      %p551 = por %p549, %p550
      %p552 = scmp.ne.s32.totalorder %s543, %s544
      %p553 = scmp.eq.s32.totalorder %s50, 0
      %p554 = por %p552, %p553
      %p555 = scmp.ne.s32.totalorder %s543, %s544
      %p556 = scmp.eq.s32.totalorder %s51, 3
      %p557 = por %p555, %p556
      %p559 = scmp.ne.s32.totalorder %s544, %s558
      %p560 = scmp.eq.s32.totalorder %s51, 0
      %p561 = por %p559, %p560
      %s563 = sadd.s32 %s562, 1
      %p566 = scmp.eq.s32.totalorder %s45, 3
      %p567 = scmp.ne.s32.totalorder %s562, %s564
      %p568 = scmp.eq.s32.totalorder %s45, 0
      %p569 = por %p567, %p568
      %p570 = scmp.ne.s32.totalorder %s562, %s564
      %p571 = scmp.eq.s32.totalorder %s50, 3
      %p572 = por %p570, %p571
      %p573 = scmp.ne.s32.totalorder %s564, %s565
      %p574 = scmp.eq.s32.totalorder %s50, 0
      %p575 = por %p573, %p574
      %p576 = scmp.ne.s32.totalorder %s564, %s565
      %p577 = scmp.eq.s32.totalorder %s51, 3
      %p578 = por %p576, %p577
      %p580 = scmp.ne.s32.totalorder %s565, %s579
      %p581 = scmp.eq.s32.totalorder %s51, 0
      %p582 = por %p580, %p581
      %s584 = sadd.s32 %s583, 1
      %p587 = scmp.eq.s32.totalorder %s45, 3
      %p588 = scmp.ne.s32.totalorder %s583, %s585
      %p589 = scmp.eq.s32.totalorder %s45, 0
      %p590 = por %p588, %p589
      %p591 = scmp.ne.s32.totalorder %s583, %s585
      %p592 = scmp.eq.s32.totalorder %s50, 3
      %p593 = por %p591, %p592
      %p594 = scmp.ne.s32.totalorder %s585, %s586
      %p595 = scmp.eq.s32.totalorder %s50, 0
      %p596 = por %p594, %p595
      %p597 = scmp.ne.s32.totalorder %s585, %s586
      %p598 = scmp.eq.s32.totalorder %s51, 3
      %p599 = por %p597, %p598
      %p601 = scmp.ne.s32.totalorder %s586, %s600
      %p602 = scmp.eq.s32.totalorder %s51, 0
      %p603 = por %p601, %p602
      %s604 = ssub.s32 %s45, %s52
      %p605 = scmp.eq.s32.totalorder %s604, 0
      %s607 = sadd.s32 %s606, 1
      %s608 = scalar_select %p605, %s606, %s607
      %p611 = pneg %p605
      %p612 = scmp.eq.s32.totalorder %s45, 3
      %p613 = por %p611, %p612
      %p614 = scmp.ne.s32.totalorder %s606, %s609
      %p615 = scmp.eq.s32.totalorder %s45, 0
      %p616 = por %p614, %p615
      %p617 = scmp.ne.s32.totalorder %s606, %s609
      %p618 = scmp.eq.s32.totalorder %s50, 3
      %p619 = por %p617, %p618
      %p620 = scmp.ne.s32.totalorder %s609, %s610
      %p621 = scmp.eq.s32.totalorder %s50, 0
      %p622 = por %p620, %p621
      %p623 = scmp.ne.s32.totalorder %s609, %s610
      %p624 = scmp.eq.s32.totalorder %s51, 3
      %p625 = por %p623, %p624
      %p627 = scmp.ne.s32.totalorder %s610, %s626
      %p628 = scmp.eq.s32.totalorder %s51, 0
      %p629 = por %p627, %p628
      %p630 = scmp.le.s32.totalorder 1, %s45
      %p631 = scmp.lt.s32.totalorder %s45, 5
      %p632 = pnand %p630, %p631
      %p633 = pneg %p632
      // Predicated region
      $region9: #{tpu_custom_call.1} parent=5 // pred_check
        _
      $region10: #{tpu_custom_call.1} parent=5 // pred_check_branch
        %635 = sbr.rel (%p632) target = $region12
      $region11: #{tpu_custom_call.1} parent=5 // pred_region
        %s636 = ssub.s32 %s45, 1
        // Predicated region
        $region13: #{tpu_custom_call.1} parent=11 // pred_check
          %p637 = pneg %p92
        $region14: #{tpu_custom_call.1} parent=11 // pred_check_branch
          %639 = sbr.rel (%p637) target = $region16
        $region15: #{tpu_custom_call.1} parent=11 // pred_region
          _
        $region16: #{tpu_custom_call.1} parent=11 // pred_fallthru
          _
        // Predicated region
        $region17: #{tpu_custom_call.1} parent=11 // pred_check
          %p640 = pneg %p113
        $region18: #{tpu_custom_call.1} parent=11 // pred_check_branch
          %642 = sbr.rel (%p640) target = $region20
        $region19: #{tpu_custom_call.1} parent=11 // pred_region
          %644 = vsyncadd [#allocation3], 0
          %s646 = sshll.u32 %s2, 4
          %s647 = int_to_ptr.hbm [resolvable:$true] %s646
          %s648 = sshll.u32 [#allocation2], 4
          %s649 = int_to_ptr.vmem [resolvable:$true] %s648
          %651 = dma.hbm_to_vmem [thread:$0]  %s647, 32, %s649, [#allocation3]
        $region20: #{tpu_custom_call.1} parent=11 // pred_fallthru
          _
        // Predicated region
        $region21: #{tpu_custom_call.1} parent=11 // pred_check
          %p652 = pneg %p134
        $region22: #{tpu_custom_call.1} parent=11 // pred_check_branch
          %654 = sbr.rel (%p652) target = $region24
        $region23: #{tpu_custom_call.1} parent=11 // pred_region
          _
        $region24: #{tpu_custom_call.1} parent=11 // pred_fallthru
          _
        // Predicated region
        $region25: #{tpu_custom_call.1} parent=11 // pred_check
          %p655 = pneg %p155
        $region26: #{tpu_custom_call.1} parent=11 // pred_check_branch
          %657 = sbr.rel (%p655) target = $region28
        $region27: #{tpu_custom_call.1} parent=11 // pred_region
          %659 = vsyncadd [#allocation6], 0
          %s660 = sshll.u32 %s4, 4
          %s661 = int_to_ptr.hbm [resolvable:$true] %s660
          %s662 = sshll.u32 [#allocation5], 4
          %s663 = int_to_ptr.vmem [resolvable:$true] %s662
          %668 = dma.hbm_to_vmem [thread:$0]  %s661, 512, %s663, [#allocation6], 128, 128, 8
        $region28: #{tpu_custom_call.1} parent=11 // pred_fallthru
          _
        // Predicated region
        $region29: #{tpu_custom_call.1} parent=11 // pred_check
          %p669 = pneg %p176
        $region30: #{tpu_custom_call.1} parent=11 // pred_check_branch
          %671 = sbr.rel (%p669) target = $region32
        $region31: #{tpu_custom_call.1} parent=11 // pred_region
          %673 = vsyncadd [#allocation6], 0
          %s675 = sshll.u32 %s5, 4
          %s676 = int_to_ptr.hbm [resolvable:$true] %s675
          %s677 = sshll.u32 [#allocation7], 4
          %s678 = int_to_ptr.vmem [resolvable:$true] %s677
          %680 = dma.hbm_to_vmem [thread:$0]  %s676, 32, %s678, [#allocation6]
        $region32: #{tpu_custom_call.1} parent=11 // pred_fallthru
          _
        // Predicated region
        $region33: #{tpu_custom_call.1} parent=11 // pred_check
          %p681 = pneg %p197
        $region34: #{tpu_custom_call.1} parent=11 // pred_check_branch
          %683 = sbr.rel (%p681) target = $region36
        $region35: #{tpu_custom_call.1} parent=11 // pred_region
          %685 = vsyncadd [#allocation9], 0
          %s686 = sshll.u32 %s6, 4
          %s687 = int_to_ptr.hbm [resolvable:$true] %s686
          %s688 = sshll.u32 [#allocation8], 4
          %s689 = int_to_ptr.vmem [resolvable:$true] %s688
          %694 = dma.hbm_to_vmem [thread:$0]  %s687, 2048, %s689, [#allocation9], 64, 64, 4
        $region36: #{tpu_custom_call.1} parent=11 // pred_fallthru
          _
        // Predicated region
        $region37: #{tpu_custom_call.1} parent=11 // pred_check
          %p695 = pneg %p218
        $region38: #{tpu_custom_call.1} parent=11 // pred_check_branch
          %697 = sbr.rel (%p695) target = $region40
        $region39: #{tpu_custom_call.1} parent=11 // pred_region
          %699 = vsyncadd [#allocation9], 0
          %s700 = sshll.u32 %s7, 4
          %s701 = int_to_ptr.hbm [resolvable:$true] %s700
          %s702 = sshll.u32 [#allocation10], 4
          %s703 = int_to_ptr.vmem [resolvable:$true] %s702
          %708 = dma.hbm_to_vmem [thread:$0]  %s701, 256, %s703, [#allocation9], 64, 64, 4
        $region40: #{tpu_custom_call.1} parent=11 // pred_fallthru
          _
        // Predicated region
        $region41: #{tpu_custom_call.1} parent=11 // pred_check
          %p709 = pneg %p239
        $region42: #{tpu_custom_call.1} parent=11 // pred_check_branch
          %711 = sbr.rel (%p709) target = $region44
        $region43: #{tpu_custom_call.1} parent=11 // pred_region
          %713 = vsyncadd [#allocation12], 0
          %s715 = sshll.u32 %s8, 4
          %s716 = int_to_ptr.hbm [resolvable:$true] %s715
          %s717 = sshll.u32 [#allocation11], 4
          %s718 = int_to_ptr.vmem [resolvable:$true] %s717
          %720 = dma.hbm_to_vmem [thread:$0]  %s716, 16, %s718, [#allocation12]
        $region44: #{tpu_custom_call.1} parent=11 // pred_fallthru
          _
        // Predicated region
        $region45: #{tpu_custom_call.1} parent=11 // pred_check
          %p721 = pneg %p260
        $region46: #{tpu_custom_call.1} parent=11 // pred_check_branch
          %723 = sbr.rel (%p721) target = $region48
        $region47: #{tpu_custom_call.1} parent=11 // pred_region
          %725 = vsyncadd [#allocation12], 0
          %s726 = sshll.u32 %s9, 4
          %s727 = int_to_ptr.hbm [resolvable:$true] %s726
          %s728 = sshll.u32 [#allocation13], 4
          %s729 = int_to_ptr.vmem [resolvable:$true] %s728
          %734 = dma.hbm_to_vmem [thread:$0]  %s727, 1024, %s729, [#allocation12], 64, 64, 4
        $region48: #{tpu_custom_call.1} parent=11 // pred_fallthru
          _
        // Predicated region
        $region49: #{tpu_custom_call.1} parent=11 // pred_check
          %p735 = pneg %p281
        $region50: #{tpu_custom_call.1} parent=11 // pred_check_branch
          %737 = sbr.rel (%p735) target = $region52
        $region51: #{tpu_custom_call.1} parent=11 // pred_region
          _
        $region52: #{tpu_custom_call.1} parent=11 // pred_fallthru
          _
        // Predicated region
        $region53: #{tpu_custom_call.1} parent=11 // pred_check
          %p738 = pneg %p302
        $region54: #{tpu_custom_call.1} parent=11 // pred_check_branch
          %740 = sbr.rel (%p738) target = $region56
        $region55: #{tpu_custom_call.1} parent=11 // pred_region
          %742 = vsyncadd [#allocation15], 0
          %s743 = sshll.u32 %s11, 4
          %s744 = int_to_ptr.hbm [resolvable:$true] %s743
          %s745 = sshll.u32 [#allocation14], 4
          %s746 = int_to_ptr.vmem [resolvable:$true] %s745
          %751 = dma.hbm_to_vmem [thread:$0]  %s744, 256, %s746, [#allocation15], 64, 64, 4
        $region56: #{tpu_custom_call.1} parent=11 // pred_fallthru
          _
        // Predicated region
        $region57: #{tpu_custom_call.1} parent=11 // pred_check
          %p752 = pneg %p323
        $region58: #{tpu_custom_call.1} parent=11 // pred_check_branch
          %754 = sbr.rel (%p752) target = $region60
        $region59: #{tpu_custom_call.1} parent=11 // pred_region
          _
        $region60: #{tpu_custom_call.1} parent=11 // pred_fallthru
          _
        // Predicated region
        $region61: #{tpu_custom_call.1} parent=11 // pred_check
          %p755 = pneg %p344
        $region62: #{tpu_custom_call.1} parent=11 // pred_check_branch
          %757 = sbr.rel (%p755) target = $region64
        $region63: #{tpu_custom_call.1} parent=11 // pred_region
          %759 = vsyncadd [#allocation15], 0
          %s760 = sshll.u32 %s13, 4
          %s761 = int_to_ptr.hbm [resolvable:$true] %s760
          %s762 = sshll.u32 [#allocation16], 4
          %s763 = int_to_ptr.vmem [resolvable:$true] %s762
          %768 = dma.hbm_to_vmem [thread:$0]  %s761, 1024, %s763, [#allocation15], 64, 64, 4
        $region64: #{tpu_custom_call.1} parent=11 // pred_fallthru
          _
        // Predicated region
        $region65: #{tpu_custom_call.1} parent=11 // pred_check
          %p769 = pneg %p365
        $region66: #{tpu_custom_call.1} parent=11 // pred_check_branch
          %771 = sbr.rel (%p769) target = $region68
        $region67: #{tpu_custom_call.1} parent=11 // pred_region
          %773 = vsyncadd [#allocation18], 0
          %s774 = sshll.u32 %s14, 4
          %s775 = int_to_ptr.hbm [resolvable:$true] %s774
          %s776 = sshll.u32 [#allocation17], 4
          %s777 = int_to_ptr.vmem [resolvable:$true] %s776
          %782 = dma.hbm_to_vmem [thread:$0]  %s775, 1024, %s777, [#allocation18], 64, 64, 4
        $region68: #{tpu_custom_call.1} parent=11 // pred_fallthru
          _
        // Predicated region
        $region69: #{tpu_custom_call.1} parent=11 // pred_check
          %p783 = pneg %p386
        $region70: #{tpu_custom_call.1} parent=11 // pred_check_branch
          %785 = sbr.rel (%p783) target = $region72
        $region71: #{tpu_custom_call.1} parent=11 // pred_region
          %787 = vsyncadd [#allocation18], 0
          %s788 = sshll.u32 %s15, 4
          %s789 = int_to_ptr.hbm [resolvable:$true] %s788
          %s790 = sshll.u32 [#allocation19], 4
          %s791 = int_to_ptr.vmem [resolvable:$true] %s790
          %796 = dma.hbm_to_vmem [thread:$0]  %s789, 2048, %s791, [#allocation18], 64, 64, 4
        $region72: #{tpu_custom_call.1} parent=11 // pred_fallthru
          _
        // Predicated region
        $region73: #{tpu_custom_call.1} parent=11 // pred_check
          %p797 = pneg %p407
        $region74: #{tpu_custom_call.1} parent=11 // pred_check_branch
          %799 = sbr.rel (%p797) target = $region76
        $region75: #{tpu_custom_call.1} parent=11 // pred_region
          %801 = vsyncadd [#allocation21], 0
          %s802 = sshll.u32 %s16, 4
          %s803 = int_to_ptr.hbm [resolvable:$true] %s802
          %s804 = sshll.u32 [#allocation20], 4
          %s805 = int_to_ptr.vmem [resolvable:$true] %s804
          %810 = dma.hbm_to_vmem [thread:$0]  %s803, 256, %s805, [#allocation21], 64, 64, 4
        $region76: #{tpu_custom_call.1} parent=11 // pred_fallthru
          _
        // Predicated region
        $region77: #{tpu_custom_call.1} parent=11 // pred_check
          %p811 = pneg %p428
        $region78: #{tpu_custom_call.1} parent=11 // pred_check_branch
          %813 = sbr.rel (%p811) target = $region80
        $region79: #{tpu_custom_call.1} parent=11 // pred_region
          _
        $region80: #{tpu_custom_call.1} parent=11 // pred_fallthru
          _
        // Predicated region
        $region81: #{tpu_custom_call.1} parent=11 // pred_check
          %p814 = pneg %p449
        $region82: #{tpu_custom_call.1} parent=11 // pred_check_branch
          %816 = sbr.rel (%p814) target = $region84
        $region83: #{tpu_custom_call.1} parent=11 // pred_region
          %818 = vsyncadd [#allocation21], 0
          %s819 = sshll.u32 %s18, 4
          %s820 = int_to_ptr.hbm [resolvable:$true] %s819
          %s821 = sshll.u32 [#allocation22], 4
          %s822 = int_to_ptr.vmem [resolvable:$true] %s821
          %827 = dma.hbm_to_vmem [thread:$0]  %s820, 1024, %s822, [#allocation21], 64, 64, 4
        $region84: #{tpu_custom_call.1} parent=11 // pred_fallthru
          _
        // Predicated region
        $region85: #{tpu_custom_call.1} parent=11 // pred_check
          %p828 = pneg %p470
        $region86: #{tpu_custom_call.1} parent=11 // pred_check_branch
          %830 = sbr.rel (%p828) target = $region88
        $region87: #{tpu_custom_call.1} parent=11 // pred_region
          %832 = vsyncadd [#allocation24], 0
          %s833 = sshll.u32 %s19, 4
          %s834 = int_to_ptr.hbm [resolvable:$true] %s833
          %s835 = sshll.u32 [#allocation23], 4
          %s836 = int_to_ptr.vmem [resolvable:$true] %s835
          %841 = dma.hbm_to_vmem [thread:$0]  %s834, 1024, %s836, [#allocation24], 64, 64, 4
        $region88: #{tpu_custom_call.1} parent=11 // pred_fallthru
          _
        // Predicated region
        $region89: #{tpu_custom_call.1} parent=11 // pred_check
          %p842 = pneg %p491
        $region90: #{tpu_custom_call.1} parent=11 // pred_check_branch
          %844 = sbr.rel (%p842) target = $region92
        $region91: #{tpu_custom_call.1} parent=11 // pred_region
          %846 = vsyncadd [#allocation24], 0
          %s847 = sshll.u32 %s20, 4
          %s848 = int_to_ptr.hbm [resolvable:$true] %s847
          %s849 = sshll.u32 [#allocation25], 4
          %s850 = int_to_ptr.vmem [resolvable:$true] %s849
          %855 = dma.hbm_to_vmem [thread:$0]  %s848, 1024, %s850, [#allocation24], 64, 64, 4
        $region92: #{tpu_custom_call.1} parent=11 // pred_fallthru
          _
        // Predicated region
        $region93: #{tpu_custom_call.1} parent=11 // pred_check
          %p856 = pneg %p512
        $region94: #{tpu_custom_call.1} parent=11 // pred_check_branch
          %858 = sbr.rel (%p856) target = $region96
        $region95: #{tpu_custom_call.1} parent=11 // pred_region
          %860 = vsyncadd [#allocation27], 0
          %s861 = sshll.u32 %s21, 4
          %s862 = int_to_ptr.hbm [resolvable:$true] %s861
          %s863 = sshll.u32 [#allocation26], 4
          %s864 = int_to_ptr.vmem [resolvable:$true] %s863
          %869 = dma.hbm_to_vmem [thread:$0]  %s862, 2048, %s864, [#allocation27], 64, 64, 4
        $region96: #{tpu_custom_call.1} parent=11 // pred_fallthru
          _
        // Predicated region
        $region97: #{tpu_custom_call.1} parent=11 // pred_check
          %p870 = pneg %p533
        $region98: #{tpu_custom_call.1} parent=11 // pred_check_branch
          %872 = sbr.rel (%p870) target = $region100
        $region99: #{tpu_custom_call.1} parent=11 // pred_region
          %874 = vsyncadd [#allocation27], 0
          %s875 = sshll.u32 %s22, 4
          %s876 = int_to_ptr.hbm [resolvable:$true] %s875
          %s877 = sshll.u32 [#allocation28], 4
          %s878 = int_to_ptr.vmem [resolvable:$true] %s877
          %883 = dma.hbm_to_vmem [thread:$0]  %s876, 256, %s878, [#allocation27], 64, 64, 4
        $region100: #{tpu_custom_call.1} parent=11 // pred_fallthru
          _
        // Predicated region
        $region101: #{tpu_custom_call.1} parent=11 // pred_check
          %p884 = pneg %p554
        $region102: #{tpu_custom_call.1} parent=11 // pred_check_branch
          %886 = sbr.rel (%p884) target = $region104
        $region103: #{tpu_custom_call.1} parent=11 // pred_region
          _
        $region104: #{tpu_custom_call.1} parent=11 // pred_fallthru
          _
        // Predicated region
        $region105: #{tpu_custom_call.1} parent=11 // pred_check
          %p887 = pneg %p575
        $region106: #{tpu_custom_call.1} parent=11 // pred_check_branch
          %889 = sbr.rel (%p887) target = $region108
        $region107: #{tpu_custom_call.1} parent=11 // pred_region
          %891 = vsyncadd [#allocation30], 0
          %s892 = sshll.u32 %s24, 4
          %s893 = int_to_ptr.hbm [resolvable:$true] %s892
          %s894 = sshll.u32 [#allocation29], 4
          %s895 = int_to_ptr.vmem [resolvable:$true] %s894
          %900 = dma.hbm_to_vmem [thread:$0]  %s893, 1024, %s895, [#allocation30], 64, 64, 4
        $region108: #{tpu_custom_call.1} parent=11 // pred_fallthru
          _
        // Predicated region
        $region109: #{tpu_custom_call.1} parent=11 // pred_check
          %p901 = pneg %p596
        $region110: #{tpu_custom_call.1} parent=11 // pred_check_branch
          %903 = sbr.rel (%p901) target = $region112
        $region111: #{tpu_custom_call.1} parent=11 // pred_region
          _
        $region112: #{tpu_custom_call.1} parent=11 // pred_fallthru
          _
      $region12: #{tpu_custom_call.1} parent=5 // pred_fallthru
        _
      %p904 = scmp.lt.s32.totalorder %s45, 4
      // Predicated region
      $region113: #{tpu_custom_call.1} parent=5 // pred_check
        %p905 = pneg %p904
      $region114: #{tpu_custom_call.1} parent=5 // pred_check_branch
        %907 = sbr.rel (%p905) target = $region116
      $region115: #{tpu_custom_call.1} parent=5 // pred_region
        // Predicated region
        $region117: #{tpu_custom_call.1} parent=115 // pred_check
          %p908 = pneg %p65
        $region118: #{tpu_custom_call.1} parent=115 // pred_check_branch
          %910 = sbr.rel (%p908) target = $region120
        $region119: #{tpu_custom_call.1} parent=115 // pred_region
          %p911 = scmp.lt.s32.totalorder %s45, 3
          %s912 = scalar_select %p911, %s45, 3
          %s913 = smul.addr %s912, 8
          %s914 = scalar_lea.vmem %s0, %s913
        $region120: #{tpu_custom_call.1} parent=115 // pred_fallthru
          _
      $region116: #{tpu_custom_call.1} parent=5 // pred_fallthru
        _
      %p915 = scmp.le.s32.totalorder 1, %s45
      %p916 = scmp.lt.s32.totalorder %s45, 5
      %p917 = pnand %p915, %p916
      %p918 = pneg %p917
      // Predicated region
      $region121: #{tpu_custom_call.1} parent=5 // pred_check
        _
      $region122: #{tpu_custom_call.1} parent=5 // pred_check_branch
        %920 = sbr.rel (%p917) target = $region124
      $region123: #{tpu_custom_call.1} parent=5 // pred_region
        %s921 = ssub.s32 %s45, 1
        // Predicated region
        $region125: #{tpu_custom_call.1} parent=123 // pred_check
          %p922 = pneg %p113
        $region126: #{tpu_custom_call.1} parent=123 // pred_check_branch
          %924 = sbr.rel (%p922) target = $region128
        $region127: #{tpu_custom_call.1} parent=123 // pred_region
          %926 = dma.done [#allocation3], 32
        $region128: #{tpu_custom_call.1} parent=123 // pred_fallthru
          _
        // Predicated region
        $region129: #{tpu_custom_call.1} parent=123 // pred_check
          %p927 = pneg %p155
        $region130: #{tpu_custom_call.1} parent=123 // pred_check_branch
          %929 = sbr.rel (%p927) target = $region132
        $region131: #{tpu_custom_call.1} parent=123 // pred_region
          %931 = dma.done [#allocation6], 512
        $region132: #{tpu_custom_call.1} parent=123 // pred_fallthru
          _
        // Predicated region
        $region133: #{tpu_custom_call.1} parent=123 // pred_check
          %p932 = pneg %p176
        $region134: #{tpu_custom_call.1} parent=123 // pred_check_branch
          %934 = sbr.rel (%p932) target = $region136
        $region135: #{tpu_custom_call.1} parent=123 // pred_region
          %936 = dma.done [#allocation6], 32
        $region136: #{tpu_custom_call.1} parent=123 // pred_fallthru
          _
        // Predicated region
        $region137: #{tpu_custom_call.1} parent=123 // pred_check
          %p937 = pneg %p197
        $region138: #{tpu_custom_call.1} parent=123 // pred_check_branch
          %939 = sbr.rel (%p937) target = $region140
        $region139: #{tpu_custom_call.1} parent=123 // pred_region
          %941 = dma.done [#allocation9], 2048
        $region140: #{tpu_custom_call.1} parent=123 // pred_fallthru
          _
        // Predicated region
        $region141: #{tpu_custom_call.1} parent=123 // pred_check
          %p942 = pneg %p218
        $region142: #{tpu_custom_call.1} parent=123 // pred_check_branch
          %944 = sbr.rel (%p942) target = $region144
        $region143: #{tpu_custom_call.1} parent=123 // pred_region
          %946 = dma.done [#allocation9], 256
        $region144: #{tpu_custom_call.1} parent=123 // pred_fallthru
          _
        // Predicated region
        $region145: #{tpu_custom_call.1} parent=123 // pred_check
          %p947 = pneg %p239
        $region146: #{tpu_custom_call.1} parent=123 // pred_check_branch
          %949 = sbr.rel (%p947) target = $region148
        $region147: #{tpu_custom_call.1} parent=123 // pred_region
          %951 = dma.done [#allocation12], 16
        $region148: #{tpu_custom_call.1} parent=123 // pred_fallthru
          _
        // Predicated region
        $region149: #{tpu_custom_call.1} parent=123 // pred_check
          %p952 = pneg %p260
        $region150: #{tpu_custom_call.1} parent=123 // pred_check_branch
          %954 = sbr.rel (%p952) target = $region152
        $region151: #{tpu_custom_call.1} parent=123 // pred_region
          %956 = dma.done [#allocation12], 1024
        $region152: #{tpu_custom_call.1} parent=123 // pred_fallthru
          _
        // Predicated region
        $region153: #{tpu_custom_call.1} parent=123 // pred_check
          %p957 = pneg %p302
        $region154: #{tpu_custom_call.1} parent=123 // pred_check_branch
          %959 = sbr.rel (%p957) target = $region156
        $region155: #{tpu_custom_call.1} parent=123 // pred_region
          %961 = dma.done [#allocation15], 256
        $region156: #{tpu_custom_call.1} parent=123 // pred_fallthru
          _
        // Predicated region
        $region157: #{tpu_custom_call.1} parent=123 // pred_check
          %p962 = pneg %p344
        $region158: #{tpu_custom_call.1} parent=123 // pred_check_branch
          %964 = sbr.rel (%p962) target = $region160
        $region159: #{tpu_custom_call.1} parent=123 // pred_region
          %966 = dma.done [#allocation15], 1024
        $region160: #{tpu_custom_call.1} parent=123 // pred_fallthru
          _
        // Predicated region
        $region161: #{tpu_custom_call.1} parent=123 // pred_check
          %p967 = pneg %p365
        $region162: #{tpu_custom_call.1} parent=123 // pred_check_branch
          %969 = sbr.rel (%p967) target = $region164
        $region163: #{tpu_custom_call.1} parent=123 // pred_region
          %971 = dma.done [#allocation18], 1024
        $region164: #{tpu_custom_call.1} parent=123 // pred_fallthru
          _
        // Predicated region
        $region165: #{tpu_custom_call.1} parent=123 // pred_check
          %p972 = pneg %p386
        $region166: #{tpu_custom_call.1} parent=123 // pred_check_branch
          %974 = sbr.rel (%p972) target = $region168
        $region167: #{tpu_custom_call.1} parent=123 // pred_region
          %976 = dma.done [#allocation18], 2048
        $region168: #{tpu_custom_call.1} parent=123 // pred_fallthru
          _
        // Predicated region
        $region169: #{tpu_custom_call.1} parent=123 // pred_check
          %p977 = pneg %p407
        $region170: #{tpu_custom_call.1} parent=123 // pred_check_branch
          %979 = sbr.rel (%p977) target = $region172
        $region171: #{tpu_custom_call.1} parent=123 // pred_region
          %981 = dma.done [#allocation21], 256
        $region172: #{tpu_custom_call.1} parent=123 // pred_fallthru
          _
        // Predicated region
        $region173: #{tpu_custom_call.1} parent=123 // pred_check
          %p982 = pneg %p449
        $region174: #{tpu_custom_call.1} parent=123 // pred_check_branch
          %984 = sbr.rel (%p982) target = $region176
        $region175: #{tpu_custom_call.1} parent=123 // pred_region
          %986 = dma.done [#allocation21], 1024
        $region176: #{tpu_custom_call.1} parent=123 // pred_fallthru
          _
        // Predicated region
        $region177: #{tpu_custom_call.1} parent=123 // pred_check
          %p987 = pneg %p470
        $region178: #{tpu_custom_call.1} parent=123 // pred_check_branch
          %989 = sbr.rel (%p987) target = $region180
        $region179: #{tpu_custom_call.1} parent=123 // pred_region
          %991 = dma.done [#allocation24], 1024
        $region180: #{tpu_custom_call.1} parent=123 // pred_fallthru
          _
        // Predicated region
        $region181: #{tpu_custom_call.1} parent=123 // pred_check
          %p992 = pneg %p491
        $region182: #{tpu_custom_call.1} parent=123 // pred_check_branch
          %994 = sbr.rel (%p992) target = $region184
        $region183: #{tpu_custom_call.1} parent=123 // pred_region
          %996 = dma.done [#allocation24], 1024
        $region184: #{tpu_custom_call.1} parent=123 // pred_fallthru
          _
        // Predicated region
        $region185: #{tpu_custom_call.1} parent=123 // pred_check
          %p997 = pneg %p512
        $region186: #{tpu_custom_call.1} parent=123 // pred_check_branch
          %999 = sbr.rel (%p997) target = $region188
        $region187: #{tpu_custom_call.1} parent=123 // pred_region
          %1001 = dma.done [#allocation27], 2048
        $region188: #{tpu_custom_call.1} parent=123 // pred_fallthru
          _
        // Predicated region
        $region189: #{tpu_custom_call.1} parent=123 // pred_check
          %p1002 = pneg %p533
        $region190: #{tpu_custom_call.1} parent=123 // pred_check_branch
          %1004 = sbr.rel (%p1002) target = $region192
        $region191: #{tpu_custom_call.1} parent=123 // pred_region
          %1006 = dma.done [#allocation27], 256
        $region192: #{tpu_custom_call.1} parent=123 // pred_fallthru
          _
        // Predicated region
        $region193: #{tpu_custom_call.1} parent=123 // pred_check
          %p1007 = pneg %p575
        $region194: #{tpu_custom_call.1} parent=123 // pred_check_branch
          %1009 = sbr.rel (%p1007) target = $region196
        $region195: #{tpu_custom_call.1} parent=123 // pred_region
          %1011 = dma.done [#allocation30], 1024
        $region196: #{tpu_custom_call.1} parent=123 // pred_fallthru
          _
        %p1012 = scmp.lt.s32.totalorder %s50, 3
        %s1013 = scalar_select %p1012, %s50, 3
        %s1014 = smul.addr %s1013, 8
        %s1015 = scalar_lea.vmem %s0, %s1014
        %p1016 = pneg %p71
        %p1017 = pneg %p68
        %p1018 = pneg %p92
        %p1019 = pneg %p89
        %p1020 = pneg %p113
        %p1021 = pneg %p110
        %p1022 = pneg %p134
        %p1023 = pneg %p131
        %p1024 = pneg %p155
        %p1025 = pneg %p152
        %p1026 = pneg %p176
        %p1027 = pneg %p173
        %p1028 = pneg %p197
        %p1029 = pneg %p194
        %p1030 = pneg %p218
        %p1031 = pneg %p215
        %p1032 = pneg %p239
        %p1033 = pneg %p236
        %p1034 = pneg %p260
        %p1035 = pneg %p257
        %p1036 = pneg %p281
        %p1037 = pneg %p278
        %p1038 = pneg %p302
        %p1039 = pneg %p299
        %p1040 = pneg %p323
        %p1041 = pneg %p320
        %p1042 = pneg %p344
        %p1043 = pneg %p341
        %p1044 = pneg %p365
        %p1045 = pneg %p362
        %p1046 = pneg %p386
        %p1047 = pneg %p383
        %p1048 = pneg %p407
        %p1049 = pneg %p404
        %p1050 = pneg %p428
        %p1051 = pneg %p425
        %p1052 = pneg %p449
        %p1053 = pneg %p446
        %p1054 = pneg %p470
        %p1055 = pneg %p467
        %p1056 = pneg %p491
        %p1057 = pneg %p488
        %p1058 = pneg %p512
        %p1059 = pneg %p509
        %p1060 = pneg %p533
        %p1061 = pneg %p530
        %p1062 = pneg %p554
        %p1063 = pneg %p551
        %p1064 = pneg %p575
        %p1065 = pneg %p572
        %p1066 = pneg %p596
        %p1067 = pneg %p593
        %p1068 = pneg %p622
        %p1069 = pneg %p619
        %s1070 = sand.u32 %s609, 1
        %s1071 = scalar_lea.sflag [#allocation4], %s1070
        %s1072 = sand.u32 %s609, 1
        %s1073 = smul.addr %s1072, 32
        %s1074 = scalar_lea.vmem [#allocation31], %s1073
        %p1075 = scmp.lt.s32.totalorder %s50, 3
        %s1076 = scalar_select %p1075, %s50, 3
        %s1077 = smul.addr %s1076, 8
        %s1078 = scalar_lea.vmem %s0, %s1077
        %s1079 = smul.u32 8, %s50
        %v1081 = vld [vmem:[%s1] sm:$0xff]
        %v1082 = vld [vmem:[%s1 + $0x8] sm:$0xff]
        %v1083 = vld [vmem:[%s1 + $0x10] sm:$0xff]
        %v1084 = vld [vmem:[%s1 + $0x18] sm:$0xff]
        %v1085 = vld [vmem:[%s1 + $0x20] sm:$0xff]
        %v1086 = vld [vmem:[%s1 + $0x28] sm:$0xff]
        %v1087 = vld [vmem:[%s1 + $0x30] sm:$0xff]
        %v1088 = vld [vmem:[%s1 + $0x38] sm:$0xff]
        %v1089 = vld [vmem:[%s1078] sm:$0xff]
        %vm1090 = vcmask 64512
        %v1092 = vsel %vm1090, %v1081, 0
        %v1095 = vsel %vm1090, %v1082, 0
        %v1098 = vsel %vm1090, %v1083, 0
        %v1101 = vsel %vm1090, %v1084, 0
        %v1104 = vsel %vm1090, %v1085, 0
        %v1107 = vsel %vm1090, %v1086, 0
        %v1110 = vsel %vm1090, %v1087, 0
        %v1113 = vsel %vm1090, %v1088, 0
        %1115 = vmatpush.msra.mxu0 0.0
        %1116 = vmatpush.msra.mxu0 0.0
        %1117 = vmatpush.msra.mxu0 0.0
        %1118 = vmatpush.msra.mxu0 0.0
        %1119 = vmatpush.msra.mxu0 0.0
        %1120 = vmatpush.msra.mxu0 0.0
        %1121 = vmatpush.msra.mxu0 0.0
        %1122 = vmatpush.msra.mxu0 0.0
        %1123 = vmatpush.msra.mxu0 0.0
        %1124 = vmatpush.msra.mxu0 0.0
        %1125 = vmatpush.msra.mxu0 0.0
        %1126 = vmatpush.msra.mxu0 0.0
        %1127 = vmatpush.msra.mxu0 0.0
        %1128 = vmatpush.msra.mxu0 0.0
        %1129 = vmatpush.msra.mxu0 0.0
        %1130 = vmatpush.msra.mxu0 %v1089
        %1131 = vmatmul.f32.gmra.mxu0 %v1092
        %v1132 = vpop.f32.mrf.mxu0
        %v1133 = vadd.f32 0.0, %v1132
        %1134 = vmatmul.f32.gmra.mxu0 %v1095
        %v1135 = vpop.f32.mrf.mxu0
        %v1136 = vadd.f32 0.0, %v1135
        %1137 = vmatmul.f32.gmra.mxu0 %v1098
        %v1138 = vpop.f32.mrf.mxu0
        %v1139 = vadd.f32 0.0, %v1138
        %1140 = vmatmul.f32.gmra.mxu0 %v1101
        %v1141 = vpop.f32.mrf.mxu0
        %v1142 = vadd.f32 0.0, %v1141
        %1143 = vmatmul.f32.gmra.mxu0 %v1104
        %v1144 = vpop.f32.mrf.mxu0
        %v1145 = vadd.f32 0.0, %v1144
        %1146 = vmatmul.f32.gmra.mxu0 %v1107
        %v1147 = vpop.f32.mrf.mxu0
        %v1148 = vadd.f32 0.0, %v1147
        %1149 = vmatmul.f32.gmra.mxu0 %v1110
        %v1150 = vpop.f32.mrf.mxu0
        %v1151 = vadd.f32 0.0, %v1150
        %1152 = vmatmul.f32.gmra.mxu0 %v1113
        %v1153 = vpop.f32.mrf.mxu0
        %v1154 = vadd.f32 0.0, %v1153
        %1155 = vdwg.mxu0
        %v1156 = vlaneseq
        %v1157 = vshrl.u32 %v1156, 7
        %v1158 = vadd.s32 %v1157, 8
        %v1159 = vadd.s32 %v1157, 16
        %v1160 = vadd.s32 %v1157, 24
        %v1161 = vadd.s32 %v1157, 32
        %v1162 = vadd.s32 %v1157, 40
        %v1163 = vadd.s32 %v1157, 48
        %v1164 = vadd.s32 %v1157, 56
        %vm1165 = vcmp.lt.s32.totalorder %v1157, 0
        %v1166 = vsub.s32 0, %v1157
        %v1167 = vsel %vm1165, %v1166, %v1157
        %v1168 = vshrl.u32 %v1167, 3
        %v1169 = vand.u32 %v1167, 7
        %v1170 = vsub.s32 0, %v1169
        %v1171 = vsel %vm1165, %v1170, %v1169
        %vm1172 = vcmp.lt.s32.totalorder %v1158, 0
        %v1173 = vsub.s32 0, %v1158
        %v1174 = vsel %vm1172, %v1173, %v1158
        %v1175 = vshrl.u32 %v1174, 3
        %v1176 = vand.u32 %v1174, 7
        %v1177 = vsub.s32 0, %v1176
        %v1178 = vsel %vm1172, %v1177, %v1176
        %vm1179 = vcmp.lt.s32.totalorder %v1159, 0
        %v1180 = vsub.s32 0, %v1159
        %v1181 = vsel %vm1179, %v1180, %v1159
        %v1182 = vshrl.u32 %v1181, 3
        %v1183 = vand.u32 %v1181, 7
        %v1184 = vsub.s32 0, %v1183
        %v1185 = vsel %vm1179, %v1184, %v1183
        %vm1186 = vcmp.lt.s32.totalorder %v1160, 0
        %v1187 = vsub.s32 0, %v1160
        %v1188 = vsel %vm1186, %v1187, %v1160
        %v1189 = vshrl.u32 %v1188, 3
        %v1190 = vand.u32 %v1188, 7
        %v1191 = vsub.s32 0, %v1190
        %v1192 = vsel %vm1186, %v1191, %v1190
        %vm1193 = vcmp.lt.s32.totalorder %v1161, 0
        %v1194 = vsub.s32 0, %v1161
        %v1195 = vsel %vm1193, %v1194, %v1161
        %v1196 = vshrl.u32 %v1195, 3
        %v1197 = vand.u32 %v1195, 7
        %v1198 = vsub.s32 0, %v1197
        %v1199 = vsel %vm1193, %v1198, %v1197
        %vm1200 = vcmp.lt.s32.totalorder %v1162, 0
        %v1201 = vsub.s32 0, %v1162
        %v1202 = vsel %vm1200, %v1201, %v1162
        %v1203 = vshrl.u32 %v1202, 3
        %v1204 = vand.u32 %v1202, 7
        %v1205 = vsub.s32 0, %v1204
        %v1206 = vsel %vm1200, %v1205, %v1204
        %vm1207 = vcmp.lt.s32.totalorder %v1163, 0
        %v1208 = vsub.s32 0, %v1163
        %v1209 = vsel %vm1207, %v1208, %v1163
        %v1210 = vshrl.u32 %v1209, 3
        %v1211 = vand.u32 %v1209, 7
        %v1212 = vsub.s32 0, %v1211
        %v1213 = vsel %vm1207, %v1212, %v1211
        %vm1214 = vcmp.lt.s32.totalorder %v1164, 0
        %v1215 = vsub.s32 0, %v1164
        %v1216 = vsel %vm1214, %v1215, %v1164
        %v1217 = vshrl.u32 %v1216, 3
        %v1218 = vand.u32 %v1216, 7
        %v1219 = vsub.s32 0, %v1218
        %v1220 = vsel %vm1214, %v1219, %v1218
        %vm1221 = vcmp.ne.s32.totalorder %v1171, 0
        %vm1222 = vcmp.ne.s32.totalorder %v1178, 0
        %vm1223 = vcmp.ne.s32.totalorder %v1185, 0
        %vm1224 = vcmp.ne.s32.totalorder %v1192, 0
        %vm1225 = vcmp.ne.s32.totalorder %v1199, 0
        %vm1226 = vcmp.ne.s32.totalorder %v1206, 0
        %vm1227 = vcmp.ne.s32.totalorder %v1213, 0
        %vm1228 = vcmp.ne.s32.totalorder %v1220, 0
        %vm1229 = vcmp.lt.s32.totalorder %v1171, 0
        %vm1230 = vcmp.lt.s32.totalorder %v1178, 0
        %vm1231 = vcmp.lt.s32.totalorder %v1185, 0
        %vm1232 = vcmp.lt.s32.totalorder %v1192, 0
        %vm1233 = vcmp.lt.s32.totalorder %v1199, 0
        %vm1234 = vcmp.lt.s32.totalorder %v1206, 0
        %vm1235 = vcmp.lt.s32.totalorder %v1213, 0
        %vm1236 = vcmp.lt.s32.totalorder %v1220, 0
        %vm1237 = vmand %vm1229, %vm1221
        %vm1238 = vmand %vm1230, %vm1222
        %vm1239 = vmand %vm1231, %vm1223
        %vm1240 = vmand %vm1232, %vm1224
        %vm1241 = vmand %vm1233, %vm1225
        %vm1242 = vmand %vm1234, %vm1226
        %vm1243 = vmand %vm1235, %vm1227
        %vm1244 = vmand %vm1236, %vm1228
        %v1245 = vadd.s32 %v1171, 8
        %v1246 = vadd.s32 %v1178, 8
        %v1247 = vadd.s32 %v1185, 8
        %v1248 = vadd.s32 %v1192, 8
        %v1249 = vadd.s32 %v1199, 8
        %v1250 = vadd.s32 %v1206, 8
        %v1251 = vadd.s32 %v1213, 8
        %v1252 = vadd.s32 %v1220, 8
        %v1253 = vsel %vm1237, %v1245, %v1171
        %v1254 = vsel %vm1238, %v1246, %v1178
        %v1255 = vsel %vm1239, %v1247, %v1185
        %v1256 = vsel %vm1240, %v1248, %v1192
        %v1257 = vsel %vm1241, %v1249, %v1199
        %v1258 = vsel %vm1242, %v1250, %v1206
        %v1259 = vsel %vm1243, %v1251, %v1213
        %v1260 = vsel %vm1244, %v1252, %v1220
        %v1261 = vlaneseq
        %v1262 = vand.u32 %v1261, 127
        %vm1263 = vcmp.eq.s32.totalorder %v1253, %v1262
        %vm1264 = vcmp.eq.s32.totalorder %v1254, %v1262
        %vm1265 = vcmp.eq.s32.totalorder %v1255, %v1262
        %vm1266 = vcmp.eq.s32.totalorder %v1256, %v1262
        %vm1267 = vcmp.eq.s32.totalorder %v1257, %v1262
        %vm1268 = vcmp.eq.s32.totalorder %v1258, %v1262
        %vm1269 = vcmp.eq.s32.totalorder %v1259, %v1262
        %vm1270 = vcmp.eq.s32.totalorder %v1260, %v1262
        %1279 = vrot.lane.b32.xlu0 %v1133, 122
        %v1280 = vpop.permute.xlu0 %1279
        %1281 = vrot.lane.b32.xlu0 %v1136, 122
        %v1282 = vpop.permute.xlu0 %1281
        %1283 = vrot.lane.b32.xlu0 %v1139, 122
        %v1284 = vpop.permute.xlu0 %1283
        %1285 = vrot.lane.b32.xlu0 %v1142, 122
        %v1286 = vpop.permute.xlu0 %1285
        %1287 = vrot.lane.b32.xlu0 %v1145, 122
        %v1288 = vpop.permute.xlu0 %1287
        %1289 = vrot.lane.b32.xlu0 %v1148, 122
        %v1290 = vpop.permute.xlu0 %1289
        %1291 = vrot.lane.b32.xlu0 %v1151, 122
        %v1292 = vpop.permute.xlu0 %1291
        %1293 = vrot.lane.b32.xlu0 %v1154, 122
        %v1294 = vpop.permute.xlu0 %1293
        %v1303 = vsel %vm1263, %v1280, 0.0
        %v1304 = vsel %vm1264, %v1282, 0.0
        %v1305 = vsel %vm1265, %v1284, 0.0
        %v1306 = vsel %vm1266, %v1286, 0.0
        %v1307 = vsel %vm1267, %v1288, 0.0
        %v1308 = vsel %vm1268, %v1290, 0.0
        %v1309 = vsel %vm1269, %v1292, 0.0
        %v1310 = vsel %vm1270, %v1294, 0.0
        %v1311 = vsel %vm1090, %v1303, 0.0
        %1312 = vadd.xlane.f32.xlu0 %v1311
        %v1313 = vpop.xlane.xlu0 %1312
        %v1314 = vsel %vm1090, %v1304, 0.0
        %1315 = vadd.xlane.f32.xlu0 %v1314
        %v1316 = vpop.xlane.xlu0 %1315
        %v1317 = vsel %vm1090, %v1305, 0.0
        %1318 = vadd.xlane.f32.xlu0 %v1317
        %v1319 = vpop.xlane.xlu0 %1318
        %v1320 = vsel %vm1090, %v1306, 0.0
        %1321 = vadd.xlane.f32.xlu0 %v1320
        %v1322 = vpop.xlane.xlu0 %1321
        %v1323 = vsel %vm1090, %v1307, 0.0
        %1324 = vadd.xlane.f32.xlu0 %v1323
        %v1325 = vpop.xlane.xlu0 %1324
        %v1326 = vsel %vm1090, %v1308, 0.0
        %1327 = vadd.xlane.f32.xlu0 %v1326
        %v1328 = vpop.xlane.xlu0 %1327
        %v1329 = vsel %vm1090, %v1309, 0.0
        %1330 = vadd.xlane.f32.xlu0 %v1329
        %v1331 = vpop.xlane.xlu0 %1330
        %v1332 = vsel %vm1090, %v1310, 0.0
        %1333 = vadd.xlane.f32.xlu0 %v1332
        %v1334 = vpop.xlane.xlu0 %1333
        %v1335 = vmul.f32 %v1313, %v1133
        %v1336 = vmul.f32 %v1316, %v1136
        %v1337 = vmul.f32 %v1319, %v1139
        %v1338 = vmul.f32 %v1322, %v1142
        %v1339 = vmul.f32 %v1325, %v1145
        %v1340 = vmul.f32 %v1328, %v1148
        %v1341 = vmul.f32 %v1331, %v1151
        %v1342 = vmul.f32 %v1334, %v1154
        %1351 = vrot.lane.b32.xlu0 %v1335, 125
        %v1352 = vpop.permute.xlu0 %1351
        %1353 = vrot.lane.b32.xlu0 %v1336, 125
        %v1354 = vpop.permute.xlu0 %1353
        %1355 = vrot.lane.b32.xlu0 %v1337, 125
        %v1356 = vpop.permute.xlu0 %1355
        %1357 = vrot.lane.b32.xlu0 %v1338, 125
        %v1358 = vpop.permute.xlu0 %1357
        %1359 = vrot.lane.b32.xlu0 %v1339, 125
        %v1360 = vpop.permute.xlu0 %1359
        %1361 = vrot.lane.b32.xlu0 %v1340, 125
        %v1362 = vpop.permute.xlu0 %1361
        %1363 = vrot.lane.b32.xlu0 %v1341, 125
        %v1364 = vpop.permute.xlu0 %1363
        %1365 = vrot.lane.b32.xlu0 %v1342, 125
        %v1366 = vpop.permute.xlu0 %1365
        %v1375 = vadd.f32 %v1133, %v1352
        %v1376 = vadd.f32 %v1136, %v1354
        %v1377 = vadd.f32 %v1139, %v1356
        %v1378 = vadd.f32 %v1142, %v1358
        %v1379 = vadd.f32 %v1145, %v1360
        %v1380 = vadd.f32 %v1148, %v1362
        %v1381 = vadd.f32 %v1151, %v1364
        %v1382 = vadd.f32 %v1154, %v1366
        %v1383 = vpack.c.bf16 %v1376, %v1375
        %v1384 = vpack.c.bf16 %v1378, %v1377
        %v1385 = vpack.c.bf16 %v1380, %v1379
        %v1386 = vpack.c.bf16 %v1382, %v1381
        %v1387 = vld [vmem:[#allocation2] sm:$0x3]
        %v1388 = vld [vmem:[%s3] sm:$0x1]
        %v1390 = vperm.slane %v1388, 0
        %vm1392 = vcmask 23552
        %v1394 = vsel %vm1392, %v1383, 0
        %v1397 = vsel %vm1392, %v1384, 0
        %v1400 = vsel %vm1392, %v1385, 0
        %v1403 = vsel %vm1392, %v1386, 0
        %vm1405 = vcmask 1040384
        %vm1406 = vcmask 1041408
        %v1407 = vsel %vm1405, 4294967295, 65535
        %v1408 = vsel %vm1406, %v1407, 0
        %v1410 = vand.u32 %v1387, %v1408
        %1412 = vmatpush.bf16.msra.mxu0 0
        %1413 = vmatpush.bf16.msra.mxu0 0
        %1414 = vmatpush.bf16.msra.mxu0 0
        %1415 = vmatpush.bf16.msra.mxu0 0
        %1416 = vmatpush.bf16.msra.mxu0 0
        %1417 = vmatpush.bf16.msra.mxu0 0
        %1418 = vmatpush.bf16.msra.mxu0 0
        %1419 = vmatpush.bf16.msra.mxu0 %v1410
        %1420 = vmatmul.bf16.gmra.mxu0 %v1394
        %v1421 = vpop.f32.mrf.mxu0
        %v1422 = vadd.f32 %v1390, %v1421
        %v1423 = vpop.f32.mrf.mxu0
        %v1424 = vadd.f32 %v1390, %v1423
        %1425 = vmatmul.bf16.gmra.mxu0 %v1397
        %v1426 = vpop.f32.mrf.mxu0
        %v1427 = vadd.f32 %v1390, %v1426
        %v1428 = vpop.f32.mrf.mxu0
        %v1429 = vadd.f32 %v1390, %v1428
        %1430 = vmatmul.bf16.gmra.mxu0 %v1400
        %v1431 = vpop.f32.mrf.mxu0
        %v1432 = vadd.f32 %v1390, %v1431
        %v1433 = vpop.f32.mrf.mxu0
        %v1434 = vadd.f32 %v1390, %v1433
        %1435 = vmatmul.bf16.gmra.mxu0 %v1403
        %v1436 = vpop.f32.mrf.mxu0
        %v1437 = vadd.f32 %v1390, %v1436
        %v1438 = vpop.f32.mrf.mxu0
        %v1439 = vadd.f32 %v1390, %v1438
        %1440 = vdwg.mxu0
        %vm1441 = vcmp.lt.s32.totalorder %v1262, 29
        %v1442 = vand.u32 2147483647, %v1422
        %vm1443 = vcmp.le.f32.partialorder %v1442, 0.7853982
        %vm1444 = vcmp.lt.s32.totalorder %v1422, 0
        %v1445 = vand.u32 %v1422, 2139095040
        %v1446 = vshrl.u32 %v1445, 23
        %v1447 = vsub.s32 %v1446, 127
        %v1448 = vand.u32 2147483647, %v1422
        %v1449 = vand.u32 %v1448, 8388607
        %v1450 = vor.u32 %v1449, 8388608
        %v1451 = vsub.s32 0, %v1450
        %v1452 = vadd.s32 %v1447, 1
        %vm1453 = vcmp.gt.s32.totalorder %v1452, 0
        %v1454 = vsel %vm1453, %v1452, 0
        %v1455 = vshrl.u32 %v1454, 5
        %v1456 = vand.u32 %v1454, 31
        %v1457 = vsub.s32 32, %v1456
        %v1458 = vshrl.u32 683565275, %v1457
        %v1459 = vshll.u32 683565275, %v1456
        %v1460 = vshrl.u32 2475754826, %v1457
        %v1461 = vor.u32 %v1459, %v1460
        %v1462 = vshll.u32 2475754826, %v1456
        %v1463 = vshrl.u32 2131351028, %v1457
        %v1464 = vor.u32 %v1462, %v1463
        %v1465 = vshll.u32 2131351028, %v1456
        %v1466 = vshrl.u32 2102212464, %v1457
        %v1467 = vor.u32 %v1465, %v1466
        %v1468 = vshll.u32 2102212464, %v1456
        %v1469 = vshrl.u32 920167782, %v1457
        %v1470 = vor.u32 %v1468, %v1469
        %v1471 = vshll.u32 920167782, %v1456
        %v1472 = vshrl.u32 1326507024, %v1457
        %v1473 = vor.u32 %v1471, %v1472
        %vm1474 = vcmp.lt.s32.totalorder %v1455, 1
        %vm1475 = vcmp.lt.s32.totalorder %v1455, 2
        %vm1476 = vcmp.lt.s32.totalorder %v1455, 3
        %vm1477 = vcmp.lt.s32.totalorder %v1455, 4
        %v1478 = vsel %vm1474, %v1458, %v1461
        %v1479 = vsel %vm1477, %v1467, 2102212464
        %v1480 = vsel %vm1476, %v1464, %v1479
        %v1481 = vsel %vm1475, %v1478, %v1480
        %v1482 = vsel %vm1474, %v1461, %v1464
        %v1483 = vsel %vm1477, %v1470, 920167782
        %v1484 = vsel %vm1476, %v1467, %v1483
        %v1485 = vsel %vm1475, %v1482, %v1484
        %v1486 = vsel %vm1474, %v1464, %v1467
        %v1487 = vsel %vm1477, %v1473, 1326507024
        %v1488 = vsel %vm1476, %v1470, %v1487
        %v1489 = vsel %vm1475, %v1486, %v1488
        %v1490 = vshll.u32 %v1450, 8
        %v1491 = vand.u32 %v1490, 65535
        %v1492 = vshrl.u32 %v1490, 16
        %v1493 = vand.u32 %v1489, 65535
        %v1494 = vshrl.u32 %v1489, 16
        %v1495 = vmul.u32 %v1491, %v1493
        %v1496 = vmul.u32 %v1491, %v1494
        %v1497 = vmul.u32 %v1492, %v1493
        %v1498 = vmul.u32 %v1492, %v1494
        %v1499 = vshll.u32 %v1496, 16
        %v1500 = vshrl.u32 %v1496, 16
        %v1501 = vshll.u32 %v1497, 16
        %v1502 = vshrl.u32 %v1497, 16
        %vm1503 = vc.u32 %v1495, %v1499
        %v1504 = vsel %vm1503, 1, 0
        %v1505 = vadd.s32 %v1495, %v1499
        %v1506 = vadd.s32 %v1498, %v1504
        %vm1507 = vc.u32 %v1505, %v1501
        %v1508 = vsel %vm1507, 1, 0
        %v1509 = vadd.s32 %v1505, %v1501
        %v1510 = vadd.s32 %v1506, %v1508
        %v1511 = vadd.s32 %v1510, %v1500
        %v1512 = vadd.s32 %v1511, %v1502
        %v1513 = vand.u32 %v1490, 65535
        %v1514 = vshrl.u32 %v1490, 16
        %v1515 = vand.u32 %v1485, 65535
        %v1516 = vshrl.u32 %v1485, 16
        %v1517 = vmul.u32 %v1513, %v1515
        %v1518 = vmul.u32 %v1513, %v1516
        %v1519 = vmul.u32 %v1514, %v1515
        %v1520 = vmul.u32 %v1514, %v1516
        %v1521 = vshll.u32 %v1518, 16
        %v1522 = vshrl.u32 %v1518, 16
        %v1523 = vshll.u32 %v1519, 16
        %v1524 = vshrl.u32 %v1519, 16
        %vm1525 = vc.u32 %v1517, %v1521
        %v1526 = vsel %vm1525, 1, 0
        %v1527 = vadd.s32 %v1517, %v1521
        %v1528 = vadd.s32 %v1520, %v1526
        %vm1529 = vc.u32 %v1527, %v1523
        %v1530 = vsel %vm1529, 1, 0
        %v1531 = vadd.s32 %v1527, %v1523
        %v1532 = vadd.s32 %v1528, %v1530
        %v1533 = vadd.s32 %v1532, %v1522
        %v1534 = vadd.s32 %v1533, %v1524
        %v1535 = vmul.u32 %v1490, %v1481
        %v1536 = vadd.s32 %v1512, %v1531
        %vm1537 = vc.u32 %v1512, %v1531
        %v1538 = vadd.s32 %v1534, 1
        %v1539 = vsel %vm1537, %v1538, %v1534
        %v1540 = vadd.s32 %v1535, %v1539
        %v1541 = vadd.s32 %v1540, 536870912
        %v1542 = vshrl.u32 %v1541, 30
        %v1543 = vshll.u32 %v1542, 30
        %v1544 = vsub.s32 %v1540, %v1543
        %vm1545 = vcmp.lt.s32.totalorder %v1544, 0
        %v1546 = vsub.s32 0, %v1544
        %v1547 = vsel %vm1545, %v1546, %v1544
        %v1548 = vclz %v1547
        %v1549 = vsub.s32 %v1548, 2
        %vm1550 = vcmp.gt.s32.totalorder 0, %v1549
        %v1551 = vsel %vm1550, 0, %v1549
        %v1552 = vsub.s32 32, %v1551
        %v1553 = vshll.u32 %v1544, %v1551
        %v1554 = vshrl.u32 %v1536, %v1552
        %v1555 = vor.u32 %v1553, %v1554
        %v1556 = vsub.s32 4294967266, %v1551
        %v1557 = vadd.s32 %v1556, 127
        %v1558 = vshll.u32 %v1557, 23
        %v1559 = vor.u32 4788187, %v1558
        %v1560 = vand.u32 2147483647, %v1559
        %v1562 = vcvt.s32.f32 %v1555
        %v1563 = vmul.f32 %v1562, %v1560
        %v1564 = vxor.u32 %v1563, 2147483648
        %v1565 = vsel %vm1444, %v1564, %v1563
        %v1566 = vsub.s32 4, %v1542
        %v1567 = vsel %vm1444, %v1566, %v1542
        %v1568 = vsel %vm1443, %v1422, %v1565
        %v1569 = vsel %vm1443, 0, %v1567
        %v1570 = vmul.f32 %v1568, %v1568
        %v1571 = vmul.f32 %v1570, -0.001358992
        %v1572 = vadd.f32 %v1571, 0.041655596
        %v1573 = vmul.f32 %v1570, %v1572
        %v1574 = vadd.f32 %v1573, -0.4999988
        %v1575 = vmul.f32 %v1570, %v1574
        %v1576 = vadd.f32 1.0, %v1575
        %v1577 = vmul.f32 %v1568, %v1568
        %v1578 = vmul.f32 %v1577, -0.00019511016
        %v1579 = vadd.f32 %v1578, 0.008332121
        %v1580 = vmul.f32 %v1577, %v1579
        %v1581 = vadd.f32 %v1580, -0.16666654
        %v1582 = vmul.f32 %v1577, %v1581
        %v1583 = vadd.f32 %v1582, 1.0
        %v1584 = vmul.f32 %v1583, %v1568
        %vm1585 = vweird.f32 %v1422
        %v1586 = vadd.s32 %v1569, 3
        %v1587 = vand.u32 %v1586, 3
        %vm1588 = vcmp.lt.s32.totalorder %v1587, 2
        %vm1589 = vcmp.eq.s32.totalorder %v1587, 0
        %v1590 = vxor.u32 %v1584, 2147483648
        %v1591 = vsel %vm1589, %v1576, %v1590
        %vm1592 = vcmp.eq.s32.totalorder %v1587, 2
        %v1593 = vxor.u32 %v1576, 2147483648
        %v1594 = vsel %vm1592, %v1593, %v1584
        %v1595 = vsel %vm1588, %v1591, %v1594
        %v1596 = vsel %vm1585, nan, %v1595
        %v1597 = vand.u32 2147483647, %v1424
        %vm1598 = vcmp.le.f32.partialorder %v1597, 0.7853982
        %vm1599 = vcmp.lt.s32.totalorder %v1424, 0
        %v1600 = vand.u32 %v1424, 2139095040
        %v1601 = vshrl.u32 %v1600, 23
        %v1602 = vsub.s32 %v1601, 127
        %v1603 = vand.u32 2147483647, %v1424
        %v1604 = vand.u32 %v1603, 8388607
        %v1605 = vor.u32 %v1604, 8388608
        %v1606 = vsub.s32 0, %v1605
        %v1607 = vadd.s32 %v1602, 1
        %vm1608 = vcmp.gt.s32.totalorder %v1607, 0
        %v1609 = vsel %vm1608, %v1607, 0
        %v1610 = vshrl.u32 %v1609, 5
        %v1611 = vand.u32 %v1609, 31
        %v1612 = vsub.s32 32, %v1611
        %v1613 = vshrl.u32 683565275, %v1612
        %v1614 = vshll.u32 683565275, %v1611
        %v1615 = vshrl.u32 2475754826, %v1612
        %v1616 = vor.u32 %v1614, %v1615
        %v1617 = vshll.u32 2475754826, %v1611
        %v1618 = vshrl.u32 2131351028, %v1612
        %v1619 = vor.u32 %v1617, %v1618
        %v1620 = vshll.u32 2131351028, %v1611
        %v1621 = vshrl.u32 2102212464, %v1612
        %v1622 = vor.u32 %v1620, %v1621
        %v1623 = vshll.u32 2102212464, %v1611
        %v1624 = vshrl.u32 920167782, %v1612
        %v1625 = vor.u32 %v1623, %v1624
        %v1626 = vshll.u32 920167782, %v1611
        %v1627 = vshrl.u32 1326507024, %v1612
        %v1628 = vor.u32 %v1626, %v1627
        %vm1629 = vcmp.lt.s32.totalorder %v1610, 1
        %vm1630 = vcmp.lt.s32.totalorder %v1610, 2
        %vm1631 = vcmp.lt.s32.totalorder %v1610, 3
        %vm1632 = vcmp.lt.s32.totalorder %v1610, 4
        %v1633 = vsel %vm1629, %v1613, %v1616
        %v1634 = vsel %vm1632, %v1622, 2102212464
        %v1635 = vsel %vm1631, %v1619, %v1634
        %v1636 = vsel %vm1630, %v1633, %v1635
        %v1637 = vsel %vm1629, %v1616, %v1619
        %v1638 = vsel %vm1632, %v1625, 920167782
        %v1639 = vsel %vm1631, %v1622, %v1638
        %v1640 = vsel %vm1630, %v1637, %v1639
        %v1641 = vsel %vm1629, %v1619, %v1622
        %v1642 = vsel %vm1632, %v1628, 1326507024
        %v1643 = vsel %vm1631, %v1625, %v1642
        %v1644 = vsel %vm1630, %v1641, %v1643
        %v1645 = vshll.u32 %v1605, 8
        %v1646 = vand.u32 %v1645, 65535
        %v1647 = vshrl.u32 %v1645, 16
        %v1648 = vand.u32 %v1644, 65535
        %v1649 = vshrl.u32 %v1644, 16
        %v1650 = vmul.u32 %v1646, %v1648
        %v1651 = vmul.u32 %v1646, %v1649
        %v1652 = vmul.u32 %v1647, %v1648
        %v1653 = vmul.u32 %v1647, %v1649
        %v1654 = vshll.u32 %v1651, 16
        %v1655 = vshrl.u32 %v1651, 16
        %v1656 = vshll.u32 %v1652, 16
        %v1657 = vshrl.u32 %v1652, 16
        %vm1658 = vc.u32 %v1650, %v1654
        %v1659 = vsel %vm1658, 1, 0
        %v1660 = vadd.s32 %v1650, %v1654
        %v1661 = vadd.s32 %v1653, %v1659
        %vm1662 = vc.u32 %v1660, %v1656
        %v1663 = vsel %vm1662, 1, 0
        %v1664 = vadd.s32 %v1660, %v1656
        %v1665 = vadd.s32 %v1661, %v1663
        %v1666 = vadd.s32 %v1665, %v1655
        %v1667 = vadd.s32 %v1666, %v1657
        %v1668 = vand.u32 %v1645, 65535
        %v1669 = vshrl.u32 %v1645, 16
        %v1670 = vand.u32 %v1640, 65535
        %v1671 = vshrl.u32 %v1640, 16
        %v1672 = vmul.u32 %v1668, %v1670
        %v1673 = vmul.u32 %v1668, %v1671
        %v1674 = vmul.u32 %v1669, %v1670
        %v1675 = vmul.u32 %v1669, %v1671
        %v1676 = vshll.u32 %v1673, 16
        %v1677 = vshrl.u32 %v1673, 16
        %v1678 = vshll.u32 %v1674, 16
        %v1679 = vshrl.u32 %v1674, 16
        %vm1680 = vc.u32 %v1672, %v1676
        %v1681 = vsel %vm1680, 1, 0
        %v1682 = vadd.s32 %v1672, %v1676
        %v1683 = vadd.s32 %v1675, %v1681
        %vm1684 = vc.u32 %v1682, %v1678
        %v1685 = vsel %vm1684, 1, 0
        %v1686 = vadd.s32 %v1682, %v1678
        %v1687 = vadd.s32 %v1683, %v1685
        %v1688 = vadd.s32 %v1687, %v1677
        %v1689 = vadd.s32 %v1688, %v1679
        %v1690 = vmul.u32 %v1645, %v1636
        %v1691 = vadd.s32 %v1667, %v1686
        %vm1692 = vc.u32 %v1667, %v1686
        %v1693 = vadd.s32 %v1689, 1
        %v1694 = vsel %vm1692, %v1693, %v1689
        %v1695 = vadd.s32 %v1690, %v1694
        %v1696 = vadd.s32 %v1695, 536870912
        %v1697 = vshrl.u32 %v1696, 30
        %v1698 = vshll.u32 %v1697, 30
        %v1699 = vsub.s32 %v1695, %v1698
        %vm1700 = vcmp.lt.s32.totalorder %v1699, 0
        %v1701 = vsub.s32 0, %v1699
        %v1702 = vsel %vm1700, %v1701, %v1699
        %v1703 = vclz %v1702
        %v1704 = vsub.s32 %v1703, 2
        %vm1705 = vcmp.gt.s32.totalorder 0, %v1704
        %v1706 = vsel %vm1705, 0, %v1704
        %v1707 = vsub.s32 32, %v1706
        %v1708 = vshll.u32 %v1699, %v1706
        %v1709 = vshrl.u32 %v1691, %v1707
        %v1710 = vor.u32 %v1708, %v1709
        %v1711 = vsub.s32 4294967266, %v1706
        %v1712 = vadd.s32 %v1711, 127
        %v1713 = vshll.u32 %v1712, 23
        %v1714 = vor.u32 4788187, %v1713
        %v1715 = vand.u32 2147483647, %v1714
        %v1717 = vcvt.s32.f32 %v1710
        %v1718 = vmul.f32 %v1717, %v1715
        %v1719 = vxor.u32 %v1718, 2147483648
        %v1720 = vsel %vm1599, %v1719, %v1718
        %v1721 = vsub.s32 4, %v1697
        %v1722 = vsel %vm1599, %v1721, %v1697
        %v1723 = vsel %vm1598, %v1424, %v1720
        %v1724 = vsel %vm1598, 0, %v1722
        %v1725 = vmul.f32 %v1723, %v1723
        %v1726 = vmul.f32 %v1725, -0.001358992
        %v1727 = vadd.f32 %v1726, 0.041655596
        %v1728 = vmul.f32 %v1725, %v1727
        %v1729 = vadd.f32 %v1728, -0.4999988
        %v1730 = vmul.f32 %v1725, %v1729
        %v1731 = vadd.f32 1.0, %v1730
        %v1732 = vmul.f32 %v1723, %v1723
        %v1733 = vmul.f32 %v1732, -0.00019511016
        %v1734 = vadd.f32 %v1733, 0.008332121
        %v1735 = vmul.f32 %v1732, %v1734
        %v1736 = vadd.f32 %v1735, -0.16666654
        %v1737 = vmul.f32 %v1732, %v1736
        %v1738 = vadd.f32 %v1737, 1.0
        %v1739 = vmul.f32 %v1738, %v1723
        %vm1740 = vweird.f32 %v1424
        %v1741 = vadd.s32 %v1724, 3
        %v1742 = vand.u32 %v1741, 3
        %vm1743 = vcmp.lt.s32.totalorder %v1742, 2
        %vm1744 = vcmp.eq.s32.totalorder %v1742, 0
        %v1745 = vxor.u32 %v1739, 2147483648
        %v1746 = vsel %vm1744, %v1731, %v1745
        %vm1747 = vcmp.eq.s32.totalorder %v1742, 2
        %v1748 = vxor.u32 %v1731, 2147483648
        %v1749 = vsel %vm1747, %v1748, %v1739
        %v1750 = vsel %vm1743, %v1746, %v1749
        %v1751 = vsel %vm1740, nan, %v1750
        %v1752 = vand.u32 2147483647, %v1427
        %vm1753 = vcmp.le.f32.partialorder %v1752, 0.7853982
        %vm1754 = vcmp.lt.s32.totalorder %v1427, 0
        %v1755 = vand.u32 %v1427, 2139095040
        %v1756 = vshrl.u32 %v1755, 23
        %v1757 = vsub.s32 %v1756, 127
        %v1758 = vand.u32 2147483647, %v1427
        %v1759 = vand.u32 %v1758, 8388607
        %v1760 = vor.u32 %v1759, 8388608
        %v1761 = vsub.s32 0, %v1760
        %v1762 = vadd.s32 %v1757, 1
        %vm1763 = vcmp.gt.s32.totalorder %v1762, 0
        %v1764 = vsel %vm1763, %v1762, 0
        %v1765 = vshrl.u32 %v1764, 5
        %v1766 = vand.u32 %v1764, 31
        %v1767 = vsub.s32 32, %v1766
        %v1768 = vshrl.u32 683565275, %v1767
        %v1769 = vshll.u32 683565275, %v1766
        %v1770 = vshrl.u32 2475754826, %v1767
        %v1771 = vor.u32 %v1769, %v1770
        %v1772 = vshll.u32 2475754826, %v1766
        %v1773 = vshrl.u32 2131351028, %v1767
        %v1774 = vor.u32 %v1772, %v1773
        %v1775 = vshll.u32 2131351028, %v1766
        %v1776 = vshrl.u32 2102212464, %v1767
        %v1777 = vor.u32 %v1775, %v1776
        %v1778 = vshll.u32 2102212464, %v1766
        %v1779 = vshrl.u32 920167782, %v1767
        %v1780 = vor.u32 %v1778, %v1779
        %v1781 = vshll.u32 920167782, %v1766
        %v1782 = vshrl.u32 1326507024, %v1767
        %v1783 = vor.u32 %v1781, %v1782
        %vm1784 = vcmp.lt.s32.totalorder %v1765, 1
        %vm1785 = vcmp.lt.s32.totalorder %v1765, 2
        %vm1786 = vcmp.lt.s32.totalorder %v1765, 3
        %vm1787 = vcmp.lt.s32.totalorder %v1765, 4
        %v1788 = vsel %vm1784, %v1768, %v1771
        %v1789 = vsel %vm1787, %v1777, 2102212464
        %v1790 = vsel %vm1786, %v1774, %v1789
        %v1791 = vsel %vm1785, %v1788, %v1790
        %v1792 = vsel %vm1784, %v1771, %v1774
        %v1793 = vsel %vm1787, %v1780, 920167782
        %v1794 = vsel %vm1786, %v1777, %v1793
        %v1795 = vsel %vm1785, %v1792, %v1794
        %v1796 = vsel %vm1784, %v1774, %v1777
        %v1797 = vsel %vm1787, %v1783, 1326507024
        %v1798 = vsel %vm1786, %v1780, %v1797
        %v1799 = vsel %vm1785, %v1796, %v1798
        %v1800 = vshll.u32 %v1760, 8
        %v1801 = vand.u32 %v1800, 65535
        %v1802 = vshrl.u32 %v1800, 16
        %v1803 = vand.u32 %v1799, 65535
        %v1804 = vshrl.u32 %v1799, 16
        %v1805 = vmul.u32 %v1801, %v1803
        %v1806 = vmul.u32 %v1801, %v1804
        %v1807 = vmul.u32 %v1802, %v1803
        %v1808 = vmul.u32 %v1802, %v1804
        %v1809 = vshll.u32 %v1806, 16
        %v1810 = vshrl.u32 %v1806, 16
        %v1811 = vshll.u32 %v1807, 16
        %v1812 = vshrl.u32 %v1807, 16
        %vm1813 = vc.u32 %v1805, %v1809
        %v1814 = vsel %vm1813, 1, 0
        %v1815 = vadd.s32 %v1805, %v1809
        %v1816 = vadd.s32 %v1808, %v1814
        %vm1817 = vc.u32 %v1815, %v1811
        %v1818 = vsel %vm1817, 1, 0
        %v1819 = vadd.s32 %v1815, %v1811
        %v1820 = vadd.s32 %v1816, %v1818
        %v1821 = vadd.s32 %v1820, %v1810
        %v1822 = vadd.s32 %v1821, %v1812
        %v1823 = vand.u32 %v1800, 65535
        %v1824 = vshrl.u32 %v1800, 16
        %v1825 = vand.u32 %v1795, 65535
        %v1826 = vshrl.u32 %v1795, 16
        %v1827 = vmul.u32 %v1823, %v1825
        %v1828 = vmul.u32 %v1823, %v1826
        %v1829 = vmul.u32 %v1824, %v1825
        %v1830 = vmul.u32 %v1824, %v1826
        %v1831 = vshll.u32 %v1828, 16
        %v1832 = vshrl.u32 %v1828, 16
        %v1833 = vshll.u32 %v1829, 16
        %v1834 = vshrl.u32 %v1829, 16
        %vm1835 = vc.u32 %v1827, %v1831
        %v1836 = vsel %vm1835, 1, 0
        %v1837 = vadd.s32 %v1827, %v1831
        %v1838 = vadd.s32 %v1830, %v1836
        %vm1839 = vc.u32 %v1837, %v1833
        %v1840 = vsel %vm1839, 1, 0
        %v1841 = vadd.s32 %v1837, %v1833
        %v1842 = vadd.s32 %v1838, %v1840
        %v1843 = vadd.s32 %v1842, %v1832
        %v1844 = vadd.s32 %v1843, %v1834
        %v1845 = vmul.u32 %v1800, %v1791
        %v1846 = vadd.s32 %v1822, %v1841
        %vm1847 = vc.u32 %v1822, %v1841
        %v1848 = vadd.s32 %v1844, 1
        %v1849 = vsel %vm1847, %v1848, %v1844
        %v1850 = vadd.s32 %v1845, %v1849
        %v1851 = vadd.s32 %v1850, 536870912
        %v1852 = vshrl.u32 %v1851, 30
        %v1853 = vshll.u32 %v1852, 30
        %v1854 = vsub.s32 %v1850, %v1853
        %vm1855 = vcmp.lt.s32.totalorder %v1854, 0
        %v1856 = vsub.s32 0, %v1854
        %v1857 = vsel %vm1855, %v1856, %v1854
        %v1858 = vclz %v1857
        %v1859 = vsub.s32 %v1858, 2
        %vm1860 = vcmp.gt.s32.totalorder 0, %v1859
        %v1861 = vsel %vm1860, 0, %v1859
        %v1862 = vsub.s32 32, %v1861
        %v1863 = vshll.u32 %v1854, %v1861
        %v1864 = vshrl.u32 %v1846, %v1862
        %v1865 = vor.u32 %v1863, %v1864
        %v1866 = vsub.s32 4294967266, %v1861
        %v1867 = vadd.s32 %v1866, 127
        %v1868 = vshll.u32 %v1867, 23
        %v1869 = vor.u32 4788187, %v1868
        %v1870 = vand.u32 2147483647, %v1869
        %v1872 = vcvt.s32.f32 %v1865
        %v1873 = vmul.f32 %v1872, %v1870
        %v1874 = vxor.u32 %v1873, 2147483648
        %v1875 = vsel %vm1754, %v1874, %v1873
        %v1876 = vsub.s32 4, %v1852
        %v1877 = vsel %vm1754, %v1876, %v1852
        %v1878 = vsel %vm1753, %v1427, %v1875
        %v1879 = vsel %vm1753, 0, %v1877
        %v1880 = vmul.f32 %v1878, %v1878
        %v1881 = vmul.f32 %v1880, -0.001358992
        %v1882 = vadd.f32 %v1881, 0.041655596
        %v1883 = vmul.f32 %v1880, %v1882
        %v1884 = vadd.f32 %v1883, -0.4999988
        %v1885 = vmul.f32 %v1880, %v1884
        %v1886 = vadd.f32 1.0, %v1885
        %v1887 = vmul.f32 %v1878, %v1878
        %v1888 = vmul.f32 %v1887, -0.00019511016
        %v1889 = vadd.f32 %v1888, 0.008332121
        %v1890 = vmul.f32 %v1887, %v1889
        %v1891 = vadd.f32 %v1890, -0.16666654
        %v1892 = vmul.f32 %v1887, %v1891
        %v1893 = vadd.f32 %v1892, 1.0
        %v1894 = vmul.f32 %v1893, %v1878
        %vm1895 = vweird.f32 %v1427
        %v1896 = vadd.s32 %v1879, 3
        %v1897 = vand.u32 %v1896, 3
        %vm1898 = vcmp.lt.s32.totalorder %v1897, 2
        %vm1899 = vcmp.eq.s32.totalorder %v1897, 0
        %v1900 = vxor.u32 %v1894, 2147483648
        %v1901 = vsel %vm1899, %v1886, %v1900
        %vm1902 = vcmp.eq.s32.totalorder %v1897, 2
        %v1903 = vxor.u32 %v1886, 2147483648
        %v1904 = vsel %vm1902, %v1903, %v1894
        %v1905 = vsel %vm1898, %v1901, %v1904
        %v1906 = vsel %vm1895, nan, %v1905
        %v1907 = vand.u32 2147483647, %v1429
        %vm1908 = vcmp.le.f32.partialorder %v1907, 0.7853982
        %vm1909 = vcmp.lt.s32.totalorder %v1429, 0
        %v1910 = vand.u32 %v1429, 2139095040
        %v1911 = vshrl.u32 %v1910, 23
        %v1912 = vsub.s32 %v1911, 127
        %v1913 = vand.u32 2147483647, %v1429
        %v1914 = vand.u32 %v1913, 8388607
        %v1915 = vor.u32 %v1914, 8388608
        %v1916 = vsub.s32 0, %v1915
        %v1917 = vadd.s32 %v1912, 1
        %vm1918 = vcmp.gt.s32.totalorder %v1917, 0
        %v1919 = vsel %vm1918, %v1917, 0
        %v1920 = vshrl.u32 %v1919, 5
        %v1921 = vand.u32 %v1919, 31
        %v1922 = vsub.s32 32, %v1921
        %v1923 = vshrl.u32 683565275, %v1922
        %v1924 = vshll.u32 683565275, %v1921
        %v1925 = vshrl.u32 2475754826, %v1922
        %v1926 = vor.u32 %v1924, %v1925
        %v1927 = vshll.u32 2475754826, %v1921
        %v1928 = vshrl.u32 2131351028, %v1922
        %v1929 = vor.u32 %v1927, %v1928
        %v1930 = vshll.u32 2131351028, %v1921
        %v1931 = vshrl.u32 2102212464, %v1922
        %v1932 = vor.u32 %v1930, %v1931
        %v1933 = vshll.u32 2102212464, %v1921
        %v1934 = vshrl.u32 920167782, %v1922
        %v1935 = vor.u32 %v1933, %v1934
        %v1936 = vshll.u32 920167782, %v1921
        %v1937 = vshrl.u32 1326507024, %v1922
        %v1938 = vor.u32 %v1936, %v1937
        %vm1939 = vcmp.lt.s32.totalorder %v1920, 1
        %vm1940 = vcmp.lt.s32.totalorder %v1920, 2
        %vm1941 = vcmp.lt.s32.totalorder %v1920, 3
        %vm1942 = vcmp.lt.s32.totalorder %v1920, 4
        %v1943 = vsel %vm1939, %v1923, %v1926
        %v1944 = vsel %vm1942, %v1932, 2102212464
        %v1945 = vsel %vm1941, %v1929, %v1944
        %v1946 = vsel %vm1940, %v1943, %v1945
        %v1947 = vsel %vm1939, %v1926, %v1929
        %v1948 = vsel %vm1942, %v1935, 920167782
        %v1949 = vsel %vm1941, %v1932, %v1948
        %v1950 = vsel %vm1940, %v1947, %v1949
        %v1951 = vsel %vm1939, %v1929, %v1932
        %v1952 = vsel %vm1942, %v1938, 1326507024
        %v1953 = vsel %vm1941, %v1935, %v1952
        %v1954 = vsel %vm1940, %v1951, %v1953
        %v1955 = vshll.u32 %v1915, 8
        %v1956 = vand.u32 %v1955, 65535
        %v1957 = vshrl.u32 %v1955, 16
        %v1958 = vand.u32 %v1954, 65535
        %v1959 = vshrl.u32 %v1954, 16
        %v1960 = vmul.u32 %v1956, %v1958
        %v1961 = vmul.u32 %v1956, %v1959
        %v1962 = vmul.u32 %v1957, %v1958
        %v1963 = vmul.u32 %v1957, %v1959
        %v1964 = vshll.u32 %v1961, 16
        %v1965 = vshrl.u32 %v1961, 16
        %v1966 = vshll.u32 %v1962, 16
        %v1967 = vshrl.u32 %v1962, 16
        %vm1968 = vc.u32 %v1960, %v1964
        %v1969 = vsel %vm1968, 1, 0
        %v1970 = vadd.s32 %v1960, %v1964
        %v1971 = vadd.s32 %v1963, %v1969
        %vm1972 = vc.u32 %v1970, %v1966
        %v1973 = vsel %vm1972, 1, 0
        %v1974 = vadd.s32 %v1970, %v1966
        %v1975 = vadd.s32 %v1971, %v1973
        %v1976 = vadd.s32 %v1975, %v1965
        %v1977 = vadd.s32 %v1976, %v1967
        %v1978 = vand.u32 %v1955, 65535
        %v1979 = vshrl.u32 %v1955, 16
        %v1980 = vand.u32 %v1950, 65535
        %v1981 = vshrl.u32 %v1950, 16
        %v1982 = vmul.u32 %v1978, %v1980
        %v1983 = vmul.u32 %v1978, %v1981
        %v1984 = vmul.u32 %v1979, %v1980
        %v1985 = vmul.u32 %v1979, %v1981
        %v1986 = vshll.u32 %v1983, 16
        %v1987 = vshrl.u32 %v1983, 16
        %v1988 = vshll.u32 %v1984, 16
        %v1989 = vshrl.u32 %v1984, 16
        %vm1990 = vc.u32 %v1982, %v1986
        %v1991 = vsel %vm1990, 1, 0
        %v1992 = vadd.s32 %v1982, %v1986
        %v1993 = vadd.s32 %v1985, %v1991
        %vm1994 = vc.u32 %v1992, %v1988
        %v1995 = vsel %vm1994, 1, 0
        %v1996 = vadd.s32 %v1992, %v1988
        %v1997 = vadd.s32 %v1993, %v1995
        %v1998 = vadd.s32 %v1997, %v1987
        %v1999 = vadd.s32 %v1998, %v1989
        %v2000 = vmul.u32 %v1955, %v1946
        %v2001 = vadd.s32 %v1977, %v1996
        %vm2002 = vc.u32 %v1977, %v1996
        %v2003 = vadd.s32 %v1999, 1
        %v2004 = vsel %vm2002, %v2003, %v1999
        %v2005 = vadd.s32 %v2000, %v2004
        %v2006 = vadd.s32 %v2005, 536870912
        %v2007 = vshrl.u32 %v2006, 30
        %v2008 = vshll.u32 %v2007, 30
        %v2009 = vsub.s32 %v2005, %v2008
        %vm2010 = vcmp.lt.s32.totalorder %v2009, 0
        %v2011 = vsub.s32 0, %v2009
        %v2012 = vsel %vm2010, %v2011, %v2009
        %v2013 = vclz %v2012
        %v2014 = vsub.s32 %v2013, 2
        %vm2015 = vcmp.gt.s32.totalorder 0, %v2014
        %v2016 = vsel %vm2015, 0, %v2014
        %v2017 = vsub.s32 32, %v2016
        %v2018 = vshll.u32 %v2009, %v2016
        %v2019 = vshrl.u32 %v2001, %v2017
        %v2020 = vor.u32 %v2018, %v2019
        %v2021 = vsub.s32 4294967266, %v2016
        %v2022 = vadd.s32 %v2021, 127
        %v2023 = vshll.u32 %v2022, 23
        %v2024 = vor.u32 4788187, %v2023
        %v2025 = vand.u32 2147483647, %v2024
        %v2027 = vcvt.s32.f32 %v2020
        %v2028 = vmul.f32 %v2027, %v2025
        %v2029 = vxor.u32 %v2028, 2147483648
        %v2030 = vsel %vm1909, %v2029, %v2028
        %v2031 = vsub.s32 4, %v2007
        %v2032 = vsel %vm1909, %v2031, %v2007
        %v2033 = vsel %vm1908, %v1429, %v2030
        %v2034 = vsel %vm1908, 0, %v2032
        %v2035 = vmul.f32 %v2033, %v2033
        %v2036 = vmul.f32 %v2035, -0.001358992
        %v2037 = vadd.f32 %v2036, 0.041655596
        %v2038 = vmul.f32 %v2035, %v2037
        %v2039 = vadd.f32 %v2038, -0.4999988
        %v2040 = vmul.f32 %v2035, %v2039
        %v2041 = vadd.f32 1.0, %v2040
        %v2042 = vmul.f32 %v2033, %v2033
        %v2043 = vmul.f32 %v2042, -0.00019511016
        %v2044 = vadd.f32 %v2043, 0.008332121
        %v2045 = vmul.f32 %v2042, %v2044
        %v2046 = vadd.f32 %v2045, -0.16666654
        %v2047 = vmul.f32 %v2042, %v2046
        %v2048 = vadd.f32 %v2047, 1.0
        %v2049 = vmul.f32 %v2048, %v2033
        %vm2050 = vweird.f32 %v1429
        %v2051 = vadd.s32 %v2034, 3
        %v2052 = vand.u32 %v2051, 3
        %vm2053 = vcmp.lt.s32.totalorder %v2052, 2
        %vm2054 = vcmp.eq.s32.totalorder %v2052, 0
        %v2055 = vxor.u32 %v2049, 2147483648
        %v2056 = vsel %vm2054, %v2041, %v2055
        %vm2057 = vcmp.eq.s32.totalorder %v2052, 2
        %v2058 = vxor.u32 %v2041, 2147483648
        %v2059 = vsel %vm2057, %v2058, %v2049
        %v2060 = vsel %vm2053, %v2056, %v2059
        %v2061 = vsel %vm2050, nan, %v2060
        %v2062 = vand.u32 2147483647, %v1432
        %vm2063 = vcmp.le.f32.partialorder %v2062, 0.7853982
        %vm2064 = vcmp.lt.s32.totalorder %v1432, 0
        %v2065 = vand.u32 %v1432, 2139095040
        %v2066 = vshrl.u32 %v2065, 23
        %v2067 = vsub.s32 %v2066, 127
        %v2068 = vand.u32 2147483647, %v1432
        %v2069 = vand.u32 %v2068, 8388607
        %v2070 = vor.u32 %v2069, 8388608
        %v2071 = vsub.s32 0, %v2070
        %v2072 = vadd.s32 %v2067, 1
        %vm2073 = vcmp.gt.s32.totalorder %v2072, 0
        %v2074 = vsel %vm2073, %v2072, 0
        %v2075 = vshrl.u32 %v2074, 5
        %v2076 = vand.u32 %v2074, 31
        %v2077 = vsub.s32 32, %v2076
        %v2078 = vshrl.u32 683565275, %v2077
        %v2079 = vshll.u32 683565275, %v2076
        %v2080 = vshrl.u32 2475754826, %v2077
        %v2081 = vor.u32 %v2079, %v2080
        %v2082 = vshll.u32 2475754826, %v2076
        %v2083 = vshrl.u32 2131351028, %v2077
        %v2084 = vor.u32 %v2082, %v2083
        %v2085 = vshll.u32 2131351028, %v2076
        %v2086 = vshrl.u32 2102212464, %v2077
        %v2087 = vor.u32 %v2085, %v2086
        %v2088 = vshll.u32 2102212464, %v2076
        %v2089 = vshrl.u32 920167782, %v2077
        %v2090 = vor.u32 %v2088, %v2089
        %v2091 = vshll.u32 920167782, %v2076
        %v2092 = vshrl.u32 1326507024, %v2077
        %v2093 = vor.u32 %v2091, %v2092
        %vm2094 = vcmp.lt.s32.totalorder %v2075, 1
        %vm2095 = vcmp.lt.s32.totalorder %v2075, 2
        %vm2096 = vcmp.lt.s32.totalorder %v2075, 3
        %vm2097 = vcmp.lt.s32.totalorder %v2075, 4
        %v2098 = vsel %vm2094, %v2078, %v2081
        %v2099 = vsel %vm2097, %v2087, 2102212464
        %v2100 = vsel %vm2096, %v2084, %v2099
        %v2101 = vsel %vm2095, %v2098, %v2100
        %v2102 = vsel %vm2094, %v2081, %v2084
        %v2103 = vsel %vm2097, %v2090, 920167782
        %v2104 = vsel %vm2096, %v2087, %v2103
        %v2105 = vsel %vm2095, %v2102, %v2104
        %v2106 = vsel %vm2094, %v2084, %v2087
        %v2107 = vsel %vm2097, %v2093, 1326507024
        %v2108 = vsel %vm2096, %v2090, %v2107
        %v2109 = vsel %vm2095, %v2106, %v2108
        %v2110 = vshll.u32 %v2070, 8
        %v2111 = vand.u32 %v2110, 65535
        %v2112 = vshrl.u32 %v2110, 16
        %v2113 = vand.u32 %v2109, 65535
        %v2114 = vshrl.u32 %v2109, 16
        %v2115 = vmul.u32 %v2111, %v2113
        %v2116 = vmul.u32 %v2111, %v2114
        %v2117 = vmul.u32 %v2112, %v2113
        %v2118 = vmul.u32 %v2112, %v2114
        %v2119 = vshll.u32 %v2116, 16
        %v2120 = vshrl.u32 %v2116, 16
        %v2121 = vshll.u32 %v2117, 16
        %v2122 = vshrl.u32 %v2117, 16
        %vm2123 = vc.u32 %v2115, %v2119
        %v2124 = vsel %vm2123, 1, 0
        %v2125 = vadd.s32 %v2115, %v2119
        %v2126 = vadd.s32 %v2118, %v2124
        %vm2127 = vc.u32 %v2125, %v2121
        %v2128 = vsel %vm2127, 1, 0
        %v2129 = vadd.s32 %v2125, %v2121
        %v2130 = vadd.s32 %v2126, %v2128
        %v2131 = vadd.s32 %v2130, %v2120
        %v2132 = vadd.s32 %v2131, %v2122
        %v2133 = vand.u32 %v2110, 65535
        %v2134 = vshrl.u32 %v2110, 16
        %v2135 = vand.u32 %v2105, 65535
        %v2136 = vshrl.u32 %v2105, 16
        %v2137 = vmul.u32 %v2133, %v2135
        %v2138 = vmul.u32 %v2133, %v2136
        %v2139 = vmul.u32 %v2134, %v2135
        %v2140 = vmul.u32 %v2134, %v2136
        %v2141 = vshll.u32 %v2138, 16
        %v2142 = vshrl.u32 %v2138, 16
        %v2143 = vshll.u32 %v2139, 16
        %v2144 = vshrl.u32 %v2139, 16
        %vm2145 = vc.u32 %v2137, %v2141
        %v2146 = vsel %vm2145, 1, 0
        %v2147 = vadd.s32 %v2137, %v2141
        %v2148 = vadd.s32 %v2140, %v2146
        %vm2149 = vc.u32 %v2147, %v2143
        %v2150 = vsel %vm2149, 1, 0
        %v2151 = vadd.s32 %v2147, %v2143
        %v2152 = vadd.s32 %v2148, %v2150
        %v2153 = vadd.s32 %v2152, %v2142
        %v2154 = vadd.s32 %v2153, %v2144
        %v2155 = vmul.u32 %v2110, %v2101
        %v2156 = vadd.s32 %v2132, %v2151
        %vm2157 = vc.u32 %v2132, %v2151
        %v2158 = vadd.s32 %v2154, 1
        %v2159 = vsel %vm2157, %v2158, %v2154
        %v2160 = vadd.s32 %v2155, %v2159
        %v2161 = vadd.s32 %v2160, 536870912
        %v2162 = vshrl.u32 %v2161, 30
        %v2163 = vshll.u32 %v2162, 30
        %v2164 = vsub.s32 %v2160, %v2163
        %vm2165 = vcmp.lt.s32.totalorder %v2164, 0
        %v2166 = vsub.s32 0, %v2164
        %v2167 = vsel %vm2165, %v2166, %v2164
        %v2168 = vclz %v2167
        %v2169 = vsub.s32 %v2168, 2
        %vm2170 = vcmp.gt.s32.totalorder 0, %v2169
        %v2171 = vsel %vm2170, 0, %v2169
        %v2172 = vsub.s32 32, %v2171
        %v2173 = vshll.u32 %v2164, %v2171
        %v2174 = vshrl.u32 %v2156, %v2172
        %v2175 = vor.u32 %v2173, %v2174
        %v2176 = vsub.s32 4294967266, %v2171
        %v2177 = vadd.s32 %v2176, 127
        %v2178 = vshll.u32 %v2177, 23
        %v2179 = vor.u32 4788187, %v2178
        %v2180 = vand.u32 2147483647, %v2179
        %v2182 = vcvt.s32.f32 %v2175
        %v2183 = vmul.f32 %v2182, %v2180
        %v2184 = vxor.u32 %v2183, 2147483648
        %v2185 = vsel %vm2064, %v2184, %v2183
        %v2186 = vsub.s32 4, %v2162
        %v2187 = vsel %vm2064, %v2186, %v2162
        %v2188 = vsel %vm2063, %v1432, %v2185
        %v2189 = vsel %vm2063, 0, %v2187
        %v2190 = vmul.f32 %v2188, %v2188
        %v2191 = vmul.f32 %v2190, -0.001358992
        %v2192 = vadd.f32 %v2191, 0.041655596
        %v2193 = vmul.f32 %v2190, %v2192
        %v2194 = vadd.f32 %v2193, -0.4999988
        %v2195 = vmul.f32 %v2190, %v2194
        %v2196 = vadd.f32 1.0, %v2195
        %v2197 = vmul.f32 %v2188, %v2188
        %v2198 = vmul.f32 %v2197, -0.00019511016
        %v2199 = vadd.f32 %v2198, 0.008332121
        %v2200 = vmul.f32 %v2197, %v2199
        %v2201 = vadd.f32 %v2200, -0.16666654
        %v2202 = vmul.f32 %v2197, %v2201
        %v2203 = vadd.f32 %v2202, 1.0
        %v2204 = vmul.f32 %v2203, %v2188
        %vm2205 = vweird.f32 %v1432
        %v2206 = vadd.s32 %v2189, 3
        %v2207 = vand.u32 %v2206, 3
        %vm2208 = vcmp.lt.s32.totalorder %v2207, 2
        %vm2209 = vcmp.eq.s32.totalorder %v2207, 0
        %v2210 = vxor.u32 %v2204, 2147483648
        %v2211 = vsel %vm2209, %v2196, %v2210
        %vm2212 = vcmp.eq.s32.totalorder %v2207, 2
        %v2213 = vxor.u32 %v2196, 2147483648
        %v2214 = vsel %vm2212, %v2213, %v2204
        %v2215 = vsel %vm2208, %v2211, %v2214
        %v2216 = vsel %vm2205, nan, %v2215
        %v2217 = vand.u32 2147483647, %v1434
        %vm2218 = vcmp.le.f32.partialorder %v2217, 0.7853982
        %vm2219 = vcmp.lt.s32.totalorder %v1434, 0
        %v2220 = vand.u32 %v1434, 2139095040
        %v2221 = vshrl.u32 %v2220, 23
        %v2222 = vsub.s32 %v2221, 127
        %v2223 = vand.u32 2147483647, %v1434
        %v2224 = vand.u32 %v2223, 8388607
        %v2225 = vor.u32 %v2224, 8388608
        %v2226 = vsub.s32 0, %v2225
        %v2227 = vadd.s32 %v2222, 1
        %vm2228 = vcmp.gt.s32.totalorder %v2227, 0
        %v2229 = vsel %vm2228, %v2227, 0
        %v2230 = vshrl.u32 %v2229, 5
        %v2231 = vand.u32 %v2229, 31
        %v2232 = vsub.s32 32, %v2231
        %v2233 = vshrl.u32 683565275, %v2232
        %v2234 = vshll.u32 683565275, %v2231
        %v2235 = vshrl.u32 2475754826, %v2232
        %v2236 = vor.u32 %v2234, %v2235
        %v2237 = vshll.u32 2475754826, %v2231
        %v2238 = vshrl.u32 2131351028, %v2232
        %v2239 = vor.u32 %v2237, %v2238
        %v2240 = vshll.u32 2131351028, %v2231
        %v2241 = vshrl.u32 2102212464, %v2232
        %v2242 = vor.u32 %v2240, %v2241
        %v2243 = vshll.u32 2102212464, %v2231
        %v2244 = vshrl.u32 920167782, %v2232
        %v2245 = vor.u32 %v2243, %v2244
        %v2246 = vshll.u32 920167782, %v2231
        %v2247 = vshrl.u32 1326507024, %v2232
        %v2248 = vor.u32 %v2246, %v2247
        %vm2249 = vcmp.lt.s32.totalorder %v2230, 1
        %vm2250 = vcmp.lt.s32.totalorder %v2230, 2
        %vm2251 = vcmp.lt.s32.totalorder %v2230, 3
        %vm2252 = vcmp.lt.s32.totalorder %v2230, 4
        %v2253 = vsel %vm2249, %v2233, %v2236
        %v2254 = vsel %vm2252, %v2242, 2102212464
        %v2255 = vsel %vm2251, %v2239, %v2254
        %v2256 = vsel %vm2250, %v2253, %v2255
        %v2257 = vsel %vm2249, %v2236, %v2239
        %v2258 = vsel %vm2252, %v2245, 920167782
        %v2259 = vsel %vm2251, %v2242, %v2258
        %v2260 = vsel %vm2250, %v2257, %v2259
        %v2261 = vsel %vm2249, %v2239, %v2242
        %v2262 = vsel %vm2252, %v2248, 1326507024
        %v2263 = vsel %vm2251, %v2245, %v2262
        %v2264 = vsel %vm2250, %v2261, %v2263
        %v2265 = vshll.u32 %v2225, 8
        %v2266 = vand.u32 %v2265, 65535
        %v2267 = vshrl.u32 %v2265, 16
        %v2268 = vand.u32 %v2264, 65535
        %v2269 = vshrl.u32 %v2264, 16
        %v2270 = vmul.u32 %v2266, %v2268
        %v2271 = vmul.u32 %v2266, %v2269
        %v2272 = vmul.u32 %v2267, %v2268
        %v2273 = vmul.u32 %v2267, %v2269
        %v2274 = vshll.u32 %v2271, 16
        %v2275 = vshrl.u32 %v2271, 16
        %v2276 = vshll.u32 %v2272, 16
        %v2277 = vshrl.u32 %v2272, 16
        %vm2278 = vc.u32 %v2270, %v2274
        %v2279 = vsel %vm2278, 1, 0
        %v2280 = vadd.s32 %v2270, %v2274
        %v2281 = vadd.s32 %v2273, %v2279
        %vm2282 = vc.u32 %v2280, %v2276
        %v2283 = vsel %vm2282, 1, 0
        %v2284 = vadd.s32 %v2280, %v2276
        %v2285 = vadd.s32 %v2281, %v2283
        %v2286 = vadd.s32 %v2285, %v2275
        %v2287 = vadd.s32 %v2286, %v2277
        %v2288 = vand.u32 %v2265, 65535
        %v2289 = vshrl.u32 %v2265, 16
        %v2290 = vand.u32 %v2260, 65535
        %v2291 = vshrl.u32 %v2260, 16
        %v2292 = vmul.u32 %v2288, %v2290
        %v2293 = vmul.u32 %v2288, %v2291
        %v2294 = vmul.u32 %v2289, %v2290
        %v2295 = vmul.u32 %v2289, %v2291
        %v2296 = vshll.u32 %v2293, 16
        %v2297 = vshrl.u32 %v2293, 16
        %v2298 = vshll.u32 %v2294, 16
        %v2299 = vshrl.u32 %v2294, 16
        %vm2300 = vc.u32 %v2292, %v2296
        %v2301 = vsel %vm2300, 1, 0
        %v2302 = vadd.s32 %v2292, %v2296
        %v2303 = vadd.s32 %v2295, %v2301
        %vm2304 = vc.u32 %v2302, %v2298
        %v2305 = vsel %vm2304, 1, 0
        %v2306 = vadd.s32 %v2302, %v2298
        %v2307 = vadd.s32 %v2303, %v2305
        %v2308 = vadd.s32 %v2307, %v2297
        %v2309 = vadd.s32 %v2308, %v2299
        %v2310 = vmul.u32 %v2265, %v2256
        %v2311 = vadd.s32 %v2287, %v2306
        %vm2312 = vc.u32 %v2287, %v2306
        %v2313 = vadd.s32 %v2309, 1
        %v2314 = vsel %vm2312, %v2313, %v2309
        %v2315 = vadd.s32 %v2310, %v2314
        %v2316 = vadd.s32 %v2315, 536870912
        %v2317 = vshrl.u32 %v2316, 30
        %v2318 = vshll.u32 %v2317, 30
        %v2319 = vsub.s32 %v2315, %v2318
        %vm2320 = vcmp.lt.s32.totalorder %v2319, 0
        %v2321 = vsub.s32 0, %v2319
        %v2322 = vsel %vm2320, %v2321, %v2319
        %v2323 = vclz %v2322
        %v2324 = vsub.s32 %v2323, 2
        %vm2325 = vcmp.gt.s32.totalorder 0, %v2324
        %v2326 = vsel %vm2325, 0, %v2324
        %v2327 = vsub.s32 32, %v2326
        %v2328 = vshll.u32 %v2319, %v2326
        %v2329 = vshrl.u32 %v2311, %v2327
        %v2330 = vor.u32 %v2328, %v2329
        %v2331 = vsub.s32 4294967266, %v2326
        %v2332 = vadd.s32 %v2331, 127
        %v2333 = vshll.u32 %v2332, 23
        %v2334 = vor.u32 4788187, %v2333
        %v2335 = vand.u32 2147483647, %v2334
        %v2337 = vcvt.s32.f32 %v2330
        %v2338 = vmul.f32 %v2337, %v2335
        %v2339 = vxor.u32 %v2338, 2147483648
        %v2340 = vsel %vm2219, %v2339, %v2338
        %v2341 = vsub.s32 4, %v2317
        %v2342 = vsel %vm2219, %v2341, %v2317
        %v2343 = vsel %vm2218, %v1434, %v2340
        %v2344 = vsel %vm2218, 0, %v2342
        %v2345 = vmul.f32 %v2343, %v2343
        %v2346 = vmul.f32 %v2345, -0.001358992
        %v2347 = vadd.f32 %v2346, 0.041655596
        %v2348 = vmul.f32 %v2345, %v2347
        %v2349 = vadd.f32 %v2348, -0.4999988
        %v2350 = vmul.f32 %v2345, %v2349
        %v2351 = vadd.f32 1.0, %v2350
        %v2352 = vmul.f32 %v2343, %v2343
        %v2353 = vmul.f32 %v2352, -0.00019511016
        %v2354 = vadd.f32 %v2353, 0.008332121
        %v2355 = vmul.f32 %v2352, %v2354
        %v2356 = vadd.f32 %v2355, -0.16666654
        %v2357 = vmul.f32 %v2352, %v2356
        %v2358 = vadd.f32 %v2357, 1.0
        %v2359 = vmul.f32 %v2358, %v2343
        %vm2360 = vweird.f32 %v1434
        %v2361 = vadd.s32 %v2344, 3
        %v2362 = vand.u32 %v2361, 3
        %vm2363 = vcmp.lt.s32.totalorder %v2362, 2
        %vm2364 = vcmp.eq.s32.totalorder %v2362, 0
        %v2365 = vxor.u32 %v2359, 2147483648
        %v2366 = vsel %vm2364, %v2351, %v2365
        %vm2367 = vcmp.eq.s32.totalorder %v2362, 2
        %v2368 = vxor.u32 %v2351, 2147483648
        %v2369 = vsel %vm2367, %v2368, %v2359
        %v2370 = vsel %vm2363, %v2366, %v2369
        %v2371 = vsel %vm2360, nan, %v2370
        %v2372 = vand.u32 2147483647, %v1437
        %vm2373 = vcmp.le.f32.partialorder %v2372, 0.7853982
        %vm2374 = vcmp.lt.s32.totalorder %v1437, 0
        %v2375 = vand.u32 %v1437, 2139095040
        %v2376 = vshrl.u32 %v2375, 23
        %v2377 = vsub.s32 %v2376, 127
        %v2378 = vand.u32 2147483647, %v1437
        %v2379 = vand.u32 %v2378, 8388607
        %v2380 = vor.u32 %v2379, 8388608
        %v2381 = vsub.s32 0, %v2380
        %v2382 = vadd.s32 %v2377, 1
        %vm2383 = vcmp.gt.s32.totalorder %v2382, 0
        %v2384 = vsel %vm2383, %v2382, 0
        %v2385 = vshrl.u32 %v2384, 5
        %v2386 = vand.u32 %v2384, 31
        %v2387 = vsub.s32 32, %v2386
        %v2388 = vshrl.u32 683565275, %v2387
        %v2389 = vshll.u32 683565275, %v2386
        %v2390 = vshrl.u32 2475754826, %v2387
        %v2391 = vor.u32 %v2389, %v2390
        %v2392 = vshll.u32 2475754826, %v2386
        %v2393 = vshrl.u32 2131351028, %v2387
        %v2394 = vor.u32 %v2392, %v2393
        %v2395 = vshll.u32 2131351028, %v2386
        %v2396 = vshrl.u32 2102212464, %v2387
        %v2397 = vor.u32 %v2395, %v2396
        %v2398 = vshll.u32 2102212464, %v2386
        %v2399 = vshrl.u32 920167782, %v2387
        %v2400 = vor.u32 %v2398, %v2399
        %v2401 = vshll.u32 920167782, %v2386
        %v2402 = vshrl.u32 1326507024, %v2387
        %v2403 = vor.u32 %v2401, %v2402
        %vm2404 = vcmp.lt.s32.totalorder %v2385, 1
        %vm2405 = vcmp.lt.s32.totalorder %v2385, 2
        %vm2406 = vcmp.lt.s32.totalorder %v2385, 3
        %vm2407 = vcmp.lt.s32.totalorder %v2385, 4
        %v2408 = vsel %vm2404, %v2388, %v2391
        %v2409 = vsel %vm2407, %v2397, 2102212464
        %v2410 = vsel %vm2406, %v2394, %v2409
        %v2411 = vsel %vm2405, %v2408, %v2410
        %v2412 = vsel %vm2404, %v2391, %v2394
        %v2413 = vsel %vm2407, %v2400, 920167782
        %v2414 = vsel %vm2406, %v2397, %v2413
        %v2415 = vsel %vm2405, %v2412, %v2414
        %v2416 = vsel %vm2404, %v2394, %v2397
        %v2417 = vsel %vm2407, %v2403, 1326507024
        %v2418 = vsel %vm2406, %v2400, %v2417
        %v2419 = vsel %vm2405, %v2416, %v2418
        %v2420 = vshll.u32 %v2380, 8
        %v2421 = vand.u32 %v2420, 65535
        %v2422 = vshrl.u32 %v2420, 16
        %v2423 = vand.u32 %v2419, 65535
        %v2424 = vshrl.u32 %v2419, 16
        %v2425 = vmul.u32 %v2421, %v2423
        %v2426 = vmul.u32 %v2421, %v2424
        %v2427 = vmul.u32 %v2422, %v2423
        %v2428 = vmul.u32 %v2422, %v2424
        %v2429 = vshll.u32 %v2426, 16
        %v2430 = vshrl.u32 %v2426, 16
        %v2431 = vshll.u32 %v2427, 16
        %v2432 = vshrl.u32 %v2427, 16
        %vm2433 = vc.u32 %v2425, %v2429
        %v2434 = vsel %vm2433, 1, 0
        %v2435 = vadd.s32 %v2425, %v2429
        %v2436 = vadd.s32 %v2428, %v2434
        %vm2437 = vc.u32 %v2435, %v2431
        %v2438 = vsel %vm2437, 1, 0
        %v2439 = vadd.s32 %v2435, %v2431
        %v2440 = vadd.s32 %v2436, %v2438
        %v2441 = vadd.s32 %v2440, %v2430
        %v2442 = vadd.s32 %v2441, %v2432
        %v2443 = vand.u32 %v2420, 65535
        %v2444 = vshrl.u32 %v2420, 16
        %v2445 = vand.u32 %v2415, 65535
        %v2446 = vshrl.u32 %v2415, 16
        %v2447 = vmul.u32 %v2443, %v2445
        %v2448 = vmul.u32 %v2443, %v2446
        %v2449 = vmul.u32 %v2444, %v2445
        %v2450 = vmul.u32 %v2444, %v2446
        %v2451 = vshll.u32 %v2448, 16
        %v2452 = vshrl.u32 %v2448, 16
        %v2453 = vshll.u32 %v2449, 16
        %v2454 = vshrl.u32 %v2449, 16
        %vm2455 = vc.u32 %v2447, %v2451
        %v2456 = vsel %vm2455, 1, 0
        %v2457 = vadd.s32 %v2447, %v2451
        %v2458 = vadd.s32 %v2450, %v2456
        %vm2459 = vc.u32 %v2457, %v2453
        %v2460 = vsel %vm2459, 1, 0
        %v2461 = vadd.s32 %v2457, %v2453
        %v2462 = vadd.s32 %v2458, %v2460
        %v2463 = vadd.s32 %v2462, %v2452
        %v2464 = vadd.s32 %v2463, %v2454
        %v2465 = vmul.u32 %v2420, %v2411
        %v2466 = vadd.s32 %v2442, %v2461
        %vm2467 = vc.u32 %v2442, %v2461
        %v2468 = vadd.s32 %v2464, 1
        %v2469 = vsel %vm2467, %v2468, %v2464
        %v2470 = vadd.s32 %v2465, %v2469
        %v2471 = vadd.s32 %v2470, 536870912
        %v2472 = vshrl.u32 %v2471, 30
        %v2473 = vshll.u32 %v2472, 30
        %v2474 = vsub.s32 %v2470, %v2473
        %vm2475 = vcmp.lt.s32.totalorder %v2474, 0
        %v2476 = vsub.s32 0, %v2474
        %v2477 = vsel %vm2475, %v2476, %v2474
        %v2478 = vclz %v2477
        %v2479 = vsub.s32 %v2478, 2
        %vm2480 = vcmp.gt.s32.totalorder 0, %v2479
        %v2481 = vsel %vm2480, 0, %v2479
        %v2482 = vsub.s32 32, %v2481
        %v2483 = vshll.u32 %v2474, %v2481
        %v2484 = vshrl.u32 %v2466, %v2482
        %v2485 = vor.u32 %v2483, %v2484
        %v2486 = vsub.s32 4294967266, %v2481
        %v2487 = vadd.s32 %v2486, 127
        %v2488 = vshll.u32 %v2487, 23
        %v2489 = vor.u32 4788187, %v2488
        %v2490 = vand.u32 2147483647, %v2489
        %v2492 = vcvt.s32.f32 %v2485
        %v2493 = vmul.f32 %v2492, %v2490
        %v2494 = vxor.u32 %v2493, 2147483648
        %v2495 = vsel %vm2374, %v2494, %v2493
        %v2496 = vsub.s32 4, %v2472
        %v2497 = vsel %vm2374, %v2496, %v2472
        %v2498 = vsel %vm2373, %v1437, %v2495
        %v2499 = vsel %vm2373, 0, %v2497
        %v2500 = vmul.f32 %v2498, %v2498
        %v2501 = vmul.f32 %v2500, -0.001358992
        %v2502 = vadd.f32 %v2501, 0.041655596
        %v2503 = vmul.f32 %v2500, %v2502
        %v2504 = vadd.f32 %v2503, -0.4999988
        %v2505 = vmul.f32 %v2500, %v2504
        %v2506 = vadd.f32 1.0, %v2505
        %v2507 = vmul.f32 %v2498, %v2498
        %v2508 = vmul.f32 %v2507, -0.00019511016
        %v2509 = vadd.f32 %v2508, 0.008332121
        %v2510 = vmul.f32 %v2507, %v2509
        %v2511 = vadd.f32 %v2510, -0.16666654
        %v2512 = vmul.f32 %v2507, %v2511
        %v2513 = vadd.f32 %v2512, 1.0
        %v2514 = vmul.f32 %v2513, %v2498
        %vm2515 = vweird.f32 %v1437
        %v2516 = vadd.s32 %v2499, 3
        %v2517 = vand.u32 %v2516, 3
        %vm2518 = vcmp.lt.s32.totalorder %v2517, 2
        %vm2519 = vcmp.eq.s32.totalorder %v2517, 0
        %v2520 = vxor.u32 %v2514, 2147483648
        %v2521 = vsel %vm2519, %v2506, %v2520
        %vm2522 = vcmp.eq.s32.totalorder %v2517, 2
        %v2523 = vxor.u32 %v2506, 2147483648
        %v2524 = vsel %vm2522, %v2523, %v2514
        %v2525 = vsel %vm2518, %v2521, %v2524
        %v2526 = vsel %vm2515, nan, %v2525
        %v2527 = vand.u32 2147483647, %v1439
        %vm2528 = vcmp.le.f32.partialorder %v2527, 0.7853982
        %vm2529 = vcmp.lt.s32.totalorder %v1439, 0
        %v2530 = vand.u32 %v1439, 2139095040
        %v2531 = vshrl.u32 %v2530, 23
        %v2532 = vsub.s32 %v2531, 127
        %v2533 = vand.u32 2147483647, %v1439
        %v2534 = vand.u32 %v2533, 8388607
        %v2535 = vor.u32 %v2534, 8388608
        %v2536 = vsub.s32 0, %v2535
        %v2537 = vadd.s32 %v2532, 1
        %vm2538 = vcmp.gt.s32.totalorder %v2537, 0
        %v2539 = vsel %vm2538, %v2537, 0
        %v2540 = vshrl.u32 %v2539, 5
        %v2541 = vand.u32 %v2539, 31
        %v2542 = vsub.s32 32, %v2541
        %v2543 = vshrl.u32 683565275, %v2542
        %v2544 = vshll.u32 683565275, %v2541
        %v2545 = vshrl.u32 2475754826, %v2542
        %v2546 = vor.u32 %v2544, %v2545
        %v2547 = vshll.u32 2475754826, %v2541
        %v2548 = vshrl.u32 2131351028, %v2542
        %v2549 = vor.u32 %v2547, %v2548
        %v2550 = vshll.u32 2131351028, %v2541
        %v2551 = vshrl.u32 2102212464, %v2542
        %v2552 = vor.u32 %v2550, %v2551
        %v2553 = vshll.u32 2102212464, %v2541
        %v2554 = vshrl.u32 920167782, %v2542
        %v2555 = vor.u32 %v2553, %v2554
        %v2556 = vshll.u32 920167782, %v2541
        %v2557 = vshrl.u32 1326507024, %v2542
        %v2558 = vor.u32 %v2556, %v2557
        %vm2559 = vcmp.lt.s32.totalorder %v2540, 1
        %vm2560 = vcmp.lt.s32.totalorder %v2540, 2
        %vm2561 = vcmp.lt.s32.totalorder %v2540, 3
        %vm2562 = vcmp.lt.s32.totalorder %v2540, 4
        %v2563 = vsel %vm2559, %v2543, %v2546
        %v2564 = vsel %vm2562, %v2552, 2102212464
        %v2565 = vsel %vm2561, %v2549, %v2564
        %v2566 = vsel %vm2560, %v2563, %v2565
        %v2567 = vsel %vm2559, %v2546, %v2549
        %v2568 = vsel %vm2562, %v2555, 920167782
        %v2569 = vsel %vm2561, %v2552, %v2568
        %v2570 = vsel %vm2560, %v2567, %v2569
        %v2571 = vsel %vm2559, %v2549, %v2552
        %v2572 = vsel %vm2562, %v2558, 1326507024
        %v2573 = vsel %vm2561, %v2555, %v2572
        %v2574 = vsel %vm2560, %v2571, %v2573
        %v2575 = vshll.u32 %v2535, 8
        %v2576 = vand.u32 %v2575, 65535
        %v2577 = vshrl.u32 %v2575, 16
        %v2578 = vand.u32 %v2574, 65535
        %v2579 = vshrl.u32 %v2574, 16
        %v2580 = vmul.u32 %v2576, %v2578
        %v2581 = vmul.u32 %v2576, %v2579
        %v2582 = vmul.u32 %v2577, %v2578
        %v2583 = vmul.u32 %v2577, %v2579
        %v2584 = vshll.u32 %v2581, 16
        %v2585 = vshrl.u32 %v2581, 16
        %v2586 = vshll.u32 %v2582, 16
        %v2587 = vshrl.u32 %v2582, 16
        %vm2588 = vc.u32 %v2580, %v2584
        %v2589 = vsel %vm2588, 1, 0
        %v2590 = vadd.s32 %v2580, %v2584
        %v2591 = vadd.s32 %v2583, %v2589
        %vm2592 = vc.u32 %v2590, %v2586
        %v2593 = vsel %vm2592, 1, 0
        %v2594 = vadd.s32 %v2590, %v2586
        %v2595 = vadd.s32 %v2591, %v2593
        %v2596 = vadd.s32 %v2595, %v2585
        %v2597 = vadd.s32 %v2596, %v2587
        %v2598 = vand.u32 %v2575, 65535
        %v2599 = vshrl.u32 %v2575, 16
        %v2600 = vand.u32 %v2570, 65535
        %v2601 = vshrl.u32 %v2570, 16
        %v2602 = vmul.u32 %v2598, %v2600
        %v2603 = vmul.u32 %v2598, %v2601
        %v2604 = vmul.u32 %v2599, %v2600
        %v2605 = vmul.u32 %v2599, %v2601
        %v2606 = vshll.u32 %v2603, 16
        %v2607 = vshrl.u32 %v2603, 16
        %v2608 = vshll.u32 %v2604, 16
        %v2609 = vshrl.u32 %v2604, 16
        %vm2610 = vc.u32 %v2602, %v2606
        %v2611 = vsel %vm2610, 1, 0
        %v2612 = vadd.s32 %v2602, %v2606
        %v2613 = vadd.s32 %v2605, %v2611
        %vm2614 = vc.u32 %v2612, %v2608
        %v2615 = vsel %vm2614, 1, 0
        %v2616 = vadd.s32 %v2612, %v2608
        %v2617 = vadd.s32 %v2613, %v2615
        %v2618 = vadd.s32 %v2617, %v2607
        %v2619 = vadd.s32 %v2618, %v2609
        %v2620 = vmul.u32 %v2575, %v2566
        %v2621 = vadd.s32 %v2597, %v2616
        %vm2622 = vc.u32 %v2597, %v2616
        %v2623 = vadd.s32 %v2619, 1
        %v2624 = vsel %vm2622, %v2623, %v2619
        %v2625 = vadd.s32 %v2620, %v2624
        %v2626 = vadd.s32 %v2625, 536870912
        %v2627 = vshrl.u32 %v2626, 30
        %v2628 = vshll.u32 %v2627, 30
        %v2629 = vsub.s32 %v2625, %v2628
        %vm2630 = vcmp.lt.s32.totalorder %v2629, 0
        %v2631 = vsub.s32 0, %v2629
        %v2632 = vsel %vm2630, %v2631, %v2629
        %v2633 = vclz %v2632
        %v2634 = vsub.s32 %v2633, 2
        %vm2635 = vcmp.gt.s32.totalorder 0, %v2634
        %v2636 = vsel %vm2635, 0, %v2634
        %v2637 = vsub.s32 32, %v2636
        %v2638 = vshll.u32 %v2629, %v2636
        %v2639 = vshrl.u32 %v2621, %v2637
        %v2640 = vor.u32 %v2638, %v2639
        %v2641 = vsub.s32 4294967266, %v2636
        %v2642 = vadd.s32 %v2641, 127
        %v2643 = vshll.u32 %v2642, 23
        %v2644 = vor.u32 4788187, %v2643
        %v2645 = vand.u32 2147483647, %v2644
        %v2647 = vcvt.s32.f32 %v2640
        %v2648 = vmul.f32 %v2647, %v2645
        %v2649 = vxor.u32 %v2648, 2147483648
        %v2650 = vsel %vm2529, %v2649, %v2648
        %v2651 = vsub.s32 4, %v2627
        %v2652 = vsel %vm2529, %v2651, %v2627
        %v2653 = vsel %vm2528, %v1439, %v2650
        %v2654 = vsel %vm2528, 0, %v2652
        %v2655 = vmul.f32 %v2653, %v2653
        %v2656 = vmul.f32 %v2655, -0.001358992
        %v2657 = vadd.f32 %v2656, 0.041655596
        %v2658 = vmul.f32 %v2655, %v2657
        %v2659 = vadd.f32 %v2658, -0.4999988
        %v2660 = vmul.f32 %v2655, %v2659
        %v2661 = vadd.f32 1.0, %v2660
        %v2662 = vmul.f32 %v2653, %v2653
        %v2663 = vmul.f32 %v2662, -0.00019511016
        %v2664 = vadd.f32 %v2663, 0.008332121
        %v2665 = vmul.f32 %v2662, %v2664
        %v2666 = vadd.f32 %v2665, -0.16666654
        %v2667 = vmul.f32 %v2662, %v2666
        %v2668 = vadd.f32 %v2667, 1.0
        %v2669 = vmul.f32 %v2668, %v2653
        %vm2670 = vweird.f32 %v1439
        %v2671 = vadd.s32 %v2654, 3
        %v2672 = vand.u32 %v2671, 3
        %vm2673 = vcmp.lt.s32.totalorder %v2672, 2
        %vm2674 = vcmp.eq.s32.totalorder %v2672, 0
        %v2675 = vxor.u32 %v2669, 2147483648
        %v2676 = vsel %vm2674, %v2661, %v2675
        %vm2677 = vcmp.eq.s32.totalorder %v2672, 2
        %v2678 = vxor.u32 %v2661, 2147483648
        %v2679 = vsel %vm2677, %v2678, %v2669
        %v2680 = vsel %vm2673, %v2676, %v2679
        %v2681 = vsel %vm2670, nan, %v2680
        %v2682 = vsel %vm1441, %v1596, %v1422
        %v2683 = vsel %vm1441, %v1751, %v1424
        %v2684 = vsel %vm1441, %v1906, %v1427
        %v2685 = vsel %vm1441, %v2061, %v1429
        %v2686 = vsel %vm1441, %v2216, %v1432
        %v2687 = vsel %vm1441, %v2371, %v1434
        %v2688 = vsel %vm1441, %v2526, %v1437
        %v2689 = vsel %vm1441, %v2681, %v1439
        %v2690 = vpack.c.bf16 %v2683, %v2682
        %v2691 = vpack.c.bf16 %v2685, %v2684
        %v2692 = vpack.c.bf16 %v2687, %v2686
        %v2693 = vpack.c.bf16 %v2689, %v2688
        %v2694 = vld [vmem:[#allocation5] sm:$0xff]
        %v2695 = vld [vmem:[#allocation5 + $0x8] sm:$0xff]
        %v2696 = vld [vmem:[#allocation5 + $0x10] sm:$0xff]
        %v2697 = vld [vmem:[#allocation5 + $0x18] sm:$0xff]
        %v2698 = vld [vmem:[#allocation7] sm:$0x3]
        %v2700 = vperm.slane %v2698, 0
        %v2701 = vperm.slane %v2698, 1
        %v2708 = vunpack.c.l.b16 %v2694
        %v2709 = vunpack.c.h.b16 %v2694
        %v2710 = vunpack.c.l.b16 %v2695
        %v2711 = vunpack.c.h.b16 %v2695
        %v2712 = vunpack.c.l.b16 %v2696
        %v2713 = vunpack.c.h.b16 %v2696
        %v2714 = vunpack.c.l.b16 %v2697
        %v2715 = vunpack.c.h.b16 %v2697
        %v2716 = vpack.c.b16 %v2710, %v2708
        %v2717 = vpack.c.b16 %v2711, %v2709
        %v2718 = vpack.c.b16 %v2714, %v2712
        %v2719 = vpack.c.b16 %v2715, %v2713
        %vm2724 = vcmask 261120
        %v2726 = vsel %vm2724, %v2690, 0
        %v2729 = vsel %vm2724, %v2691, 0
        %v2732 = vsel %vm2724, %v2692, 0
        %v2735 = vsel %vm2724, %v2693, 0
        %2737 = vmatpush.bf16.msra.mxu0 0
        %2738 = vmatpush.bf16.msra.mxu0 0
        %2739 = vmatpush.bf16.msra.mxu0 0
        %2740 = vmatpush.bf16.msra.mxu0 0
        %2741 = vmatpush.bf16.msra.mxu0 0
        %2742 = vmatpush.bf16.msra.mxu0 0
        %2743 = vmatpush.bf16.msra.mxu0 %v2718
        %2744 = vmatpush.bf16.msra.mxu0 %v2716
        %2745 = vmatmul.bf16.gmra.mxu0 %v2726
        %v2746 = vpop.f32.mrf.mxu0
        %v2747 = vadd.f32 %v2700, %v2746
        %v2748 = vpop.f32.mrf.mxu0
        %v2749 = vadd.f32 %v2700, %v2748
        %2750 = vmatmul.bf16.gmra.mxu0 %v2729
        %v2751 = vpop.f32.mrf.mxu0
        %v2752 = vadd.f32 %v2700, %v2751
        %v2753 = vpop.f32.mrf.mxu0
        %v2754 = vadd.f32 %v2700, %v2753
        %2755 = vmatmul.bf16.gmra.mxu0 %v2732
        %v2756 = vpop.f32.mrf.mxu0
        %v2757 = vadd.f32 %v2700, %v2756
        %v2758 = vpop.f32.mrf.mxu0
        %v2759 = vadd.f32 %v2700, %v2758
        %2760 = vmatmul.bf16.gmra.mxu0 %v2735
        %v2761 = vpop.f32.mrf.mxu0
        %v2762 = vadd.f32 %v2700, %v2761
        %v2763 = vpop.f32.mrf.mxu0
        %v2764 = vadd.f32 %v2700, %v2763
        %2765 = vdwg.mxu0
        %2766 = vmatpush.bf16.msra.mxu0 0
        %2767 = vmatpush.bf16.msra.mxu0 0
        %2768 = vmatpush.bf16.msra.mxu0 0
        %2769 = vmatpush.bf16.msra.mxu0 0
        %2770 = vmatpush.bf16.msra.mxu0 0
        %2771 = vmatpush.bf16.msra.mxu0 0
        %2772 = vmatpush.bf16.msra.mxu0 %v2719
        %2773 = vmatpush.bf16.msra.mxu0 %v2717
        %2774 = vmatmul.bf16.gmra.mxu0 %v2726
        %v2775 = vpop.f32.mrf.mxu0
        %v2776 = vadd.f32 %v2701, %v2775
        %v2777 = vpop.f32.mrf.mxu0
        %v2778 = vadd.f32 %v2701, %v2777
        %2779 = vmatmul.bf16.gmra.mxu0 %v2729
        %v2780 = vpop.f32.mrf.mxu0
        %v2781 = vadd.f32 %v2701, %v2780
        %v2782 = vpop.f32.mrf.mxu0
        %v2783 = vadd.f32 %v2701, %v2782
        %2784 = vmatmul.bf16.gmra.mxu0 %v2732
        %v2785 = vpop.f32.mrf.mxu0
        %v2786 = vadd.f32 %v2701, %v2785
        %v2787 = vpop.f32.mrf.mxu0
        %v2788 = vadd.f32 %v2701, %v2787
        %2789 = vmatmul.bf16.gmra.mxu0 %v2735
        %v2790 = vpop.f32.mrf.mxu0
        %v2791 = vadd.f32 %v2701, %v2790
        %v2792 = vpop.f32.mrf.mxu0
        %v2793 = vadd.f32 %v2701, %v2792
        %2794 = vdwg.mxu0
        %vm2795 = vcmp.ge.f32.partialorder %v2747, 0.0
        %vm2796 = vcmp.ge.f32.partialorder %v2776, 0.0
        %vm2797 = vcmp.ge.f32.partialorder %v2749, 0.0
        %vm2798 = vcmp.ge.f32.partialorder %v2778, 0.0
        %vm2799 = vcmp.ge.f32.partialorder %v2752, 0.0
        %vm2800 = vcmp.ge.f32.partialorder %v2781, 0.0
        %vm2801 = vcmp.ge.f32.partialorder %v2754, 0.0
        %vm2802 = vcmp.ge.f32.partialorder %v2783, 0.0
        %vm2803 = vcmp.ge.f32.partialorder %v2757, 0.0
        %vm2804 = vcmp.ge.f32.partialorder %v2786, 0.0
        %vm2805 = vcmp.ge.f32.partialorder %v2759, 0.0
        %vm2806 = vcmp.ge.f32.partialorder %v2788, 0.0
        %vm2807 = vcmp.ge.f32.partialorder %v2762, 0.0
        %vm2808 = vcmp.ge.f32.partialorder %v2791, 0.0
        %vm2809 = vcmp.ge.f32.partialorder %v2764, 0.0
        %vm2810 = vcmp.ge.f32.partialorder %v2793, 0.0
        %v2811 = vmul.f32 %v2747, 0.01
        %v2812 = vmul.f32 %v2776, 0.01
        %v2813 = vmul.f32 %v2749, 0.01
        %v2814 = vmul.f32 %v2778, 0.01
        %v2815 = vmul.f32 %v2752, 0.01
        %v2816 = vmul.f32 %v2781, 0.01
        %v2817 = vmul.f32 %v2754, 0.01
        %v2818 = vmul.f32 %v2783, 0.01
        %v2819 = vmul.f32 %v2757, 0.01
        %v2820 = vmul.f32 %v2786, 0.01
        %v2821 = vmul.f32 %v2759, 0.01
        %v2822 = vmul.f32 %v2788, 0.01
        %v2823 = vmul.f32 %v2762, 0.01
        %v2824 = vmul.f32 %v2791, 0.01
        %v2825 = vmul.f32 %v2764, 0.01
        %v2826 = vmul.f32 %v2793, 0.01
        %v2827 = vsel %vm2795, %v2747, %v2811
        %v2828 = vsel %vm2796, %v2776, %v2812
        %v2829 = vsel %vm2797, %v2749, %v2813
        %v2830 = vsel %vm2798, %v2778, %v2814
        %v2831 = vsel %vm2799, %v2752, %v2815
        %v2832 = vsel %vm2800, %v2781, %v2816
        %v2833 = vsel %vm2801, %v2754, %v2817
        %v2834 = vsel %vm2802, %v2783, %v2818
        %v2835 = vsel %vm2803, %v2757, %v2819
        %v2836 = vsel %vm2804, %v2786, %v2820
        %v2837 = vsel %vm2805, %v2759, %v2821
        %v2838 = vsel %vm2806, %v2788, %v2822
        %v2839 = vsel %vm2807, %v2762, %v2823
        %v2840 = vsel %vm2808, %v2791, %v2824
        %v2841 = vsel %vm2809, %v2764, %v2825
        %v2842 = vsel %vm2810, %v2793, %v2826
        %v2843 = vpack.c.bf16 %v2829, %v2827
        %v2844 = vpack.c.bf16 %v2830, %v2828
        %v2845 = vpack.c.bf16 %v2833, %v2831
        %v2846 = vpack.c.bf16 %v2834, %v2832
        %v2847 = vpack.c.bf16 %v2837, %v2835
        %v2848 = vpack.c.bf16 %v2838, %v2836
        %v2849 = vpack.c.bf16 %v2841, %v2839
        %v2850 = vpack.c.bf16 %v2842, %v2840
        %v2851 = vld [vmem:[#allocation8] sm:$0xf]
        %v2852 = vld [vmem:[#allocation8 + $0x4] sm:$0xf]
        %v2853 = vld [vmem:[#allocation8 + $0x8] sm:$0xf]
        %v2854 = vld [vmem:[#allocation8 + $0xc] sm:$0xf]
        %v2855 = vld [vmem:[#allocation8 + $0x10] sm:$0xf]
        %v2856 = vld [vmem:[#allocation8 + $0x14] sm:$0xf]
        %v2857 = vld [vmem:[#allocation8 + $0x18] sm:$0xf]
        %v2858 = vld [vmem:[#allocation8 + $0x1c] sm:$0xf]
        %v2859 = vld [vmem:[#allocation8 + $0x20] sm:$0xf]
        %v2860 = vld [vmem:[#allocation8 + $0x24] sm:$0xf]
        %v2861 = vld [vmem:[#allocation8 + $0x28] sm:$0xf]
        %v2862 = vld [vmem:[#allocation8 + $0x2c] sm:$0xf]
        %v2863 = vld [vmem:[#allocation8 + $0x30] sm:$0xf]
        %v2864 = vld [vmem:[#allocation8 + $0x34] sm:$0xf]
        %v2865 = vld [vmem:[#allocation8 + $0x38] sm:$0xf]
        %v2866 = vld [vmem:[#allocation8 + $0x3c] sm:$0xf]
        %v2867 = vld [vmem:[#allocation8 + $0x40] sm:$0xf]
        %v2868 = vld [vmem:[#allocation8 + $0x44] sm:$0xf]
        %v2869 = vld [vmem:[#allocation8 + $0x48] sm:$0xf]
        %v2870 = vld [vmem:[#allocation8 + $0x4c] sm:$0xf]
        %v2871 = vld [vmem:[#allocation8 + $0x50] sm:$0xf]
        %v2872 = vld [vmem:[#allocation8 + $0x54] sm:$0xf]
        %v2873 = vld [vmem:[#allocation8 + $0x58] sm:$0xf]
        %v2874 = vld [vmem:[#allocation8 + $0x5c] sm:$0xf]
        %v2875 = vld [vmem:[#allocation8 + $0x60] sm:$0xf]
        %v2876 = vld [vmem:[#allocation8 + $0x64] sm:$0xf]
        %v2877 = vld [vmem:[#allocation8 + $0x68] sm:$0xf]
        %v2878 = vld [vmem:[#allocation8 + $0x6c] sm:$0xf]
        %v2879 = vld [vmem:[#allocation8 + $0x70] sm:$0xf]
        %v2880 = vld [vmem:[#allocation8 + $0x74] sm:$0xf]
        %v2881 = vld [vmem:[#allocation8 + $0x78] sm:$0xf]
        %v2882 = vld [vmem:[#allocation8 + $0x7c] sm:$0xf]
        %v2883 = vld [vmem:[#allocation10] sm:$0xf]
        %v2884 = vld [vmem:[#allocation10 + $0x4] sm:$0xf]
        %v2885 = vld [vmem:[#allocation10 + $0x8] sm:$0xf]
        %v2886 = vld [vmem:[#allocation10 + $0xc] sm:$0xf]
        %v2891 = vunpack.c.l.b16 %v2883
        %v2892 = vunpack.c.l.b16 %v2884
        %v2893 = vunpack.c.l.b16 %v2885
        %v2894 = vunpack.c.l.b16 %v2886
        %v2895 = vpack.c.b16 %v2892, %v2891
        %v2896 = vpack.c.b16 %v2894, %v2893
        %2899 = vmatpush.bf16.msra.mxu0 0
        %2900 = vmatpush.bf16.msra.mxu0 0
        %2901 = vmatpush.bf16.msra.mxu0 0
        %2902 = vmatpush.bf16.msra.mxu0 0
        %2903 = vmatpush.bf16.msra.mxu0 0
        %2904 = vmatpush.bf16.msra.mxu0 0
        %2905 = vmatpush.bf16.msra.mxu0 %v2896
        %2906 = vmatpush.bf16.msra.mxu0 %v2895
        %2907 = vmatmul.bf16.gmra.mxu0 %v2726
        %v2908 = vpop.f32.mrf.mxu0
        %v2909 = vadd.f32 0.0, %v2908
        %v2910 = vpop.f32.mrf.mxu0
        %v2911 = vadd.f32 0.0, %v2910
        %2912 = vmatmul.bf16.gmra.mxu0 %v2729
        %v2913 = vpop.f32.mrf.mxu0
        %v2914 = vadd.f32 0.0, %v2913
        %v2915 = vpop.f32.mrf.mxu0
        %v2916 = vadd.f32 0.0, %v2915
        %2917 = vmatmul.bf16.gmra.mxu0 %v2732
        %v2918 = vpop.f32.mrf.mxu0
        %v2919 = vadd.f32 0.0, %v2918
        %v2920 = vpop.f32.mrf.mxu0
        %v2921 = vadd.f32 0.0, %v2920
        %2922 = vmatmul.bf16.gmra.mxu0 %v2735
        %v2923 = vpop.f32.mrf.mxu0
        %v2924 = vadd.f32 0.0, %v2923
        %v2925 = vpop.f32.mrf.mxu0
        %v2926 = vadd.f32 0.0, %v2925
        %2927 = vdwg.mxu0
        %v2960 = vunpack.c.l.b16 %v2851
        %v2961 = vunpack.c.l.b16 %v2852
        %v2962 = vunpack.c.l.b16 %v2853
        %v2963 = vunpack.c.l.b16 %v2854
        %v2964 = vunpack.c.l.b16 %v2855
        %v2965 = vunpack.c.l.b16 %v2856
        %v2966 = vunpack.c.l.b16 %v2857
        %v2967 = vunpack.c.l.b16 %v2858
        %v2968 = vunpack.c.l.b16 %v2859
        %v2969 = vunpack.c.l.b16 %v2860
        %v2970 = vunpack.c.l.b16 %v2861
        %v2971 = vunpack.c.l.b16 %v2862
        %v2972 = vunpack.c.l.b16 %v2863
        %v2973 = vunpack.c.l.b16 %v2864
        %v2974 = vunpack.c.l.b16 %v2865
        %v2975 = vunpack.c.l.b16 %v2866
        %v2976 = vunpack.c.l.b16 %v2867
        %v2977 = vunpack.c.l.b16 %v2868
        %v2978 = vunpack.c.l.b16 %v2869
        %v2979 = vunpack.c.l.b16 %v2870
        %v2980 = vunpack.c.l.b16 %v2871
        %v2981 = vunpack.c.l.b16 %v2872
        %v2982 = vunpack.c.l.b16 %v2873
        %v2983 = vunpack.c.l.b16 %v2874
        %v2984 = vunpack.c.l.b16 %v2875
        %v2985 = vunpack.c.l.b16 %v2876
        %v2986 = vunpack.c.l.b16 %v2877
        %v2987 = vunpack.c.l.b16 %v2878
        %v2988 = vunpack.c.l.b16 %v2879
        %v2989 = vunpack.c.l.b16 %v2880
        %v2990 = vunpack.c.l.b16 %v2881
        %v2991 = vunpack.c.l.b16 %v2882
        %v2992 = vpack.c.b16 %v2961, %v2960
        %v2993 = vpack.c.b16 %v2963, %v2962
        %v2994 = vpack.c.b16 %v2965, %v2964
        %v2995 = vpack.c.b16 %v2967, %v2966
        %v2996 = vpack.c.b16 %v2969, %v2968
        %v2997 = vpack.c.b16 %v2971, %v2970
        %v2998 = vpack.c.b16 %v2973, %v2972
        %v2999 = vpack.c.b16 %v2975, %v2974
        %v3000 = vpack.c.b16 %v2977, %v2976
        %v3001 = vpack.c.b16 %v2979, %v2978
        %v3002 = vpack.c.b16 %v2981, %v2980
        %v3003 = vpack.c.b16 %v2983, %v2982
        %v3004 = vpack.c.b16 %v2985, %v2984
        %v3005 = vpack.c.b16 %v2987, %v2986
        %v3006 = vpack.c.b16 %v2989, %v2988
        %v3007 = vpack.c.b16 %v2991, %v2990
        %3024 = vmatpush.bf16.msra.mxu0 %v2999
        %3025 = vmatpush.bf16.msra.mxu0 %v2998
        %3026 = vmatpush.bf16.msra.mxu0 %v2997
        %3027 = vmatpush.bf16.msra.mxu0 %v2996
        %3028 = vmatpush.bf16.msra.mxu0 %v2995
        %3029 = vmatpush.bf16.msra.mxu0 %v2994
        %3030 = vmatpush.bf16.msra.mxu0 %v2993
        %3031 = vmatpush.bf16.msra.mxu0 %v2992
        %3032 = vmatmul.bf16.gmra.mxu0 %v2843
        %v3033 = vpop.f32.mrf.mxu0
        %v3034 = vadd.f32 %v2909, %v3033
        %v3035 = vpop.f32.mrf.mxu0
        %v3036 = vadd.f32 %v2911, %v3035
        %3037 = vmatmul.bf16.gmra.mxu0 %v2845
        %v3038 = vpop.f32.mrf.mxu0
        %v3039 = vadd.f32 %v2914, %v3038
        %v3040 = vpop.f32.mrf.mxu0
        %v3041 = vadd.f32 %v2916, %v3040
        %3042 = vmatmul.bf16.gmra.mxu0 %v2847
        %v3043 = vpop.f32.mrf.mxu0
        %v3044 = vadd.f32 %v2919, %v3043
        %v3045 = vpop.f32.mrf.mxu0
        %v3046 = vadd.f32 %v2921, %v3045
        %3047 = vmatmul.bf16.gmra.mxu0 %v2849
        %v3048 = vpop.f32.mrf.mxu0
        %v3049 = vadd.f32 %v2924, %v3048
        %v3050 = vpop.f32.mrf.mxu0
        %v3051 = vadd.f32 %v2926, %v3050
        %3052 = vdwg.mxu0
        %3053 = vmatpush.bf16.msra.mxu0 %v3007
        %3054 = vmatpush.bf16.msra.mxu0 %v3006
        %3055 = vmatpush.bf16.msra.mxu0 %v3005
        %3056 = vmatpush.bf16.msra.mxu0 %v3004
        %3057 = vmatpush.bf16.msra.mxu0 %v3003
        %3058 = vmatpush.bf16.msra.mxu0 %v3002
        %3059 = vmatpush.bf16.msra.mxu0 %v3001
        %3060 = vmatpush.bf16.msra.mxu0 %v3000
        %3061 = vmatmul.bf16.gmra.mxu0 %v2844
        %v3062 = vpop.f32.mrf.mxu0
        %v3063 = vadd.f32 %v3034, %v3062
        %v3064 = vpop.f32.mrf.mxu0
        %v3065 = vadd.f32 %v3036, %v3064
        %3066 = vmatmul.bf16.gmra.mxu0 %v2846
        %v3067 = vpop.f32.mrf.mxu0
        %v3068 = vadd.f32 %v3039, %v3067
        %v3069 = vpop.f32.mrf.mxu0
        %v3070 = vadd.f32 %v3041, %v3069
        %3071 = vmatmul.bf16.gmra.mxu0 %v2848
        %v3072 = vpop.f32.mrf.mxu0
        %v3073 = vadd.f32 %v3044, %v3072
        %v3074 = vpop.f32.mrf.mxu0
        %v3075 = vadd.f32 %v3046, %v3074
        %3076 = vmatmul.bf16.gmra.mxu0 %v2850
        %v3077 = vpop.f32.mrf.mxu0
        %v3078 = vadd.f32 %v3049, %v3077
        %v3079 = vpop.f32.mrf.mxu0
        %v3080 = vadd.f32 %v3051, %v3079
        %3081 = vdwg.mxu0
        %v3082 = vld [vmem:[#allocation11] sm:$0x1]
        %v3084 = vperm.slane %v3082, 0
        %v3086 = vadd.f32 %v3063, %v3084
        %v3087 = vadd.f32 %v3065, %v3084
        %v3088 = vadd.f32 %v3068, %v3084
        %v3089 = vadd.f32 %v3070, %v3084
        %v3090 = vadd.f32 %v3073, %v3084
        %v3091 = vadd.f32 %v3075, %v3084
        %v3092 = vadd.f32 %v3078, %v3084
        %v3093 = vadd.f32 %v3080, %v3084
        %vm3094 = vcmp.ge.f32.partialorder %v3086, 0.0
        %vm3095 = vcmp.ge.f32.partialorder %v3087, 0.0
        %vm3096 = vcmp.ge.f32.partialorder %v3088, 0.0
        %vm3097 = vcmp.ge.f32.partialorder %v3089, 0.0
        %vm3098 = vcmp.ge.f32.partialorder %v3090, 0.0
        %vm3099 = vcmp.ge.f32.partialorder %v3091, 0.0
        %vm3100 = vcmp.ge.f32.partialorder %v3092, 0.0
        %vm3101 = vcmp.ge.f32.partialorder %v3093, 0.0
        %v3102 = vmul.f32 %v3086, 0.01
        %v3103 = vmul.f32 %v3087, 0.01
        %v3104 = vmul.f32 %v3088, 0.01
        %v3105 = vmul.f32 %v3089, 0.01
        %v3106 = vmul.f32 %v3090, 0.01
        %v3107 = vmul.f32 %v3091, 0.01
        %v3108 = vmul.f32 %v3092, 0.01
        %v3109 = vmul.f32 %v3093, 0.01
        %v3110 = vsel %vm3094, %v3086, %v3102
        %v3111 = vsel %vm3095, %v3087, %v3103
        %v3112 = vsel %vm3096, %v3088, %v3104
        %v3113 = vsel %vm3097, %v3089, %v3105
        %v3114 = vsel %vm3098, %v3090, %v3106
        %v3115 = vsel %vm3099, %v3091, %v3107
        %v3116 = vsel %vm3100, %v3092, %v3108
        %v3117 = vsel %vm3101, %v3093, %v3109
        %v3118 = vpack.c.bf16 %v3111, %v3110
        %v3119 = vpack.c.bf16 %v3113, %v3112
        %v3120 = vpack.c.bf16 %v3115, %v3114
        %v3121 = vpack.c.bf16 %v3117, %v3116
        %v3122 = vld [vmem:[#allocation13] sm:$0xf]
        %v3123 = vld [vmem:[#allocation13 + $0x4] sm:$0xf]
        %v3124 = vld [vmem:[#allocation13 + $0x8] sm:$0xf]
        %v3125 = vld [vmem:[#allocation13 + $0xc] sm:$0xf]
        %v3126 = vld [vmem:[#allocation13 + $0x10] sm:$0xf]
        %v3127 = vld [vmem:[#allocation13 + $0x14] sm:$0xf]
        %v3128 = vld [vmem:[#allocation13 + $0x18] sm:$0xf]
        %v3129 = vld [vmem:[#allocation13 + $0x1c] sm:$0xf]
        %v3130 = vld [vmem:[#allocation13 + $0x20] sm:$0xf]
        %v3131 = vld [vmem:[#allocation13 + $0x24] sm:$0xf]
        %v3132 = vld [vmem:[#allocation13 + $0x28] sm:$0xf]
        %v3133 = vld [vmem:[#allocation13 + $0x2c] sm:$0xf]
        %v3134 = vld [vmem:[#allocation13 + $0x30] sm:$0xf]
        %v3135 = vld [vmem:[#allocation13 + $0x34] sm:$0xf]
        %v3136 = vld [vmem:[#allocation13 + $0x38] sm:$0xf]
        %v3137 = vld [vmem:[#allocation13 + $0x3c] sm:$0xf]
        %v3138 = vld [vmem:[%s10] sm:$0xf]
        %v3139 = vld [vmem:[%s10 + $0x4] sm:$0xf]
        %v3140 = vld [vmem:[%s10 + $0x8] sm:$0xf]
        %v3141 = vld [vmem:[%s10 + $0xc] sm:$0xf]
        %v3142 = vld [vmem:[%s10 + $0x10] sm:$0xf]
        %v3143 = vld [vmem:[%s10 + $0x14] sm:$0xf]
        %v3144 = vld [vmem:[%s10 + $0x18] sm:$0xf]
        %v3145 = vld [vmem:[%s10 + $0x1c] sm:$0xf]
        %v3146 = vld [vmem:[%s10 + $0x20] sm:$0xf]
        %v3147 = vld [vmem:[%s10 + $0x24] sm:$0xf]
        %v3148 = vld [vmem:[%s10 + $0x28] sm:$0xf]
        %v3149 = vld [vmem:[%s10 + $0x2c] sm:$0xf]
        %v3150 = vld [vmem:[%s10 + $0x30] sm:$0xf]
        %v3151 = vld [vmem:[%s10 + $0x34] sm:$0xf]
        %v3152 = vld [vmem:[%s10 + $0x38] sm:$0xf]
        %v3153 = vld [vmem:[%s10 + $0x3c] sm:$0xf]
        %v3154 = vld [vmem:[%s10 + $0x40] sm:$0xf]
        %v3155 = vld [vmem:[%s10 + $0x44] sm:$0xf]
        %v3156 = vld [vmem:[%s10 + $0x48] sm:$0xf]
        %v3157 = vld [vmem:[%s10 + $0x4c] sm:$0xf]
        %v3158 = vld [vmem:[%s10 + $0x50] sm:$0xf]
        %v3159 = vld [vmem:[%s10 + $0x54] sm:$0xf]
        %v3160 = vld [vmem:[%s10 + $0x58] sm:$0xf]
        %v3161 = vld [vmem:[%s10 + $0x5c] sm:$0xf]
        %v3162 = vld [vmem:[%s10 + $0x60] sm:$0xf]
        %v3163 = vld [vmem:[%s10 + $0x64] sm:$0xf]
        %v3164 = vld [vmem:[%s10 + $0x68] sm:$0xf]
        %v3165 = vld [vmem:[%s10 + $0x6c] sm:$0xf]
        %v3166 = vld [vmem:[%s10 + $0x70] sm:$0xf]
        %v3167 = vld [vmem:[%s10 + $0x74] sm:$0xf]
        %v3168 = vld [vmem:[%s10 + $0x78] sm:$0xf]
        %v3169 = vld [vmem:[%s10 + $0x7c] sm:$0xf]
        %v3202 = vunpack.c.l.b16 %v3138
        %v3203 = vunpack.c.l.b16 %v3139
        %v3204 = vunpack.c.l.b16 %v3140
        %v3205 = vunpack.c.l.b16 %v3141
        %v3206 = vunpack.c.l.b16 %v3142
        %v3207 = vunpack.c.l.b16 %v3143
        %v3208 = vunpack.c.l.b16 %v3144
        %v3209 = vunpack.c.l.b16 %v3145
        %v3210 = vunpack.c.l.b16 %v3146
        %v3211 = vunpack.c.l.b16 %v3147
        %v3212 = vunpack.c.l.b16 %v3148
        %v3213 = vunpack.c.l.b16 %v3149
        %v3214 = vunpack.c.l.b16 %v3150
        %v3215 = vunpack.c.l.b16 %v3151
        %v3216 = vunpack.c.l.b16 %v3152
        %v3217 = vunpack.c.l.b16 %v3153
        %v3218 = vunpack.c.l.b16 %v3154
        %v3219 = vunpack.c.l.b16 %v3155
        %v3220 = vunpack.c.l.b16 %v3156
        %v3221 = vunpack.c.l.b16 %v3157
        %v3222 = vunpack.c.l.b16 %v3158
        %v3223 = vunpack.c.l.b16 %v3159
        %v3224 = vunpack.c.l.b16 %v3160
        %v3225 = vunpack.c.l.b16 %v3161
        %v3226 = vunpack.c.l.b16 %v3162
        %v3227 = vunpack.c.l.b16 %v3163
        %v3228 = vunpack.c.l.b16 %v3164
        %v3229 = vunpack.c.l.b16 %v3165
        %v3230 = vunpack.c.l.b16 %v3166
        %v3231 = vunpack.c.l.b16 %v3167
        %v3232 = vunpack.c.l.b16 %v3168
        %v3233 = vunpack.c.l.b16 %v3169
        %v3234 = vpack.c.b16 %v3203, %v3202
        %v3235 = vpack.c.b16 %v3205, %v3204
        %v3236 = vpack.c.b16 %v3207, %v3206
        %v3237 = vpack.c.b16 %v3209, %v3208
        %v3238 = vpack.c.b16 %v3211, %v3210
        %v3239 = vpack.c.b16 %v3213, %v3212
        %v3240 = vpack.c.b16 %v3215, %v3214
        %v3241 = vpack.c.b16 %v3217, %v3216
        %v3242 = vpack.c.b16 %v3219, %v3218
        %v3243 = vpack.c.b16 %v3221, %v3220
        %v3244 = vpack.c.b16 %v3223, %v3222
        %v3245 = vpack.c.b16 %v3225, %v3224
        %v3246 = vpack.c.b16 %v3227, %v3226
        %v3247 = vpack.c.b16 %v3229, %v3228
        %v3248 = vpack.c.b16 %v3231, %v3230
        %v3249 = vpack.c.b16 %v3233, %v3232
        %3266 = vmatpush.bf16.msra.mxu0 %v3241
        %3267 = vmatpush.bf16.msra.mxu0 %v3240
        %3268 = vmatpush.bf16.msra.mxu0 %v3239
        %3269 = vmatpush.bf16.msra.mxu0 %v3238
        %3270 = vmatpush.bf16.msra.mxu0 %v3237
        %3271 = vmatpush.bf16.msra.mxu0 %v3236
        %3272 = vmatpush.bf16.msra.mxu0 %v3235
        %3273 = vmatpush.bf16.msra.mxu0 %v3234
        %3274 = vmatmul.bf16.gmra.mxu0 %v2843
        %v3275 = vpop.f32.mrf.mxu0
        %v3276 = vadd.f32 0.0, %v3275
        %v3277 = vpop.f32.mrf.mxu0
        %v3278 = vadd.f32 0.0, %v3277
        %3279 = vmatmul.bf16.gmra.mxu0 %v2845
        %v3280 = vpop.f32.mrf.mxu0
        %v3281 = vadd.f32 0.0, %v3280
        %v3282 = vpop.f32.mrf.mxu0
        %v3283 = vadd.f32 0.0, %v3282
        %3284 = vmatmul.bf16.gmra.mxu0 %v2847
        %v3285 = vpop.f32.mrf.mxu0
        %v3286 = vadd.f32 0.0, %v3285
        %v3287 = vpop.f32.mrf.mxu0
        %v3288 = vadd.f32 0.0, %v3287
        %3289 = vmatmul.bf16.gmra.mxu0 %v2849
        %v3290 = vpop.f32.mrf.mxu0
        %v3291 = vadd.f32 0.0, %v3290
        %v3292 = vpop.f32.mrf.mxu0
        %v3293 = vadd.f32 0.0, %v3292
        %3294 = vdwg.mxu0
        %3295 = vmatpush.bf16.msra.mxu0 %v3249
        %3296 = vmatpush.bf16.msra.mxu0 %v3248
        %3297 = vmatpush.bf16.msra.mxu0 %v3247
        %3298 = vmatpush.bf16.msra.mxu0 %v3246
        %3299 = vmatpush.bf16.msra.mxu0 %v3245
        %3300 = vmatpush.bf16.msra.mxu0 %v3244
        %3301 = vmatpush.bf16.msra.mxu0 %v3243
        %3302 = vmatpush.bf16.msra.mxu0 %v3242
        %3303 = vmatmul.bf16.gmra.mxu0 %v2844
        %v3304 = vpop.f32.mrf.mxu0
        %v3305 = vadd.f32 %v3276, %v3304
        %v3306 = vpop.f32.mrf.mxu0
        %v3307 = vadd.f32 %v3278, %v3306
        %3308 = vmatmul.bf16.gmra.mxu0 %v2846
        %v3309 = vpop.f32.mrf.mxu0
        %v3310 = vadd.f32 %v3281, %v3309
        %v3311 = vpop.f32.mrf.mxu0
        %v3312 = vadd.f32 %v3283, %v3311
        %3313 = vmatmul.bf16.gmra.mxu0 %v2848
        %v3314 = vpop.f32.mrf.mxu0
        %v3315 = vadd.f32 %v3286, %v3314
        %v3316 = vpop.f32.mrf.mxu0
        %v3317 = vadd.f32 %v3288, %v3316
        %3318 = vmatmul.bf16.gmra.mxu0 %v2850
        %v3319 = vpop.f32.mrf.mxu0
        %v3320 = vadd.f32 %v3291, %v3319
        %v3321 = vpop.f32.mrf.mxu0
        %v3322 = vadd.f32 %v3293, %v3321
        %3323 = vdwg.mxu0
        %v3340 = vunpack.c.l.b16 %v3122
        %v3341 = vunpack.c.l.b16 %v3123
        %v3342 = vunpack.c.l.b16 %v3124
        %v3343 = vunpack.c.l.b16 %v3125
        %v3344 = vunpack.c.l.b16 %v3126
        %v3345 = vunpack.c.l.b16 %v3127
        %v3346 = vunpack.c.l.b16 %v3128
        %v3347 = vunpack.c.l.b16 %v3129
        %v3348 = vunpack.c.l.b16 %v3130
        %v3349 = vunpack.c.l.b16 %v3131
        %v3350 = vunpack.c.l.b16 %v3132
        %v3351 = vunpack.c.l.b16 %v3133
        %v3352 = vunpack.c.l.b16 %v3134
        %v3353 = vunpack.c.l.b16 %v3135
        %v3354 = vunpack.c.l.b16 %v3136
        %v3355 = vunpack.c.l.b16 %v3137
        %v3356 = vpack.c.b16 %v3341, %v3340
        %v3357 = vpack.c.b16 %v3343, %v3342
        %v3358 = vpack.c.b16 %v3345, %v3344
        %v3359 = vpack.c.b16 %v3347, %v3346
        %v3360 = vpack.c.b16 %v3349, %v3348
        %v3361 = vpack.c.b16 %v3351, %v3350
        %v3362 = vpack.c.b16 %v3353, %v3352
        %v3363 = vpack.c.b16 %v3355, %v3354
        %3372 = vmatpush.bf16.msra.mxu0 %v3363
        %3373 = vmatpush.bf16.msra.mxu0 %v3362
        %3374 = vmatpush.bf16.msra.mxu0 %v3361
        %3375 = vmatpush.bf16.msra.mxu0 %v3360
        %3376 = vmatpush.bf16.msra.mxu0 %v3359
        %3377 = vmatpush.bf16.msra.mxu0 %v3358
        %3378 = vmatpush.bf16.msra.mxu0 %v3357
        %3379 = vmatpush.bf16.msra.mxu0 %v3356
        %3380 = vmatmul.bf16.gmra.mxu0 %v3118
        %v3381 = vpop.f32.mrf.mxu0
        %v3382 = vadd.f32 %v3305, %v3381
        %v3383 = vpop.f32.mrf.mxu0
        %v3384 = vadd.f32 %v3307, %v3383
        %3385 = vmatmul.bf16.gmra.mxu0 %v3119
        %v3386 = vpop.f32.mrf.mxu0
        %v3387 = vadd.f32 %v3310, %v3386
        %v3388 = vpop.f32.mrf.mxu0
        %v3389 = vadd.f32 %v3312, %v3388
        %3390 = vmatmul.bf16.gmra.mxu0 %v3120
        %v3391 = vpop.f32.mrf.mxu0
        %v3392 = vadd.f32 %v3315, %v3391
        %v3393 = vpop.f32.mrf.mxu0
        %v3394 = vadd.f32 %v3317, %v3393
        %3395 = vmatmul.bf16.gmra.mxu0 %v3121
        %v3396 = vpop.f32.mrf.mxu0
        %v3397 = vadd.f32 %v3320, %v3396
        %v3398 = vpop.f32.mrf.mxu0
        %v3399 = vadd.f32 %v3322, %v3398
        %3400 = vdwg.mxu0
        %v3401 = vld [vmem:[#allocation14] sm:$0xf]
        %v3402 = vld [vmem:[#allocation14 + $0x4] sm:$0xf]
        %v3403 = vld [vmem:[#allocation14 + $0x8] sm:$0xf]
        %v3404 = vld [vmem:[#allocation14 + $0xc] sm:$0xf]
        %v3409 = vunpack.c.l.b16 %v3401
        %v3410 = vunpack.c.l.b16 %v3402
        %v3411 = vunpack.c.l.b16 %v3403
        %v3412 = vunpack.c.l.b16 %v3404
        %v3413 = vpack.c.b16 %v3410, %v3409
        %v3414 = vpack.c.b16 %v3412, %v3411
        %3417 = vmatpush.bf16.msra.mxu0 0
        %3418 = vmatpush.bf16.msra.mxu0 0
        %3419 = vmatpush.bf16.msra.mxu0 0
        %3420 = vmatpush.bf16.msra.mxu0 0
        %3421 = vmatpush.bf16.msra.mxu0 0
        %3422 = vmatpush.bf16.msra.mxu0 0
        %3423 = vmatpush.bf16.msra.mxu0 %v3414
        %3424 = vmatpush.bf16.msra.mxu0 %v3413
        %3425 = vmatmul.bf16.gmra.mxu0 %v2726
        %v3426 = vpop.f32.mrf.mxu0
        %v3427 = vadd.f32 0.0, %v3426
        %v3428 = vpop.f32.mrf.mxu0
        %v3429 = vadd.f32 0.0, %v3428
        %3430 = vmatmul.bf16.gmra.mxu0 %v2729
        %v3431 = vpop.f32.mrf.mxu0
        %v3432 = vadd.f32 0.0, %v3431
        %v3433 = vpop.f32.mrf.mxu0
        %v3434 = vadd.f32 0.0, %v3433
        %3435 = vmatmul.bf16.gmra.mxu0 %v2732
        %v3436 = vpop.f32.mrf.mxu0
        %v3437 = vadd.f32 0.0, %v3436
        %v3438 = vpop.f32.mrf.mxu0
        %v3439 = vadd.f32 0.0, %v3438
        %3440 = vmatmul.bf16.gmra.mxu0 %v2735
        %v3441 = vpop.f32.mrf.mxu0
        %v3442 = vadd.f32 0.0, %v3441
        %v3443 = vpop.f32.mrf.mxu0
        %v3444 = vadd.f32 0.0, %v3443
        %3445 = vdwg.mxu0
        %v3446 = vadd.f32 %v3382, %v3427
        %v3447 = vadd.f32 %v3384, %v3429
        %v3448 = vadd.f32 %v3387, %v3432
        %v3449 = vadd.f32 %v3389, %v3434
        %v3450 = vadd.f32 %v3392, %v3437
        %v3451 = vadd.f32 %v3394, %v3439
        %v3452 = vadd.f32 %v3397, %v3442
        %v3453 = vadd.f32 %v3399, %v3444
        %v3454 = vld [vmem:[%s12] sm:$0x1]
        %v3456 = vperm.slane %v3454, 0
        %v3458 = vadd.f32 %v3446, %v3456
        %v3459 = vadd.f32 %v3447, %v3456
        %v3460 = vadd.f32 %v3448, %v3456
        %v3461 = vadd.f32 %v3449, %v3456
        %v3462 = vadd.f32 %v3450, %v3456
        %v3463 = vadd.f32 %v3451, %v3456
        %v3464 = vadd.f32 %v3452, %v3456
        %v3465 = vadd.f32 %v3453, %v3456
        %vm3466 = vcmp.ge.f32.partialorder %v3458, 0.0
        %vm3467 = vcmp.ge.f32.partialorder %v3459, 0.0
        %vm3468 = vcmp.ge.f32.partialorder %v3460, 0.0
        %vm3469 = vcmp.ge.f32.partialorder %v3461, 0.0
        %vm3470 = vcmp.ge.f32.partialorder %v3462, 0.0
        %vm3471 = vcmp.ge.f32.partialorder %v3463, 0.0
        %vm3472 = vcmp.ge.f32.partialorder %v3464, 0.0
        %vm3473 = vcmp.ge.f32.partialorder %v3465, 0.0
        %v3474 = vmul.f32 %v3458, 0.01
        %v3475 = vmul.f32 %v3459, 0.01
        %v3476 = vmul.f32 %v3460, 0.01
        %v3477 = vmul.f32 %v3461, 0.01
        %v3478 = vmul.f32 %v3462, 0.01
        %v3479 = vmul.f32 %v3463, 0.01
        %v3480 = vmul.f32 %v3464, 0.01
        %v3481 = vmul.f32 %v3465, 0.01
        %v3482 = vsel %vm3466, %v3458, %v3474
        %v3483 = vsel %vm3467, %v3459, %v3475
        %v3484 = vsel %vm3468, %v3460, %v3476
        %v3485 = vsel %vm3469, %v3461, %v3477
        %v3486 = vsel %vm3470, %v3462, %v3478
        %v3487 = vsel %vm3471, %v3463, %v3479
        %v3488 = vsel %vm3472, %v3464, %v3480
        %v3489 = vsel %vm3473, %v3465, %v3481
        %v3490 = vpack.c.bf16 %v3483, %v3482
        %v3491 = vpack.c.bf16 %v3485, %v3484
        %v3492 = vpack.c.bf16 %v3487, %v3486
        %v3493 = vpack.c.bf16 %v3489, %v3488
        %v3494 = vld [vmem:[#allocation16] sm:$0xf]
        %v3495 = vld [vmem:[#allocation16 + $0x4] sm:$0xf]
        %v3496 = vld [vmem:[#allocation16 + $0x8] sm:$0xf]
        %v3497 = vld [vmem:[#allocation16 + $0xc] sm:$0xf]
        %v3498 = vld [vmem:[#allocation16 + $0x10] sm:$0xf]
        %v3499 = vld [vmem:[#allocation16 + $0x14] sm:$0xf]
        %v3500 = vld [vmem:[#allocation16 + $0x18] sm:$0xf]
        %v3501 = vld [vmem:[#allocation16 + $0x1c] sm:$0xf]
        %v3502 = vld [vmem:[#allocation16 + $0x20] sm:$0xf]
        %v3503 = vld [vmem:[#allocation16 + $0x24] sm:$0xf]
        %v3504 = vld [vmem:[#allocation16 + $0x28] sm:$0xf]
        %v3505 = vld [vmem:[#allocation16 + $0x2c] sm:$0xf]
        %v3506 = vld [vmem:[#allocation16 + $0x30] sm:$0xf]
        %v3507 = vld [vmem:[#allocation16 + $0x34] sm:$0xf]
        %v3508 = vld [vmem:[#allocation16 + $0x38] sm:$0xf]
        %v3509 = vld [vmem:[#allocation16 + $0x3c] sm:$0xf]
        %v3510 = vld [vmem:[#allocation17] sm:$0xf]
        %v3511 = vld [vmem:[#allocation17 + $0x4] sm:$0xf]
        %v3512 = vld [vmem:[#allocation17 + $0x8] sm:$0xf]
        %v3513 = vld [vmem:[#allocation17 + $0xc] sm:$0xf]
        %v3514 = vld [vmem:[#allocation17 + $0x10] sm:$0xf]
        %v3515 = vld [vmem:[#allocation17 + $0x14] sm:$0xf]
        %v3516 = vld [vmem:[#allocation17 + $0x18] sm:$0xf]
        %v3517 = vld [vmem:[#allocation17 + $0x1c] sm:$0xf]
        %v3518 = vld [vmem:[#allocation17 + $0x20] sm:$0xf]
        %v3519 = vld [vmem:[#allocation17 + $0x24] sm:$0xf]
        %v3520 = vld [vmem:[#allocation17 + $0x28] sm:$0xf]
        %v3521 = vld [vmem:[#allocation17 + $0x2c] sm:$0xf]
        %v3522 = vld [vmem:[#allocation17 + $0x30] sm:$0xf]
        %v3523 = vld [vmem:[#allocation17 + $0x34] sm:$0xf]
        %v3524 = vld [vmem:[#allocation17 + $0x38] sm:$0xf]
        %v3525 = vld [vmem:[#allocation17 + $0x3c] sm:$0xf]
        %v3542 = vunpack.c.l.b16 %v3510
        %v3543 = vunpack.c.l.b16 %v3511
        %v3544 = vunpack.c.l.b16 %v3512
        %v3545 = vunpack.c.l.b16 %v3513
        %v3546 = vunpack.c.l.b16 %v3514
        %v3547 = vunpack.c.l.b16 %v3515
        %v3548 = vunpack.c.l.b16 %v3516
        %v3549 = vunpack.c.l.b16 %v3517
        %v3550 = vunpack.c.l.b16 %v3518
        %v3551 = vunpack.c.l.b16 %v3519
        %v3552 = vunpack.c.l.b16 %v3520
        %v3553 = vunpack.c.l.b16 %v3521
        %v3554 = vunpack.c.l.b16 %v3522
        %v3555 = vunpack.c.l.b16 %v3523
        %v3556 = vunpack.c.l.b16 %v3524
        %v3557 = vunpack.c.l.b16 %v3525
        %v3558 = vpack.c.b16 %v3543, %v3542
        %v3559 = vpack.c.b16 %v3545, %v3544
        %v3560 = vpack.c.b16 %v3547, %v3546
        %v3561 = vpack.c.b16 %v3549, %v3548
        %v3562 = vpack.c.b16 %v3551, %v3550
        %v3563 = vpack.c.b16 %v3553, %v3552
        %v3564 = vpack.c.b16 %v3555, %v3554
        %v3565 = vpack.c.b16 %v3557, %v3556
        %3574 = vmatpush.bf16.msra.mxu0 %v3565
        %3575 = vmatpush.bf16.msra.mxu0 %v3564
        %3576 = vmatpush.bf16.msra.mxu0 %v3563
        %3577 = vmatpush.bf16.msra.mxu0 %v3562
        %3578 = vmatpush.bf16.msra.mxu0 %v3561
        %3579 = vmatpush.bf16.msra.mxu0 %v3560
        %3580 = vmatpush.bf16.msra.mxu0 %v3559
        %3581 = vmatpush.bf16.msra.mxu0 %v3558
        %3582 = vmatmul.bf16.gmra.mxu0 %v3118
        %v3583 = vpop.f32.mrf.mxu0
        %v3584 = vadd.f32 0.0, %v3583
        %v3585 = vpop.f32.mrf.mxu0
        %v3586 = vadd.f32 0.0, %v3585
        %3587 = vmatmul.bf16.gmra.mxu0 %v3119
        %v3588 = vpop.f32.mrf.mxu0
        %v3589 = vadd.f32 0.0, %v3588
        %v3590 = vpop.f32.mrf.mxu0
        %v3591 = vadd.f32 0.0, %v3590
        %3592 = vmatmul.bf16.gmra.mxu0 %v3120
        %v3593 = vpop.f32.mrf.mxu0
        %v3594 = vadd.f32 0.0, %v3593
        %v3595 = vpop.f32.mrf.mxu0
        %v3596 = vadd.f32 0.0, %v3595
        %3597 = vmatmul.bf16.gmra.mxu0 %v3121
        %v3598 = vpop.f32.mrf.mxu0
        %v3599 = vadd.f32 0.0, %v3598
        %v3600 = vpop.f32.mrf.mxu0
        %v3601 = vadd.f32 0.0, %v3600
        %3602 = vdwg.mxu0
        %v3619 = vunpack.c.l.b16 %v3494
        %v3620 = vunpack.c.l.b16 %v3495
        %v3621 = vunpack.c.l.b16 %v3496
        %v3622 = vunpack.c.l.b16 %v3497
        %v3623 = vunpack.c.l.b16 %v3498
        %v3624 = vunpack.c.l.b16 %v3499
        %v3625 = vunpack.c.l.b16 %v3500
        %v3626 = vunpack.c.l.b16 %v3501
        %v3627 = vunpack.c.l.b16 %v3502
        %v3628 = vunpack.c.l.b16 %v3503
        %v3629 = vunpack.c.l.b16 %v3504
        %v3630 = vunpack.c.l.b16 %v3505
        %v3631 = vunpack.c.l.b16 %v3506
        %v3632 = vunpack.c.l.b16 %v3507
        %v3633 = vunpack.c.l.b16 %v3508
        %v3634 = vunpack.c.l.b16 %v3509
        %v3635 = vpack.c.b16 %v3620, %v3619
        %v3636 = vpack.c.b16 %v3622, %v3621
        %v3637 = vpack.c.b16 %v3624, %v3623
        %v3638 = vpack.c.b16 %v3626, %v3625
        %v3639 = vpack.c.b16 %v3628, %v3627
        %v3640 = vpack.c.b16 %v3630, %v3629
        %v3641 = vpack.c.b16 %v3632, %v3631
        %v3642 = vpack.c.b16 %v3634, %v3633
        %3651 = vmatpush.bf16.msra.mxu0 %v3642
        %3652 = vmatpush.bf16.msra.mxu0 %v3641
        %3653 = vmatpush.bf16.msra.mxu0 %v3640
        %3654 = vmatpush.bf16.msra.mxu0 %v3639
        %3655 = vmatpush.bf16.msra.mxu0 %v3638
        %3656 = vmatpush.bf16.msra.mxu0 %v3637
        %3657 = vmatpush.bf16.msra.mxu0 %v3636
        %3658 = vmatpush.bf16.msra.mxu0 %v3635
        %3659 = vmatmul.bf16.gmra.mxu0 %v3490
        %v3660 = vpop.f32.mrf.mxu0
        %v3661 = vadd.f32 %v3584, %v3660
        %v3662 = vpop.f32.mrf.mxu0
        %v3663 = vadd.f32 %v3586, %v3662
        %3664 = vmatmul.bf16.gmra.mxu0 %v3491
        %v3665 = vpop.f32.mrf.mxu0
        %v3666 = vadd.f32 %v3589, %v3665
        %v3667 = vpop.f32.mrf.mxu0
        %v3668 = vadd.f32 %v3591, %v3667
        %3669 = vmatmul.bf16.gmra.mxu0 %v3492
        %v3670 = vpop.f32.mrf.mxu0
        %v3671 = vadd.f32 %v3594, %v3670
        %v3672 = vpop.f32.mrf.mxu0
        %v3673 = vadd.f32 %v3596, %v3672
        %3674 = vmatmul.bf16.gmra.mxu0 %v3493
        %v3675 = vpop.f32.mrf.mxu0
        %v3676 = vadd.f32 %v3599, %v3675
        %v3677 = vpop.f32.mrf.mxu0
        %v3678 = vadd.f32 %v3601, %v3677
        %3679 = vdwg.mxu0
        %v3680 = vld [vmem:[#allocation19] sm:$0xf]
        %v3681 = vld [vmem:[#allocation19 + $0x4] sm:$0xf]
        %v3682 = vld [vmem:[#allocation19 + $0x8] sm:$0xf]
        %v3683 = vld [vmem:[#allocation19 + $0xc] sm:$0xf]
        %v3684 = vld [vmem:[#allocation19 + $0x10] sm:$0xf]
        %v3685 = vld [vmem:[#allocation19 + $0x14] sm:$0xf]
        %v3686 = vld [vmem:[#allocation19 + $0x18] sm:$0xf]
        %v3687 = vld [vmem:[#allocation19 + $0x1c] sm:$0xf]
        %v3688 = vld [vmem:[#allocation19 + $0x20] sm:$0xf]
        %v3689 = vld [vmem:[#allocation19 + $0x24] sm:$0xf]
        %v3690 = vld [vmem:[#allocation19 + $0x28] sm:$0xf]
        %v3691 = vld [vmem:[#allocation19 + $0x2c] sm:$0xf]
        %v3692 = vld [vmem:[#allocation19 + $0x30] sm:$0xf]
        %v3693 = vld [vmem:[#allocation19 + $0x34] sm:$0xf]
        %v3694 = vld [vmem:[#allocation19 + $0x38] sm:$0xf]
        %v3695 = vld [vmem:[#allocation19 + $0x3c] sm:$0xf]
        %v3696 = vld [vmem:[#allocation19 + $0x40] sm:$0xf]
        %v3697 = vld [vmem:[#allocation19 + $0x44] sm:$0xf]
        %v3698 = vld [vmem:[#allocation19 + $0x48] sm:$0xf]
        %v3699 = vld [vmem:[#allocation19 + $0x4c] sm:$0xf]
        %v3700 = vld [vmem:[#allocation19 + $0x50] sm:$0xf]
        %v3701 = vld [vmem:[#allocation19 + $0x54] sm:$0xf]
        %v3702 = vld [vmem:[#allocation19 + $0x58] sm:$0xf]
        %v3703 = vld [vmem:[#allocation19 + $0x5c] sm:$0xf]
        %v3704 = vld [vmem:[#allocation19 + $0x60] sm:$0xf]
        %v3705 = vld [vmem:[#allocation19 + $0x64] sm:$0xf]
        %v3706 = vld [vmem:[#allocation19 + $0x68] sm:$0xf]
        %v3707 = vld [vmem:[#allocation19 + $0x6c] sm:$0xf]
        %v3708 = vld [vmem:[#allocation19 + $0x70] sm:$0xf]
        %v3709 = vld [vmem:[#allocation19 + $0x74] sm:$0xf]
        %v3710 = vld [vmem:[#allocation19 + $0x78] sm:$0xf]
        %v3711 = vld [vmem:[#allocation19 + $0x7c] sm:$0xf]
        %v3744 = vunpack.c.l.b16 %v3680
        %v3745 = vunpack.c.l.b16 %v3681
        %v3746 = vunpack.c.l.b16 %v3682
        %v3747 = vunpack.c.l.b16 %v3683
        %v3748 = vunpack.c.l.b16 %v3684
        %v3749 = vunpack.c.l.b16 %v3685
        %v3750 = vunpack.c.l.b16 %v3686
        %v3751 = vunpack.c.l.b16 %v3687
        %v3752 = vunpack.c.l.b16 %v3688
        %v3753 = vunpack.c.l.b16 %v3689
        %v3754 = vunpack.c.l.b16 %v3690
        %v3755 = vunpack.c.l.b16 %v3691
        %v3756 = vunpack.c.l.b16 %v3692
        %v3757 = vunpack.c.l.b16 %v3693
        %v3758 = vunpack.c.l.b16 %v3694
        %v3759 = vunpack.c.l.b16 %v3695
        %v3760 = vunpack.c.l.b16 %v3696
        %v3761 = vunpack.c.l.b16 %v3697
        %v3762 = vunpack.c.l.b16 %v3698
        %v3763 = vunpack.c.l.b16 %v3699
        %v3764 = vunpack.c.l.b16 %v3700
        %v3765 = vunpack.c.l.b16 %v3701
        %v3766 = vunpack.c.l.b16 %v3702
        %v3767 = vunpack.c.l.b16 %v3703
        %v3768 = vunpack.c.l.b16 %v3704
        %v3769 = vunpack.c.l.b16 %v3705
        %v3770 = vunpack.c.l.b16 %v3706
        %v3771 = vunpack.c.l.b16 %v3707
        %v3772 = vunpack.c.l.b16 %v3708
        %v3773 = vunpack.c.l.b16 %v3709
        %v3774 = vunpack.c.l.b16 %v3710
        %v3775 = vunpack.c.l.b16 %v3711
        %v3776 = vpack.c.b16 %v3745, %v3744
        %v3777 = vpack.c.b16 %v3747, %v3746
        %v3778 = vpack.c.b16 %v3749, %v3748
        %v3779 = vpack.c.b16 %v3751, %v3750
        %v3780 = vpack.c.b16 %v3753, %v3752
        %v3781 = vpack.c.b16 %v3755, %v3754
        %v3782 = vpack.c.b16 %v3757, %v3756
        %v3783 = vpack.c.b16 %v3759, %v3758
        %v3784 = vpack.c.b16 %v3761, %v3760
        %v3785 = vpack.c.b16 %v3763, %v3762
        %v3786 = vpack.c.b16 %v3765, %v3764
        %v3787 = vpack.c.b16 %v3767, %v3766
        %v3788 = vpack.c.b16 %v3769, %v3768
        %v3789 = vpack.c.b16 %v3771, %v3770
        %v3790 = vpack.c.b16 %v3773, %v3772
        %v3791 = vpack.c.b16 %v3775, %v3774
        %3808 = vmatpush.bf16.msra.mxu0 %v3783
        %3809 = vmatpush.bf16.msra.mxu0 %v3782
        %3810 = vmatpush.bf16.msra.mxu0 %v3781
        %3811 = vmatpush.bf16.msra.mxu0 %v3780
        %3812 = vmatpush.bf16.msra.mxu0 %v3779
        %3813 = vmatpush.bf16.msra.mxu0 %v3778
        %3814 = vmatpush.bf16.msra.mxu0 %v3777
        %3815 = vmatpush.bf16.msra.mxu0 %v3776
        %3816 = vmatmul.bf16.gmra.mxu0 %v2843
        %v3817 = vpop.f32.mrf.mxu0
        %v3818 = vadd.f32 0.0, %v3817
        %v3819 = vpop.f32.mrf.mxu0
        %v3820 = vadd.f32 0.0, %v3819
        %3821 = vmatmul.bf16.gmra.mxu0 %v2845
        %v3822 = vpop.f32.mrf.mxu0
        %v3823 = vadd.f32 0.0, %v3822
        %v3824 = vpop.f32.mrf.mxu0
        %v3825 = vadd.f32 0.0, %v3824
        %3826 = vmatmul.bf16.gmra.mxu0 %v2847
        %v3827 = vpop.f32.mrf.mxu0
        %v3828 = vadd.f32 0.0, %v3827
        %v3829 = vpop.f32.mrf.mxu0
        %v3830 = vadd.f32 0.0, %v3829
        %3831 = vmatmul.bf16.gmra.mxu0 %v2849
        %v3832 = vpop.f32.mrf.mxu0
        %v3833 = vadd.f32 0.0, %v3832
        %v3834 = vpop.f32.mrf.mxu0
        %v3835 = vadd.f32 0.0, %v3834
        %3836 = vdwg.mxu0
        %3837 = vmatpush.bf16.msra.mxu0 %v3791
        %3838 = vmatpush.bf16.msra.mxu0 %v3790
        %3839 = vmatpush.bf16.msra.mxu0 %v3789
        %3840 = vmatpush.bf16.msra.mxu0 %v3788
        %3841 = vmatpush.bf16.msra.mxu0 %v3787
        %3842 = vmatpush.bf16.msra.mxu0 %v3786
        %3843 = vmatpush.bf16.msra.mxu0 %v3785
        %3844 = vmatpush.bf16.msra.mxu0 %v3784
        %3845 = vmatmul.bf16.gmra.mxu0 %v2844
        %v3846 = vpop.f32.mrf.mxu0
        %v3847 = vadd.f32 %v3818, %v3846
        %v3848 = vpop.f32.mrf.mxu0
        %v3849 = vadd.f32 %v3820, %v3848
        %3850 = vmatmul.bf16.gmra.mxu0 %v2846
        %v3851 = vpop.f32.mrf.mxu0
        %v3852 = vadd.f32 %v3823, %v3851
        %v3853 = vpop.f32.mrf.mxu0
        %v3854 = vadd.f32 %v3825, %v3853
        %3855 = vmatmul.bf16.gmra.mxu0 %v2848
        %v3856 = vpop.f32.mrf.mxu0
        %v3857 = vadd.f32 %v3828, %v3856
        %v3858 = vpop.f32.mrf.mxu0
        %v3859 = vadd.f32 %v3830, %v3858
        %3860 = vmatmul.bf16.gmra.mxu0 %v2850
        %v3861 = vpop.f32.mrf.mxu0
        %v3862 = vadd.f32 %v3833, %v3861
        %v3863 = vpop.f32.mrf.mxu0
        %v3864 = vadd.f32 %v3835, %v3863
        %3865 = vdwg.mxu0
        %v3866 = vadd.f32 %v3661, %v3847
        %v3867 = vadd.f32 %v3663, %v3849
        %v3868 = vadd.f32 %v3666, %v3852
        %v3869 = vadd.f32 %v3668, %v3854
        %v3870 = vadd.f32 %v3671, %v3857
        %v3871 = vadd.f32 %v3673, %v3859
        %v3872 = vadd.f32 %v3676, %v3862
        %v3873 = vadd.f32 %v3678, %v3864
        %v3874 = vld [vmem:[#allocation20] sm:$0xf]
        %v3875 = vld [vmem:[#allocation20 + $0x4] sm:$0xf]
        %v3876 = vld [vmem:[#allocation20 + $0x8] sm:$0xf]
        %v3877 = vld [vmem:[#allocation20 + $0xc] sm:$0xf]
        %v3882 = vunpack.c.l.b16 %v3874
        %v3883 = vunpack.c.l.b16 %v3875
        %v3884 = vunpack.c.l.b16 %v3876
        %v3885 = vunpack.c.l.b16 %v3877
        %v3886 = vpack.c.b16 %v3883, %v3882
        %v3887 = vpack.c.b16 %v3885, %v3884
        %3890 = vmatpush.bf16.msra.mxu0 0
        %3891 = vmatpush.bf16.msra.mxu0 0
        %3892 = vmatpush.bf16.msra.mxu0 0
        %3893 = vmatpush.bf16.msra.mxu0 0
        %3894 = vmatpush.bf16.msra.mxu0 0
        %3895 = vmatpush.bf16.msra.mxu0 0
        %3896 = vmatpush.bf16.msra.mxu0 %v3887
        %3897 = vmatpush.bf16.msra.mxu0 %v3886
        %3898 = vmatmul.bf16.gmra.mxu0 %v2726
        %v3899 = vpop.f32.mrf.mxu0
        %v3900 = vadd.f32 0.0, %v3899
        %v3901 = vpop.f32.mrf.mxu0
        %v3902 = vadd.f32 0.0, %v3901
        %3903 = vmatmul.bf16.gmra.mxu0 %v2729
        %v3904 = vpop.f32.mrf.mxu0
        %v3905 = vadd.f32 0.0, %v3904
        %v3906 = vpop.f32.mrf.mxu0
        %v3907 = vadd.f32 0.0, %v3906
        %3908 = vmatmul.bf16.gmra.mxu0 %v2732
        %v3909 = vpop.f32.mrf.mxu0
        %v3910 = vadd.f32 0.0, %v3909
        %v3911 = vpop.f32.mrf.mxu0
        %v3912 = vadd.f32 0.0, %v3911
        %3913 = vmatmul.bf16.gmra.mxu0 %v2735
        %v3914 = vpop.f32.mrf.mxu0
        %v3915 = vadd.f32 0.0, %v3914
        %v3916 = vpop.f32.mrf.mxu0
        %v3917 = vadd.f32 0.0, %v3916
        %3918 = vdwg.mxu0
        %v3919 = vadd.f32 %v3866, %v3900
        %v3920 = vadd.f32 %v3867, %v3902
        %v3921 = vadd.f32 %v3868, %v3905
        %v3922 = vadd.f32 %v3869, %v3907
        %v3923 = vadd.f32 %v3870, %v3910
        %v3924 = vadd.f32 %v3871, %v3912
        %v3925 = vadd.f32 %v3872, %v3915
        %v3926 = vadd.f32 %v3873, %v3917
        %v3927 = vld [vmem:[%s17] sm:$0x1]
        %v3929 = vperm.slane %v3927, 0
        %v3931 = vadd.f32 %v3919, %v3929
        %v3932 = vadd.f32 %v3920, %v3929
        %v3933 = vadd.f32 %v3921, %v3929
        %v3934 = vadd.f32 %v3922, %v3929
        %v3935 = vadd.f32 %v3923, %v3929
        %v3936 = vadd.f32 %v3924, %v3929
        %v3937 = vadd.f32 %v3925, %v3929
        %v3938 = vadd.f32 %v3926, %v3929
        %vm3939 = vcmp.ge.f32.partialorder %v3931, 0.0
        %vm3940 = vcmp.ge.f32.partialorder %v3932, 0.0
        %vm3941 = vcmp.ge.f32.partialorder %v3933, 0.0
        %vm3942 = vcmp.ge.f32.partialorder %v3934, 0.0
        %vm3943 = vcmp.ge.f32.partialorder %v3935, 0.0
        %vm3944 = vcmp.ge.f32.partialorder %v3936, 0.0
        %vm3945 = vcmp.ge.f32.partialorder %v3937, 0.0
        %vm3946 = vcmp.ge.f32.partialorder %v3938, 0.0
        %v3947 = vmul.f32 %v3931, 0.01
        %v3948 = vmul.f32 %v3932, 0.01
        %v3949 = vmul.f32 %v3933, 0.01
        %v3950 = vmul.f32 %v3934, 0.01
        %v3951 = vmul.f32 %v3935, 0.01
        %v3952 = vmul.f32 %v3936, 0.01
        %v3953 = vmul.f32 %v3937, 0.01
        %v3954 = vmul.f32 %v3938, 0.01
        %v3955 = vsel %vm3939, %v3931, %v3947
        %v3956 = vsel %vm3940, %v3932, %v3948
        %v3957 = vsel %vm3941, %v3933, %v3949
        %v3958 = vsel %vm3942, %v3934, %v3950
        %v3959 = vsel %vm3943, %v3935, %v3951
        %v3960 = vsel %vm3944, %v3936, %v3952
        %v3961 = vsel %vm3945, %v3937, %v3953
        %v3962 = vsel %vm3946, %v3938, %v3954
        %v3963 = vpack.c.bf16 %v3956, %v3955
        %v3964 = vpack.c.bf16 %v3958, %v3957
        %v3965 = vpack.c.bf16 %v3960, %v3959
        %v3966 = vpack.c.bf16 %v3962, %v3961
        %v3967 = vld [vmem:[#allocation22] sm:$0xf]
        %v3968 = vld [vmem:[#allocation22 + $0x4] sm:$0xf]
        %v3969 = vld [vmem:[#allocation22 + $0x8] sm:$0xf]
        %v3970 = vld [vmem:[#allocation22 + $0xc] sm:$0xf]
        %v3971 = vld [vmem:[#allocation22 + $0x10] sm:$0xf]
        %v3972 = vld [vmem:[#allocation22 + $0x14] sm:$0xf]
        %v3973 = vld [vmem:[#allocation22 + $0x18] sm:$0xf]
        %v3974 = vld [vmem:[#allocation22 + $0x1c] sm:$0xf]
        %v3975 = vld [vmem:[#allocation22 + $0x20] sm:$0xf]
        %v3976 = vld [vmem:[#allocation22 + $0x24] sm:$0xf]
        %v3977 = vld [vmem:[#allocation22 + $0x28] sm:$0xf]
        %v3978 = vld [vmem:[#allocation22 + $0x2c] sm:$0xf]
        %v3979 = vld [vmem:[#allocation22 + $0x30] sm:$0xf]
        %v3980 = vld [vmem:[#allocation22 + $0x34] sm:$0xf]
        %v3981 = vld [vmem:[#allocation22 + $0x38] sm:$0xf]
        %v3982 = vld [vmem:[#allocation22 + $0x3c] sm:$0xf]
        %v3983 = vld [vmem:[#allocation23] sm:$0xf]
        %v3984 = vld [vmem:[#allocation23 + $0x4] sm:$0xf]
        %v3985 = vld [vmem:[#allocation23 + $0x8] sm:$0xf]
        %v3986 = vld [vmem:[#allocation23 + $0xc] sm:$0xf]
        %v3987 = vld [vmem:[#allocation23 + $0x10] sm:$0xf]
        %v3988 = vld [vmem:[#allocation23 + $0x14] sm:$0xf]
        %v3989 = vld [vmem:[#allocation23 + $0x18] sm:$0xf]
        %v3990 = vld [vmem:[#allocation23 + $0x1c] sm:$0xf]
        %v3991 = vld [vmem:[#allocation23 + $0x20] sm:$0xf]
        %v3992 = vld [vmem:[#allocation23 + $0x24] sm:$0xf]
        %v3993 = vld [vmem:[#allocation23 + $0x28] sm:$0xf]
        %v3994 = vld [vmem:[#allocation23 + $0x2c] sm:$0xf]
        %v3995 = vld [vmem:[#allocation23 + $0x30] sm:$0xf]
        %v3996 = vld [vmem:[#allocation23 + $0x34] sm:$0xf]
        %v3997 = vld [vmem:[#allocation23 + $0x38] sm:$0xf]
        %v3998 = vld [vmem:[#allocation23 + $0x3c] sm:$0xf]
        %v4015 = vunpack.c.l.b16 %v3983
        %v4016 = vunpack.c.l.b16 %v3984
        %v4017 = vunpack.c.l.b16 %v3985
        %v4018 = vunpack.c.l.b16 %v3986
        %v4019 = vunpack.c.l.b16 %v3987
        %v4020 = vunpack.c.l.b16 %v3988
        %v4021 = vunpack.c.l.b16 %v3989
        %v4022 = vunpack.c.l.b16 %v3990
        %v4023 = vunpack.c.l.b16 %v3991
        %v4024 = vunpack.c.l.b16 %v3992
        %v4025 = vunpack.c.l.b16 %v3993
        %v4026 = vunpack.c.l.b16 %v3994
        %v4027 = vunpack.c.l.b16 %v3995
        %v4028 = vunpack.c.l.b16 %v3996
        %v4029 = vunpack.c.l.b16 %v3997
        %v4030 = vunpack.c.l.b16 %v3998
        %v4031 = vpack.c.b16 %v4016, %v4015
        %v4032 = vpack.c.b16 %v4018, %v4017
        %v4033 = vpack.c.b16 %v4020, %v4019
        %v4034 = vpack.c.b16 %v4022, %v4021
        %v4035 = vpack.c.b16 %v4024, %v4023
        %v4036 = vpack.c.b16 %v4026, %v4025
        %v4037 = vpack.c.b16 %v4028, %v4027
        %v4038 = vpack.c.b16 %v4030, %v4029
        %4047 = vmatpush.bf16.msra.mxu0 %v4038
        %4048 = vmatpush.bf16.msra.mxu0 %v4037
        %4049 = vmatpush.bf16.msra.mxu0 %v4036
        %4050 = vmatpush.bf16.msra.mxu0 %v4035
        %4051 = vmatpush.bf16.msra.mxu0 %v4034
        %4052 = vmatpush.bf16.msra.mxu0 %v4033
        %4053 = vmatpush.bf16.msra.mxu0 %v4032
        %4054 = vmatpush.bf16.msra.mxu0 %v4031
        %4055 = vmatmul.bf16.gmra.mxu0 %v3490
        %v4056 = vpop.f32.mrf.mxu0
        %v4057 = vadd.f32 0.0, %v4056
        %v4058 = vpop.f32.mrf.mxu0
        %v4059 = vadd.f32 0.0, %v4058
        %4060 = vmatmul.bf16.gmra.mxu0 %v3491
        %v4061 = vpop.f32.mrf.mxu0
        %v4062 = vadd.f32 0.0, %v4061
        %v4063 = vpop.f32.mrf.mxu0
        %v4064 = vadd.f32 0.0, %v4063
        %4065 = vmatmul.bf16.gmra.mxu0 %v3492
        %v4066 = vpop.f32.mrf.mxu0
        %v4067 = vadd.f32 0.0, %v4066
        %v4068 = vpop.f32.mrf.mxu0
        %v4069 = vadd.f32 0.0, %v4068
        %4070 = vmatmul.bf16.gmra.mxu0 %v3493
        %v4071 = vpop.f32.mrf.mxu0
        %v4072 = vadd.f32 0.0, %v4071
        %v4073 = vpop.f32.mrf.mxu0
        %v4074 = vadd.f32 0.0, %v4073
        %4075 = vdwg.mxu0
        %v4092 = vunpack.c.l.b16 %v3967
        %v4093 = vunpack.c.l.b16 %v3968
        %v4094 = vunpack.c.l.b16 %v3969
        %v4095 = vunpack.c.l.b16 %v3970
        %v4096 = vunpack.c.l.b16 %v3971
        %v4097 = vunpack.c.l.b16 %v3972
        %v4098 = vunpack.c.l.b16 %v3973
        %v4099 = vunpack.c.l.b16 %v3974
        %v4100 = vunpack.c.l.b16 %v3975
        %v4101 = vunpack.c.l.b16 %v3976
        %v4102 = vunpack.c.l.b16 %v3977
        %v4103 = vunpack.c.l.b16 %v3978
        %v4104 = vunpack.c.l.b16 %v3979
        %v4105 = vunpack.c.l.b16 %v3980
        %v4106 = vunpack.c.l.b16 %v3981
        %v4107 = vunpack.c.l.b16 %v3982
        %v4108 = vpack.c.b16 %v4093, %v4092
        %v4109 = vpack.c.b16 %v4095, %v4094
        %v4110 = vpack.c.b16 %v4097, %v4096
        %v4111 = vpack.c.b16 %v4099, %v4098
        %v4112 = vpack.c.b16 %v4101, %v4100
        %v4113 = vpack.c.b16 %v4103, %v4102
        %v4114 = vpack.c.b16 %v4105, %v4104
        %v4115 = vpack.c.b16 %v4107, %v4106
        %4124 = vmatpush.bf16.msra.mxu0 %v4115
        %4125 = vmatpush.bf16.msra.mxu0 %v4114
        %4126 = vmatpush.bf16.msra.mxu0 %v4113
        %4127 = vmatpush.bf16.msra.mxu0 %v4112
        %4128 = vmatpush.bf16.msra.mxu0 %v4111
        %4129 = vmatpush.bf16.msra.mxu0 %v4110
        %4130 = vmatpush.bf16.msra.mxu0 %v4109
        %4131 = vmatpush.bf16.msra.mxu0 %v4108
        %4132 = vmatmul.bf16.gmra.mxu0 %v3963
        %v4133 = vpop.f32.mrf.mxu0
        %v4134 = vadd.f32 %v4057, %v4133
        %v4135 = vpop.f32.mrf.mxu0
        %v4136 = vadd.f32 %v4059, %v4135
        %4137 = vmatmul.bf16.gmra.mxu0 %v3964
        %v4138 = vpop.f32.mrf.mxu0
        %v4139 = vadd.f32 %v4062, %v4138
        %v4140 = vpop.f32.mrf.mxu0
        %v4141 = vadd.f32 %v4064, %v4140
        %4142 = vmatmul.bf16.gmra.mxu0 %v3965
        %v4143 = vpop.f32.mrf.mxu0
        %v4144 = vadd.f32 %v4067, %v4143
        %v4145 = vpop.f32.mrf.mxu0
        %v4146 = vadd.f32 %v4069, %v4145
        %4147 = vmatmul.bf16.gmra.mxu0 %v3966
        %v4148 = vpop.f32.mrf.mxu0
        %v4149 = vadd.f32 %v4072, %v4148
        %v4150 = vpop.f32.mrf.mxu0
        %v4151 = vadd.f32 %v4074, %v4150
        %4152 = vdwg.mxu0
        %v4153 = vld [vmem:[#allocation25] sm:$0xf]
        %v4154 = vld [vmem:[#allocation25 + $0x4] sm:$0xf]
        %v4155 = vld [vmem:[#allocation25 + $0x8] sm:$0xf]
        %v4156 = vld [vmem:[#allocation25 + $0xc] sm:$0xf]
        %v4157 = vld [vmem:[#allocation25 + $0x10] sm:$0xf]
        %v4158 = vld [vmem:[#allocation25 + $0x14] sm:$0xf]
        %v4159 = vld [vmem:[#allocation25 + $0x18] sm:$0xf]
        %v4160 = vld [vmem:[#allocation25 + $0x1c] sm:$0xf]
        %v4161 = vld [vmem:[#allocation25 + $0x20] sm:$0xf]
        %v4162 = vld [vmem:[#allocation25 + $0x24] sm:$0xf]
        %v4163 = vld [vmem:[#allocation25 + $0x28] sm:$0xf]
        %v4164 = vld [vmem:[#allocation25 + $0x2c] sm:$0xf]
        %v4165 = vld [vmem:[#allocation25 + $0x30] sm:$0xf]
        %v4166 = vld [vmem:[#allocation25 + $0x34] sm:$0xf]
        %v4167 = vld [vmem:[#allocation25 + $0x38] sm:$0xf]
        %v4168 = vld [vmem:[#allocation25 + $0x3c] sm:$0xf]
        %v4185 = vunpack.c.l.b16 %v4153
        %v4186 = vunpack.c.l.b16 %v4154
        %v4187 = vunpack.c.l.b16 %v4155
        %v4188 = vunpack.c.l.b16 %v4156
        %v4189 = vunpack.c.l.b16 %v4157
        %v4190 = vunpack.c.l.b16 %v4158
        %v4191 = vunpack.c.l.b16 %v4159
        %v4192 = vunpack.c.l.b16 %v4160
        %v4193 = vunpack.c.l.b16 %v4161
        %v4194 = vunpack.c.l.b16 %v4162
        %v4195 = vunpack.c.l.b16 %v4163
        %v4196 = vunpack.c.l.b16 %v4164
        %v4197 = vunpack.c.l.b16 %v4165
        %v4198 = vunpack.c.l.b16 %v4166
        %v4199 = vunpack.c.l.b16 %v4167
        %v4200 = vunpack.c.l.b16 %v4168
        %v4201 = vpack.c.b16 %v4186, %v4185
        %v4202 = vpack.c.b16 %v4188, %v4187
        %v4203 = vpack.c.b16 %v4190, %v4189
        %v4204 = vpack.c.b16 %v4192, %v4191
        %v4205 = vpack.c.b16 %v4194, %v4193
        %v4206 = vpack.c.b16 %v4196, %v4195
        %v4207 = vpack.c.b16 %v4198, %v4197
        %v4208 = vpack.c.b16 %v4200, %v4199
        %4217 = vmatpush.bf16.msra.mxu0 %v4208
        %4218 = vmatpush.bf16.msra.mxu0 %v4207
        %4219 = vmatpush.bf16.msra.mxu0 %v4206
        %4220 = vmatpush.bf16.msra.mxu0 %v4205
        %4221 = vmatpush.bf16.msra.mxu0 %v4204
        %4222 = vmatpush.bf16.msra.mxu0 %v4203
        %4223 = vmatpush.bf16.msra.mxu0 %v4202
        %4224 = vmatpush.bf16.msra.mxu0 %v4201
        %4225 = vmatmul.bf16.gmra.mxu0 %v3118
        %v4226 = vpop.f32.mrf.mxu0
        %v4227 = vadd.f32 0.0, %v4226
        %v4228 = vpop.f32.mrf.mxu0
        %v4229 = vadd.f32 0.0, %v4228
        %4230 = vmatmul.bf16.gmra.mxu0 %v3119
        %v4231 = vpop.f32.mrf.mxu0
        %v4232 = vadd.f32 0.0, %v4231
        %v4233 = vpop.f32.mrf.mxu0
        %v4234 = vadd.f32 0.0, %v4233
        %4235 = vmatmul.bf16.gmra.mxu0 %v3120
        %v4236 = vpop.f32.mrf.mxu0
        %v4237 = vadd.f32 0.0, %v4236
        %v4238 = vpop.f32.mrf.mxu0
        %v4239 = vadd.f32 0.0, %v4238
        %4240 = vmatmul.bf16.gmra.mxu0 %v3121
        %v4241 = vpop.f32.mrf.mxu0
        %v4242 = vadd.f32 0.0, %v4241
        %v4243 = vpop.f32.mrf.mxu0
        %v4244 = vadd.f32 0.0, %v4243
        %4245 = vdwg.mxu0
        %v4246 = vadd.f32 %v4134, %v4227
        %v4247 = vadd.f32 %v4136, %v4229
        %v4248 = vadd.f32 %v4139, %v4232
        %v4249 = vadd.f32 %v4141, %v4234
        %v4250 = vadd.f32 %v4144, %v4237
        %v4251 = vadd.f32 %v4146, %v4239
        %v4252 = vadd.f32 %v4149, %v4242
        %v4253 = vadd.f32 %v4151, %v4244
        %v4254 = vld [vmem:[#allocation26] sm:$0xf]
        %v4255 = vld [vmem:[#allocation26 + $0x4] sm:$0xf]
        %v4256 = vld [vmem:[#allocation26 + $0x8] sm:$0xf]
        %v4257 = vld [vmem:[#allocation26 + $0xc] sm:$0xf]
        %v4258 = vld [vmem:[#allocation26 + $0x10] sm:$0xf]
        %v4259 = vld [vmem:[#allocation26 + $0x14] sm:$0xf]
        %v4260 = vld [vmem:[#allocation26 + $0x18] sm:$0xf]
        %v4261 = vld [vmem:[#allocation26 + $0x1c] sm:$0xf]
        %v4262 = vld [vmem:[#allocation26 + $0x20] sm:$0xf]
        %v4263 = vld [vmem:[#allocation26 + $0x24] sm:$0xf]
        %v4264 = vld [vmem:[#allocation26 + $0x28] sm:$0xf]
        %v4265 = vld [vmem:[#allocation26 + $0x2c] sm:$0xf]
        %v4266 = vld [vmem:[#allocation26 + $0x30] sm:$0xf]
        %v4267 = vld [vmem:[#allocation26 + $0x34] sm:$0xf]
        %v4268 = vld [vmem:[#allocation26 + $0x38] sm:$0xf]
        %v4269 = vld [vmem:[#allocation26 + $0x3c] sm:$0xf]
        %v4270 = vld [vmem:[#allocation26 + $0x40] sm:$0xf]
        %v4271 = vld [vmem:[#allocation26 + $0x44] sm:$0xf]
        %v4272 = vld [vmem:[#allocation26 + $0x48] sm:$0xf]
        %v4273 = vld [vmem:[#allocation26 + $0x4c] sm:$0xf]
        %v4274 = vld [vmem:[#allocation26 + $0x50] sm:$0xf]
        %v4275 = vld [vmem:[#allocation26 + $0x54] sm:$0xf]
        %v4276 = vld [vmem:[#allocation26 + $0x58] sm:$0xf]
        %v4277 = vld [vmem:[#allocation26 + $0x5c] sm:$0xf]
        %v4278 = vld [vmem:[#allocation26 + $0x60] sm:$0xf]
        %v4279 = vld [vmem:[#allocation26 + $0x64] sm:$0xf]
        %v4280 = vld [vmem:[#allocation26 + $0x68] sm:$0xf]
        %v4281 = vld [vmem:[#allocation26 + $0x6c] sm:$0xf]
        %v4282 = vld [vmem:[#allocation26 + $0x70] sm:$0xf]
        %v4283 = vld [vmem:[#allocation26 + $0x74] sm:$0xf]
        %v4284 = vld [vmem:[#allocation26 + $0x78] sm:$0xf]
        %v4285 = vld [vmem:[#allocation26 + $0x7c] sm:$0xf]
        %v4318 = vunpack.c.l.b16 %v4254
        %v4319 = vunpack.c.l.b16 %v4255
        %v4320 = vunpack.c.l.b16 %v4256
        %v4321 = vunpack.c.l.b16 %v4257
        %v4322 = vunpack.c.l.b16 %v4258
        %v4323 = vunpack.c.l.b16 %v4259
        %v4324 = vunpack.c.l.b16 %v4260
        %v4325 = vunpack.c.l.b16 %v4261
        %v4326 = vunpack.c.l.b16 %v4262
        %v4327 = vunpack.c.l.b16 %v4263
        %v4328 = vunpack.c.l.b16 %v4264
        %v4329 = vunpack.c.l.b16 %v4265
        %v4330 = vunpack.c.l.b16 %v4266
        %v4331 = vunpack.c.l.b16 %v4267
        %v4332 = vunpack.c.l.b16 %v4268
        %v4333 = vunpack.c.l.b16 %v4269
        %v4334 = vunpack.c.l.b16 %v4270
        %v4335 = vunpack.c.l.b16 %v4271
        %v4336 = vunpack.c.l.b16 %v4272
        %v4337 = vunpack.c.l.b16 %v4273
        %v4338 = vunpack.c.l.b16 %v4274
        %v4339 = vunpack.c.l.b16 %v4275
        %v4340 = vunpack.c.l.b16 %v4276
        %v4341 = vunpack.c.l.b16 %v4277
        %v4342 = vunpack.c.l.b16 %v4278
        %v4343 = vunpack.c.l.b16 %v4279
        %v4344 = vunpack.c.l.b16 %v4280
        %v4345 = vunpack.c.l.b16 %v4281
        %v4346 = vunpack.c.l.b16 %v4282
        %v4347 = vunpack.c.l.b16 %v4283
        %v4348 = vunpack.c.l.b16 %v4284
        %v4349 = vunpack.c.l.b16 %v4285
        %v4350 = vpack.c.b16 %v4319, %v4318
        %v4351 = vpack.c.b16 %v4321, %v4320
        %v4352 = vpack.c.b16 %v4323, %v4322
        %v4353 = vpack.c.b16 %v4325, %v4324
        %v4354 = vpack.c.b16 %v4327, %v4326
        %v4355 = vpack.c.b16 %v4329, %v4328
        %v4356 = vpack.c.b16 %v4331, %v4330
        %v4357 = vpack.c.b16 %v4333, %v4332
        %v4358 = vpack.c.b16 %v4335, %v4334
        %v4359 = vpack.c.b16 %v4337, %v4336
        %v4360 = vpack.c.b16 %v4339, %v4338
        %v4361 = vpack.c.b16 %v4341, %v4340
        %v4362 = vpack.c.b16 %v4343, %v4342
        %v4363 = vpack.c.b16 %v4345, %v4344
        %v4364 = vpack.c.b16 %v4347, %v4346
        %v4365 = vpack.c.b16 %v4349, %v4348
        %4382 = vmatpush.bf16.msra.mxu0 %v4357
        %4383 = vmatpush.bf16.msra.mxu0 %v4356
        %4384 = vmatpush.bf16.msra.mxu0 %v4355
        %4385 = vmatpush.bf16.msra.mxu0 %v4354
        %4386 = vmatpush.bf16.msra.mxu0 %v4353
        %4387 = vmatpush.bf16.msra.mxu0 %v4352
        %4388 = vmatpush.bf16.msra.mxu0 %v4351
        %4389 = vmatpush.bf16.msra.mxu0 %v4350
        %4390 = vmatmul.bf16.gmra.mxu0 %v2843
        %v4391 = vpop.f32.mrf.mxu0
        %v4392 = vadd.f32 0.0, %v4391
        %v4393 = vpop.f32.mrf.mxu0
        %v4394 = vadd.f32 0.0, %v4393
        %4395 = vmatmul.bf16.gmra.mxu0 %v2845
        %v4396 = vpop.f32.mrf.mxu0
        %v4397 = vadd.f32 0.0, %v4396
        %v4398 = vpop.f32.mrf.mxu0
        %v4399 = vadd.f32 0.0, %v4398
        %4400 = vmatmul.bf16.gmra.mxu0 %v2847
        %v4401 = vpop.f32.mrf.mxu0
        %v4402 = vadd.f32 0.0, %v4401
        %v4403 = vpop.f32.mrf.mxu0
        %v4404 = vadd.f32 0.0, %v4403
        %4405 = vmatmul.bf16.gmra.mxu0 %v2849
        %v4406 = vpop.f32.mrf.mxu0
        %v4407 = vadd.f32 0.0, %v4406
        %v4408 = vpop.f32.mrf.mxu0
        %v4409 = vadd.f32 0.0, %v4408
        %4410 = vdwg.mxu0
        %4411 = vmatpush.bf16.msra.mxu0 %v4365
        %4412 = vmatpush.bf16.msra.mxu0 %v4364
        %4413 = vmatpush.bf16.msra.mxu0 %v4363
        %4414 = vmatpush.bf16.msra.mxu0 %v4362
        %4415 = vmatpush.bf16.msra.mxu0 %v4361
        %4416 = vmatpush.bf16.msra.mxu0 %v4360
        %4417 = vmatpush.bf16.msra.mxu0 %v4359
        %4418 = vmatpush.bf16.msra.mxu0 %v4358
        %4419 = vmatmul.bf16.gmra.mxu0 %v2844
        %v4420 = vpop.f32.mrf.mxu0
        %v4421 = vadd.f32 %v4392, %v4420
        %v4422 = vpop.f32.mrf.mxu0
        %v4423 = vadd.f32 %v4394, %v4422
        %4424 = vmatmul.bf16.gmra.mxu0 %v2846
        %v4425 = vpop.f32.mrf.mxu0
        %v4426 = vadd.f32 %v4397, %v4425
        %v4427 = vpop.f32.mrf.mxu0
        %v4428 = vadd.f32 %v4399, %v4427
        %4429 = vmatmul.bf16.gmra.mxu0 %v2848
        %v4430 = vpop.f32.mrf.mxu0
        %v4431 = vadd.f32 %v4402, %v4430
        %v4432 = vpop.f32.mrf.mxu0
        %v4433 = vadd.f32 %v4404, %v4432
        %4434 = vmatmul.bf16.gmra.mxu0 %v2850
        %v4435 = vpop.f32.mrf.mxu0
        %v4436 = vadd.f32 %v4407, %v4435
        %v4437 = vpop.f32.mrf.mxu0
        %v4438 = vadd.f32 %v4409, %v4437
        %4439 = vdwg.mxu0
        %v4440 = vadd.f32 %v4246, %v4421
        %v4441 = vadd.f32 %v4247, %v4423
        %v4442 = vadd.f32 %v4248, %v4426
        %v4443 = vadd.f32 %v4249, %v4428
        %v4444 = vadd.f32 %v4250, %v4431
        %v4445 = vadd.f32 %v4251, %v4433
        %v4446 = vadd.f32 %v4252, %v4436
        %v4447 = vadd.f32 %v4253, %v4438
        %v4448 = vld [vmem:[#allocation28] sm:$0xf]
        %v4449 = vld [vmem:[#allocation28 + $0x4] sm:$0xf]
        %v4450 = vld [vmem:[#allocation28 + $0x8] sm:$0xf]
        %v4451 = vld [vmem:[#allocation28 + $0xc] sm:$0xf]
        %v4456 = vunpack.c.l.b16 %v4448
        %v4457 = vunpack.c.l.b16 %v4449
        %v4458 = vunpack.c.l.b16 %v4450
        %v4459 = vunpack.c.l.b16 %v4451
        %v4460 = vpack.c.b16 %v4457, %v4456
        %v4461 = vpack.c.b16 %v4459, %v4458
        %4464 = vmatpush.bf16.msra.mxu0 0
        %4465 = vmatpush.bf16.msra.mxu0 0
        %4466 = vmatpush.bf16.msra.mxu0 0
        %4467 = vmatpush.bf16.msra.mxu0 0
        %4468 = vmatpush.bf16.msra.mxu0 0
        %4469 = vmatpush.bf16.msra.mxu0 0
        %4470 = vmatpush.bf16.msra.mxu0 %v4461
        %4471 = vmatpush.bf16.msra.mxu0 %v4460
        %4472 = vmatmul.bf16.gmra.mxu0 %v2726
        %v4473 = vpop.f32.mrf.mxu0
        %v4474 = vadd.f32 0.0, %v4473
        %v4475 = vpop.f32.mrf.mxu0
        %v4476 = vadd.f32 0.0, %v4475
        %4477 = vmatmul.bf16.gmra.mxu0 %v2729
        %v4478 = vpop.f32.mrf.mxu0
        %v4479 = vadd.f32 0.0, %v4478
        %v4480 = vpop.f32.mrf.mxu0
        %v4481 = vadd.f32 0.0, %v4480
        %4482 = vmatmul.bf16.gmra.mxu0 %v2732
        %v4483 = vpop.f32.mrf.mxu0
        %v4484 = vadd.f32 0.0, %v4483
        %v4485 = vpop.f32.mrf.mxu0
        %v4486 = vadd.f32 0.0, %v4485
        %4487 = vmatmul.bf16.gmra.mxu0 %v2735
        %v4488 = vpop.f32.mrf.mxu0
        %v4489 = vadd.f32 0.0, %v4488
        %v4490 = vpop.f32.mrf.mxu0
        %v4491 = vadd.f32 0.0, %v4490
        %4492 = vdwg.mxu0
        %v4493 = vadd.f32 %v4440, %v4474
        %v4494 = vadd.f32 %v4441, %v4476
        %v4495 = vadd.f32 %v4442, %v4479
        %v4496 = vadd.f32 %v4443, %v4481
        %v4497 = vadd.f32 %v4444, %v4484
        %v4498 = vadd.f32 %v4445, %v4486
        %v4499 = vadd.f32 %v4446, %v4489
        %v4500 = vadd.f32 %v4447, %v4491
        %v4501 = vld [vmem:[%s23] sm:$0x1]
        %v4503 = vperm.slane %v4501, 0
        %v4505 = vadd.f32 %v4493, %v4503
        %v4506 = vadd.f32 %v4494, %v4503
        %v4507 = vadd.f32 %v4495, %v4503
        %v4508 = vadd.f32 %v4496, %v4503
        %v4509 = vadd.f32 %v4497, %v4503
        %v4510 = vadd.f32 %v4498, %v4503
        %v4511 = vadd.f32 %v4499, %v4503
        %v4512 = vadd.f32 %v4500, %v4503
        %vm4513 = vcmp.ge.f32.partialorder %v4505, 0.0
        %vm4514 = vcmp.ge.f32.partialorder %v4506, 0.0
        %vm4515 = vcmp.ge.f32.partialorder %v4507, 0.0
        %vm4516 = vcmp.ge.f32.partialorder %v4508, 0.0
        %vm4517 = vcmp.ge.f32.partialorder %v4509, 0.0
        %vm4518 = vcmp.ge.f32.partialorder %v4510, 0.0
        %vm4519 = vcmp.ge.f32.partialorder %v4511, 0.0
        %vm4520 = vcmp.ge.f32.partialorder %v4512, 0.0
        %v4521 = vmul.f32 %v4505, 0.01
        %v4522 = vmul.f32 %v4506, 0.01
        %v4523 = vmul.f32 %v4507, 0.01
        %v4524 = vmul.f32 %v4508, 0.01
        %v4525 = vmul.f32 %v4509, 0.01
        %v4526 = vmul.f32 %v4510, 0.01
        %v4527 = vmul.f32 %v4511, 0.01
        %v4528 = vmul.f32 %v4512, 0.01
        %v4529 = vsel %vm4513, %v4505, %v4521
        %v4530 = vsel %vm4514, %v4506, %v4522
        %v4531 = vsel %vm4515, %v4507, %v4523
        %v4532 = vsel %vm4516, %v4508, %v4524
        %v4533 = vsel %vm4517, %v4509, %v4525
        %v4534 = vsel %vm4518, %v4510, %v4526
        %v4535 = vsel %vm4519, %v4511, %v4527
        %v4536 = vsel %vm4520, %v4512, %v4528
        %v4537 = vpack.c.bf16 %v4530, %v4529
        %v4538 = vpack.c.bf16 %v4532, %v4531
        %v4539 = vpack.c.bf16 %v4534, %v4533
        %v4540 = vpack.c.bf16 %v4536, %v4535
        %v4541 = vld [vmem:[#allocation29] sm:$0xf]
        %v4542 = vld [vmem:[#allocation29 + $0x4] sm:$0xf]
        %v4543 = vld [vmem:[#allocation29 + $0x8] sm:$0xf]
        %v4544 = vld [vmem:[#allocation29 + $0xc] sm:$0xf]
        %v4545 = vld [vmem:[#allocation29 + $0x10] sm:$0xf]
        %v4546 = vld [vmem:[#allocation29 + $0x14] sm:$0xf]
        %v4547 = vld [vmem:[#allocation29 + $0x18] sm:$0xf]
        %v4548 = vld [vmem:[#allocation29 + $0x1c] sm:$0xf]
        %v4549 = vld [vmem:[#allocation29 + $0x20] sm:$0xf]
        %v4550 = vld [vmem:[#allocation29 + $0x24] sm:$0xf]
        %v4551 = vld [vmem:[#allocation29 + $0x28] sm:$0xf]
        %v4552 = vld [vmem:[#allocation29 + $0x2c] sm:$0xf]
        %v4553 = vld [vmem:[#allocation29 + $0x30] sm:$0xf]
        %v4554 = vld [vmem:[#allocation29 + $0x34] sm:$0xf]
        %v4555 = vld [vmem:[#allocation29 + $0x38] sm:$0xf]
        %v4556 = vld [vmem:[#allocation29 + $0x3c] sm:$0xf]
        %v4557 = vld [vmem:[%s25] sm:$0x1]
        %v4559 = vperm.slane %v4557, 0
        %v4577 = vunpack.c.l.b16 %v4541
        %v4578 = vunpack.c.l.b16 %v4542
        %v4579 = vunpack.c.l.b16 %v4543
        %v4580 = vunpack.c.l.b16 %v4544
        %v4581 = vunpack.c.l.b16 %v4545
        %v4582 = vunpack.c.l.b16 %v4546
        %v4583 = vunpack.c.l.b16 %v4547
        %v4584 = vunpack.c.l.b16 %v4548
        %v4585 = vunpack.c.l.b16 %v4549
        %v4586 = vunpack.c.l.b16 %v4550
        %v4587 = vunpack.c.l.b16 %v4551
        %v4588 = vunpack.c.l.b16 %v4552
        %v4589 = vunpack.c.l.b16 %v4553
        %v4590 = vunpack.c.l.b16 %v4554
        %v4591 = vunpack.c.l.b16 %v4555
        %v4592 = vunpack.c.l.b16 %v4556
        %v4593 = vpack.c.b16 %v4578, %v4577
        %v4594 = vpack.c.b16 %v4580, %v4579
        %v4595 = vpack.c.b16 %v4582, %v4581
        %v4596 = vpack.c.b16 %v4584, %v4583
        %v4597 = vpack.c.b16 %v4586, %v4585
        %v4598 = vpack.c.b16 %v4588, %v4587
        %v4599 = vpack.c.b16 %v4590, %v4589
        %v4600 = vpack.c.b16 %v4592, %v4591
        %4609 = vmatpush.bf16.msra.mxu0 %v4600
        %4610 = vmatpush.bf16.msra.mxu0 %v4599
        %4611 = vmatpush.bf16.msra.mxu0 %v4598
        %4612 = vmatpush.bf16.msra.mxu0 %v4597
        %4613 = vmatpush.bf16.msra.mxu0 %v4596
        %4614 = vmatpush.bf16.msra.mxu0 %v4595
        %4615 = vmatpush.bf16.msra.mxu0 %v4594
        %4616 = vmatpush.bf16.msra.mxu0 %v4593
        %4617 = vmatmul.bf16.gmra.mxu0 %v4537
        %v4618 = vpop.f32.mrf.mxu0
        %v4619 = vadd.f32 %v4559, %v4618
        %v4620 = vpop.f32.mrf.mxu0
        %v4621 = vadd.f32 %v4559, %v4620
        %4622 = vmatmul.bf16.gmra.mxu0 %v4538
        %v4623 = vpop.f32.mrf.mxu0
        %v4624 = vadd.f32 %v4559, %v4623
        %v4625 = vpop.f32.mrf.mxu0
        %v4626 = vadd.f32 %v4559, %v4625
        %4627 = vmatmul.bf16.gmra.mxu0 %v4539
        %v4628 = vpop.f32.mrf.mxu0
        %v4629 = vadd.f32 %v4559, %v4628
        %v4630 = vpop.f32.mrf.mxu0
        %v4631 = vadd.f32 %v4559, %v4630
        %4632 = vmatmul.bf16.gmra.mxu0 %v4540
        %v4633 = vpop.f32.mrf.mxu0
        %v4634 = vadd.f32 %v4559, %v4633
        %v4635 = vpop.f32.mrf.mxu0
        %v4636 = vadd.f32 %v4559, %v4635
        %4637 = vdwg.mxu0
        %4638 = vmax.xlane.f32.xlu0 %v4619
        %v4639 = vpop.xlane.xlu0 %4638
        %4640 = vmax.xlane.f32.xlu0 %v4621
        %v4641 = vpop.xlane.xlu0 %4640
        %4642 = vmax.xlane.f32.xlu0 %v4624
        %v4643 = vpop.xlane.xlu0 %4642
        %4644 = vmax.xlane.f32.xlu0 %v4626
        %v4645 = vpop.xlane.xlu0 %4644
        %4646 = vmax.xlane.f32.xlu0 %v4629
        %v4647 = vpop.xlane.xlu0 %4646
        %4648 = vmax.xlane.f32.xlu0 %v4631
        %v4649 = vpop.xlane.xlu0 %4648
        %4650 = vmax.xlane.f32.xlu0 %v4634
        %v4651 = vpop.xlane.xlu0 %4650
        %4652 = vmax.xlane.f32.xlu0 %v4636
        %v4653 = vpop.xlane.xlu0 %4652
        %v4654 = vsub.f32 %v4619, %v4639
        %v4655 = vsub.f32 %v4621, %v4641
        %v4656 = vsub.f32 %v4624, %v4643
        %v4657 = vsub.f32 %v4626, %v4645
        %v4658 = vsub.f32 %v4629, %v4647
        %v4659 = vsub.f32 %v4631, %v4649
        %v4660 = vsub.f32 %v4634, %v4651
        %v4661 = vsub.f32 %v4636, %v4653
        %v4662 = vmul.f32 %v4654, 1.442695
        %v4663 = vpow.pop %v4662
        %v4664 = vmul.f32 %v4655, 1.442695
        %v4665 = vpow.pop %v4664
        %v4666 = vmul.f32 %v4656, 1.442695
        %v4667 = vpow.pop %v4666
        %v4668 = vmul.f32 %v4657, 1.442695
        %v4669 = vpow.pop %v4668
        %v4670 = vmul.f32 %v4658, 1.442695
        %v4671 = vpow.pop %v4670
        %v4672 = vmul.f32 %v4659, 1.442695
        %v4673 = vpow.pop %v4672
        %v4674 = vmul.f32 %v4660, 1.442695
        %v4675 = vpow.pop %v4674
        %v4676 = vmul.f32 %v4661, 1.442695
        %v4677 = vpow.pop %v4676
        %4678 = vadd.xlane.f32.xlu0 %v4663
        %v4679 = vpop.xlane.xlu0 %4678
        %4680 = vadd.xlane.f32.xlu0 %v4665
        %v4681 = vpop.xlane.xlu0 %4680
        %4682 = vadd.xlane.f32.xlu0 %v4667
        %v4683 = vpop.xlane.xlu0 %4682
        %4684 = vadd.xlane.f32.xlu0 %v4669
        %v4685 = vpop.xlane.xlu0 %4684
        %4686 = vadd.xlane.f32.xlu0 %v4671
        %v4687 = vpop.xlane.xlu0 %4686
        %4688 = vadd.xlane.f32.xlu0 %v4673
        %v4689 = vpop.xlane.xlu0 %4688
        %4690 = vadd.xlane.f32.xlu0 %v4675
        %v4691 = vpop.xlane.xlu0 %4690
        %4692 = vadd.xlane.f32.xlu0 %v4677
        %v4693 = vpop.xlane.xlu0 %4692
        %v4694 = vrcp.pop %v4679
        %v4695 = vrcp.pop %v4681
        %v4696 = vrcp.pop %v4683
        %v4697 = vrcp.pop %v4685
        %v4698 = vrcp.pop %v4687
        %v4699 = vrcp.pop %v4689
        %v4700 = vrcp.pop %v4691
        %v4701 = vrcp.pop %v4693
        %v4702 = vmul.f32 %v4663, %v4694
        %v4703 = vmul.f32 %v4665, %v4695
        %v4704 = vmul.f32 %v4667, %v4696
        %v4705 = vmul.f32 %v4669, %v4697
        %v4706 = vmul.f32 %v4671, %v4698
        %v4707 = vmul.f32 %v4673, %v4699
        %v4708 = vmul.f32 %v4675, %v4700
        %v4709 = vmul.f32 %v4677, %v4701
        %v4710 = vpack.c.bf16 %v4702, %v4702
        %v4711 = vpack.c.bf16 %v4703, %v4703
        %v4712 = vpack.c.bf16 %v4704, %v4704
        %v4713 = vpack.c.bf16 %v4705, %v4705
        %v4714 = vpack.c.bf16 %v4706, %v4706
        %v4715 = vpack.c.bf16 %v4707, %v4707
        %v4716 = vpack.c.bf16 %v4708, %v4708
        %v4717 = vpack.c.bf16 %v4709, %v4709
        %4718 = vst [vmem:[%s1074] sm:$0xf] %v4710
        %4719 = vst [vmem:[%s1074 + $0x4] sm:$0xf] %v4711
        %4720 = vst [vmem:[%s1074 + $0x8] sm:$0xf] %v4712
        %4721 = vst [vmem:[%s1074 + $0xc] sm:$0xf] %v4713
        %4722 = vst [vmem:[%s1074 + $0x10] sm:$0xf] %v4714
        %4723 = vst [vmem:[%s1074 + $0x14] sm:$0xf] %v4715
        %4724 = vst [vmem:[%s1074 + $0x18] sm:$0xf] %v4716
        %4725 = vst [vmem:[%s1074 + $0x1c] sm:$0xf] %v4717
        %s4726 = sand.u32 %s609, 1
        %s4727 = scalar_lea.sflag [#allocation4], %s4726
        %s4728 = sand.u32 %s609, 1
        %s4729 = smul.addr %s4728, 32
        %s4730 = scalar_lea.vmem [#allocation31], %s4729
        // Predicated region
        $region197: #{tpu_custom_call.1} parent=123 // pred_check
          %p4731 = pneg %p619
        $region198: #{tpu_custom_call.1} parent=123 // pred_check_branch
          %4733 = sbr.rel (%p4731) target = $region200
        $region199: #{tpu_custom_call.1} parent=123 // pred_region
          %s4734 = smul.u32 8, %s50
          %4736 = vsyncadd %s4727, 0
          %s4737 = smul.addr %s4734, 4
          %s4738 = scalar_lea.hbm %s26, %s4737
          %s4739 = sshll.u32 %s4730, 4
          %s4740 = int_to_ptr.vmem [resolvable:$true] %s4739
          %s4741 = sshll.u32 %s4738, 4
          %s4742 = int_to_ptr.hbm [resolvable:$true] %s4741
          %4747 = dma.vmem_to_hbm [thread:$0]  %s4740, 512, %s4742, %s4727, 64, 64, 4
        $region200: #{tpu_custom_call.1} parent=123 // pred_fallthru
          _
      $region124: #{tpu_custom_call.1} parent=5 // pred_fallthru
        _
      %p4748 = scmp.le.s32.totalorder 2, %s45
      // Predicated region
      $region201: #{tpu_custom_call.1} parent=5 // pred_check
        %p4749 = pneg %p4748
      $region202: #{tpu_custom_call.1} parent=5 // pred_check_branch
        %4751 = sbr.rel (%p4749) target = $region204
      $region203: #{tpu_custom_call.1} parent=5 // pred_region
        %s4752 = ssub.s32 %s45, 2
        // Predicated region
        $region205: #{tpu_custom_call.1} parent=203 // pred_check
          %p4753 = pneg %p625
        $region206: #{tpu_custom_call.1} parent=203 // pred_check_branch
          %4755 = sbr.rel (%p4753) target = $region208
        $region207: #{tpu_custom_call.1} parent=203 // pred_region
          %s4756 = sand.u32 %s610, 1
          %s4757 = scalar_lea.sflag [#allocation4], %s4756
          %s4758 = sand.u32 %s610, 1
          %s4759 = smul.addr %s4758, 32
          %s4760 = scalar_lea.vmem [#allocation31], %s4759
          %4762 = dma.done %s4757, 512
        $region208: #{tpu_custom_call.1} parent=203 // pred_fallthru
          _
      $region204: #{tpu_custom_call.1} parent=5 // pred_fallthru
        _
    $region6: #{tpu_custom_call.1} parent=1 // loop_footer
      %s49 = sadd.s32 1, %s45
    $region7: #{tpu_custom_call.1} parent=1 // loop_footer_branch
      %44 = sbr.rel target = $region3
    $region8: #{tpu_custom_call.1} parent=1 // loop_exit
      _
    %4763 = vsyncpa [#allocation3], 1
    %s4764 = scalar_lea.sflag [#allocation3], 1
    %4765 = vsyncpa %s4764, 1
    %4766 = vsyncpa [#allocation6], 1
    %4767 = vsyncpa [#allocation9], 1
    %4768 = vsyncpa [#allocation12], 1
    %4769 = vsyncpa [#allocation15], 1
    %4770 = vsyncpa [#allocation18], 1
    %4771 = vsyncpa [#allocation21], 1
    %4772 = vsyncpa [#allocation24], 1
    %4773 = vsyncpa [#allocation27], 1
    %4774 = vsyncpa [#allocation30], 1
    %4775 = vsyncpa [#allocation4], 1
    %s4776 = scalar_lea.sflag [#allocation4], 1
    %4777 = vsyncpa %s4776, 1

</llo_original>
